<compile_context>
chip_gen: v7x
topology: tpu7x:2x2x1
jax: 0.10.0
libtpu: 0.0.40
codegen_flags: <defaults>
</compile_context>

<pallas_src>
import functools

import jax
import jax.numpy as jnp
from jax import lax
from jax.experimental import pallas as pl
from jax.experimental.pallas import tpu as pltpu

PRIMITIVES = (
    "none", "max_pool_3x3", "avg_pool_3x3", "skip_connect",
    "sep_conv_3x3", "sep_conv_5x5", "dil_conv_3x3", "dil_conv_5x5",
)
NUM_OPS = len(PRIMITIVES)
BN_EPS = 1e-5
NEG_INF = float("-inf")

# Per-edge lane-mixing matrix slab layout (ky-major; must match pack_cell_params):
#   [ 0: 3) sep_conv_3x3 stage-1 (dw1 o pw1), row offsets (-1, 0, 1)
#   [ 3: 6) sep_conv_3x3 stage-2 (dw2 o pw2)
#   [ 6:11) sep_conv_5x5 stage-1, offsets (-2..2)
#   [11:16) sep_conv_5x5 stage-2
#   [16:19) dil_conv_3x3 (dilation 2), offsets (-2, 0, 2)
#   [19:24) dil_conv_5x5 (dilation 2), offsets (-4, -2, 0, 2, 4)
_SEP3_BASE, _SEP3_OFF = 0, (-1, 0, 1)
_SEP5_BASE, _SEP5_OFF = 6, (-2, -1, 0, 1, 2)
_DIL3_BASE, _DIL3_OFF = 16, (-2, 0, 2)
_DIL5_BASE, _DIL5_OFF = 19, (-4, -2, 0, 2, 4)
_NMAT = 24


# ----------------------------- in-kernel building blocks ------------------------------
# Lane layout: activation (H, L) with lane l = (n*C + c)*W + w ;  L = N*C*W.

def _edge_result(x, mats_ref, chan_avg_ref, inv_ref, w_ref, *, W):
    """One stride-1 MixedOp: sum_i w[i] * op_i(x); every BatchNorm uses training-mode
    batch statistics with affine=False.  x: (H, L) lane layout."""
    H, L = x.shape

    lane_w = lax.broadcasted_iota(jnp.int32, (1, L), 1) % W
    ok_m1 = lane_w >= 1           # reading w-1 stays inside the image
    ok_p1 = lane_w < (W - 1)      # reading w+1 stays inside the image

    def rowshift(v, oy, fill):
        if oy == 0:
            return v
        pad = jnp.full((abs(oy), L), fill, v.dtype)
        return (jnp.concatenate([v[oy:], pad], axis=0) if oy > 0
                else jnp.concatenate([pad, v[:oy]], axis=0))

    def colshift(v, ox, fill):    # pools only use ox in {-1, +1}
        s = pltpu.roll(v, (-ox) % L, axis=1)          # lane rotation (XLU slot)
        return jnp.where(ok_m1 if ox < 0 else ok_p1, s, fill)

    def bn(y, scale):
        """BatchNorm2d(affine=False), batch stats; the arch weight `scale` is folded in.
        chan_avg[l', l] = (c(l')==c(l)) / (N*H*W): one small MXU matmul reduces and
        broadcasts the per-channel moments."""
        s1 = jnp.sum(y, axis=0, keepdims=True)
        s2 = jnp.sum(y * y, axis=0, keepdims=True)
        mom = jnp.dot(jnp.concatenate([s1, s2], axis=0), chan_avg_ref[...],
                      preferred_element_type=jnp.float32)
        mean, ex2 = mom[0:1, :], mom[1:2, :]
        var = jnp.maximum(ex2 - mean * mean, 0.0)
        return (y - mean) * (lax.rsqrt(var + BN_EPS) * scale)

    def conv(v, base, offsets):
        """Depthwise KxK + 1x1 pointwise, pre-composed per row offset into (L, L)
        lane-mixing matrices -> len(offsets) MXU matmuls."""
        acc = None
        for k, oy in enumerate(offsets):
            t = jnp.dot(rowshift(v, oy, 0.0), mats_ref[base + k],
                        preferred_element_type=jnp.float32)
            acc = t if acc is None else acc + t
        return acc

    rx = jnp.maximum(x, 0.0)                          # shared ReLU for all conv branches

    def sep(base, offsets):
        h = bn(conv(rx, base, offsets), 1.0)          # inner BN has no arch weight
        return conv(jnp.maximum(h, 0.0), base + len(offsets), offsets)

    # 'none' (Zero) contributes exactly 0 and is dropped from the weighted sum.
    acc = w_ref[3:4, :] * x                           # skip_connect (Identity, stride 1)

    # 3x3 stride-1 pools, padding=1: row shifts hoisted out of the column loop,
    # lane-validity masks built once.  max uses -inf fill; avg counts valid taps only.
    mx, sm = None, None
    for oy in (-1, 0, 1):
        rmax = rowshift(x, oy, NEG_INF)
        ravg = rowshift(x, oy, 0.0)
        for ox in (-1, 0, 1):
            vmx = rmax if ox == 0 else colshift(rmax, ox, NEG_INF)
            vav = ravg if ox == 0 else colshift(ravg, ox, 0.0)
            mx = vmx if mx is None else jnp.maximum(mx, vmx)
            sm = vav if sm is None else sm + vav
    acc += bn(mx, w_ref[1:2, :])                                  # max_pool_3x3 + BN
    acc += bn(sm * inv_ref[...], w_ref[2:3, :])                   # avg_pool_3x3 + BN

    acc += bn(sep(_SEP3_BASE, _SEP3_OFF), w_ref[4:5, :])          # sep_conv_3x3
    acc += bn(sep(_SEP5_BASE, _SEP5_OFF), w_ref[5:6, :])          # sep_conv_5x5
    acc += bn(conv(rx, _DIL3_BASE, _DIL3_OFF), w_ref[6:7, :])     # dil_conv_3x3
    acc += bn(conv(rx, _DIL5_BASE, _DIL5_OFF), w_ref[7:8, :])     # dil_conv_5x5
    return acc


def _cell_kernel(w_ref, init_ref, chan_avg_ref, inv_ref, mats_ref,
                 out_ref, states_ref, *, W, steps, multiplier):
    """Walks every MixedOp edge of the cell (grid axis = edge index); all states stay
    resident in the VMEM scratch, only the last `multiplier` states are written out."""
    e = pl.program_id(0)
    H, L = init_ref.shape[1], init_ref.shape[2]

    @pl.when(e == 0)
    def _seed():
        states_ref[0] = init_ref[0]
        states_ref[1] = init_ref[1]
        z = jnp.zeros((H, L), jnp.float32)
        for t in range(steps):
            states_ref[2 + t] = z

    # Decode edge e -> (source state, destination step) of the static DARTS DAG with
    # scalar arithmetic (no SMEM tables).
    src = jnp.int32(0)
    in_step = []
    off = 0
    for i in range(steps):
        n_in = 2 + i
        flag = jnp.logical_and(e >= off, e < off + n_in)
        in_step.append(flag)
        src = jnp.where(flag, e - off, src)
        off += n_in

    # Gather the source state (select over the <= steps+1 possible sources).
    x = states_ref[0]
    for t in range(1, steps + 1):
        x = jnp.where(src == t, states_ref[t], x)

    res = _edge_result(x, mats_ref, chan_avg_ref, inv_ref, w_ref, W=W)

    # Accumulate into this step's state (sum over the step's incoming edges).
    for i in range(steps):
        @pl.when(in_step[i])
        def _acc(i=i):
            states_ref[2 + i] = states_ref[2 + i] + res

    # Last edge: emit the final `multiplier` states (torch.cat(states[-multiplier:], 1)).
    @pl.when(e == pl.num_programs(0) - 1)
    def _emit():
        for t in range(multiplier):
            out_ref[t] = states_ref[2 + steps - multiplier + t]


def _preprocess_kernel(x_ref, m_ref, chan_avg_ref, out_ref):
    """StdConv preprocess: ReLU -> 1x1 conv (bias=False) -> BN(affine=False, batch stats),
    done as one lane-mixing MXU matmul so the output is already lane-dense (H, N*C*W)."""
    xr = jnp.maximum(x_ref[...], 0.0)
    y = jnp.dot(xr, m_ref[...], preferred_element_type=jnp.float32)     # (H, Lout)
    s1 = jnp.sum(y, axis=0, keepdims=True)
    s2 = jnp.sum(y * y, axis=0, keepdims=True)
    mom = jnp.dot(jnp.concatenate([s1, s2], axis=0), chan_avg_ref[...],
                  preferred_element_type=jnp.float32)
    mean, ex2 = mom[0:1, :], mom[1:2, :]
    var = jnp.maximum(ex2 - mean * mean, 0.0)
    out_ref[...] = (y - mean) * lax.rsqrt(var + BN_EPS)


# --------------------------------- pallas_call wrappers --------------------------------

def _preprocess_call(xs, ms, chan_avg):
    G, H, Lin = xs.shape
    Lout = ms.shape[2]
    return pl.pallas_call(
        _preprocess_kernel,
        grid=(G,),
        out_shape=jax.ShapeDtypeStruct((G, H, Lout), jnp.float32),
        in_specs=[pl.BlockSpec((None, H, Lin), lambda g: (g, 0, 0)),
                  pl.BlockSpec((None, Lin, Lout), lambda g: (g, 0, 0)),
                  pl.BlockSpec((Lout, Lout), lambda g: (0, 0))],
        out_specs=pl.BlockSpec((None, H, Lout), lambda g: (g, 0, 0)),
        compiler_params=pltpu.CompilerParams(dimension_semantics=("parallel",)),
    )(xs, ms, chan_avg)


def _mixed_cell_call(init_states, w_bcast, packed, *, steps, multiplier, W):
    _, H, L = init_states.shape
    mats = packed["mats"]
    num_edges, nmat = mats.shape[0], mats.shape[1]
    kernel = functools.partial(_cell_kernel, W=W, steps=steps, multiplier=multiplier)
    return pl.pallas_call(
        kernel,
        grid=(num_edges,),
        out_shape=jax.ShapeDtypeStruct((multiplier, H, L), jnp.float32),
        in_specs=[
            pl.BlockSpec((None, NUM_OPS, L), lambda e: (e, 0, 0)),      # arch weights (lane-bcast)
            pl.BlockSpec((2, H, L), lambda e: (0, 0, 0)),               # preprocessed s0, s1
            pl.BlockSpec((L, L), lambda e: (0, 0)),                     # BN channel-average matrix
            pl.BlockSpec((H, L), lambda e: (0, 0)),                     # avg-pool 1/valid-count
            pl.BlockSpec((None, nmat, L, L), lambda e: (e, 0, 0, 0)),   # per-edge conv matrices
        ],
        out_specs=pl.BlockSpec((multiplier, H, L), lambda e: (0, 0, 0)),
        scratch_shapes=[pltpu.VMEM((2 + steps, H, L), jnp.float32)],
        compiler_params=pltpu.CompilerParams(dimension_semantics=("arbitrary",)),
    )(w_bcast, init_states, packed["chan_avg"], packed["inv_cnt"], mats)


# ----------------------- host-side packing (done once, not per forward) ----------------

def _lane_decode(N, Ck, W):
    ids = jnp.arange(N * Ck * W)
    return ids // (Ck * W), (ids // W) % Ck, ids % W


def _mix_matrix_1x1(w_conv, N, C_in, C_out, W):
    """(Lin, Lout) lane-mixing matrix for a 1x1 conv; lane = (n*C + c)*W + w."""
    n_i, c_i, w_i = _lane_decode(N, C_in, W)
    n_o, c_o, w_o = _lane_decode(N, C_out, W)
    same = (n_i[:, None] == n_o[None, :]) & (w_i[:, None] == w_o[None, :])
    wm = jnp.asarray(w_conv, jnp.float32).reshape(C_out, C_in)
    vals = wm[c_o[None, :], c_i[:, None]]            # [l_in, l_out] = W[c_out, c_in]
    return jnp.where(same, vals, 0.0)


def _dw_row_matrix(w_dw, ky, K, dil, pad, N, C, W):
    """(L, L) lane-mixing matrix applying the kx taps of depthwise row ky
    (image-boundary zero padding folded in)."""
    n_id, c_id, w_id = _lane_decode(N, C, W)
    same = (n_id[:, None] == n_id[None, :]) & (c_id[:, None] == c_id[None, :])
    delta = w_id[:, None] - w_id[None, :] + pad       # = kx * dil when this tap applies
    kx = delta // dil
    ok = same & (delta % dil == 0) & (kx >= 0) & (kx < K)
    taps = jnp.asarray(w_dw, jnp.float32).reshape(C, K, K)[:, ky, :]     # (C, K)
    vals = taps[c_id[None, :], jnp.clip(kx, 0, K - 1)]
    return jnp.where(ok, vals, 0.0)


def _dwpw_mats(dw, pw, K, dil, pad, N, C, W):
    """Compose depthwise-row and pointwise mixing: one (L, L) matrix per row offset."""
    pwm = _mix_matrix_1x1(pw, N, C, C, W)
    return [jnp.dot(_dw_row_matrix(dw, ky, K, dil, pad, N, C, W), pwm) for ky in range(K)]


def pack_cell_params(params, *, steps, N, C, H, W):
    """Pre-pack all cell weights into kernel-ready arrays (call once, outside the forward)."""
    L = N * C * W

    # BatchNorm channel-average matrix (reduce + broadcast per-channel moments).
    c_of = (jnp.arange(L) // W) % C
    chan_avg = (c_of[:, None] == c_of[None, :]).astype(jnp.float32) / float(N * H * W)

    # avg-pool 3x3 (pad=1, stride=1, count_include_pad=False) reciprocal valid counts.
    hh = jnp.arange(H)
    rcnt = (jnp.minimum(hh + 1, H - 1) - jnp.maximum(hh - 1, 0) + 1).astype(jnp.float32)
    ww = jnp.arange(L) % W
    ccnt = (jnp.minimum(ww + 1, W - 1) - jnp.maximum(ww - 1, 0) + 1).astype(jnp.float32)
    inv_cnt = 1.0 / (rcnt[:, None] * ccnt[None, :])

    def edge_slab(p):
        mats = []
        mats += _dwpw_mats(p["sep3"]["dw1"], p["sep3"]["pw1"], 3, 1, 1, N, C, W)
        mats += _dwpw_mats(p["sep3"]["dw2"], p["sep3"]["pw2"], 3, 1, 1, N, C, W)
        mats += _dwpw_mats(p["sep5"]["dw1"], p["sep5"]["pw1"], 5, 1, 2, N, C, W)
        mats += _dwpw_mats(p["sep5"]["dw2"], p["sep5"]["pw2"], 5, 1, 2, N, C, W)
        mats += _dwpw_mats(p["dil3"]["dw"], p["dil3"]["pw"], 3, 2, 2, N, C, W)
        mats += _dwpw_mats(p["dil5"]["dw"], p["dil5"]["pw"], 5, 2, 4, N, C, W)
        return jnp.stack(mats, axis=0)                         # (_NMAT, L, L)

    mats = jnp.stack([edge_slab(p) for p in params["edges"]], axis=0)

    out = {"mats": mats, "chan_avg": chan_avg, "inv_cnt": inv_cnt}

    cin0 = params["pre0"].shape[1]
    cin1 = params["pre1"].shape[1]
    pre0 = _mix_matrix_1x1(params["pre0"], N, cin0, C, W)      # (N*cin0*W, L)
    pre1 = _mix_matrix_1x1(params["pre1"], N, cin1, C, W)
    if pre0.shape == pre1.shape:
        out["pre"] = jnp.stack([pre0, pre1], axis=0)
    else:
        out["pre0"], out["pre1"] = pre0, pre1
    return out


# ------------------------------------ forward ------------------------------------------

def _to_lane_layout(x_nchw):
    N, Ck, H, W = x_nchw.shape
    return jnp.transpose(x_nchw, (2, 0, 1, 3)).reshape(H, N * Ck * W)


def cell_forward(s0, s1, weights, packed, *, steps, multiplier):
    """Cell.forward(s0, s1, weights) with reduction=False, reduction_prev=False."""
    N, _, H, W = s1.shape
    L = packed["chan_avg"].shape[0]
    C = L // (N * W)
    num_edges = packed["mats"].shape[0]

    x0 = _to_lane_layout(s0.astype(jnp.float32))
    x1 = _to_lane_layout(s1.astype(jnp.float32))
    if "pre" in packed:
        init = _preprocess_call(jnp.stack([x0, x1], axis=0), packed["pre"],
                                packed["chan_avg"])
    else:
        i0 = _preprocess_call(x0[None], packed["pre0"][None], packed["chan_avg"])
        i1 = _preprocess_call(x1[None], packed["pre1"][None], packed["chan_avg"])
        init = jnp.concatenate([i0, i1], axis=0)

    w_bcast = jnp.broadcast_to(weights.astype(jnp.float32)[:, :, None],
                               (num_edges, NUM_OPS, L))
    out_lane = _mixed_cell_call(init, w_bcast, packed,
                                steps=steps, multiplier=multiplier, W=W)

    o = out_lane.reshape(multiplier, H, N, C, W)
    return jnp.transpose(o, (2, 0, 3, 1, 4)).reshape(N, multiplier * C, H, W)


# --------------------------------- parameter init --------------------------------------

def init_cell_params(key, *, steps, C, C_prev_prev, C_prev):
    """Deterministic synthetic weights in PyTorch layouts:
    depthwise conv (C,1,K,K); 1x1 conv (C_out,C_in,1,1)."""
    num_edges = sum(2 + i for i in range(steps))
    keys = jax.random.split(key, 2 + num_edges)

    def conv_w(k, shape):
        return 0.1 * jax.random.normal(k, shape, jnp.float32)

    def edge(k):
        ks = jax.random.split(k, 12)
        return {
            "sep3": {"dw1": conv_w(ks[0], (C, 1, 3, 3)), "pw1": conv_w(ks[1], (C, C, 1, 1)),
                     "dw2": conv_w(ks[2], (C, 1, 3, 3)), "pw2": conv_w(ks[3], (C, C, 1, 1))},
            "sep5": {"dw1": conv_w(ks[4], (C, 1, 5, 5)), "pw1": conv_w(ks[5], (C, C, 1, 1)),
                     "dw2": conv_w(ks[6], (C, 1, 5, 5)), "pw2": conv_w(ks[7], (C, C, 1, 1))},
            "dil3": {"dw": conv_w(ks[8], (C, 1, 3, 3)), "pw": conv_w(ks[9], (C, C, 1, 1))},
            "dil5": {"dw": conv_w(ks[10], (C, 1, 5, 5)), "pw": conv_w(ks[11], (C, C, 1, 1))},
        }

    return {
        "pre0": conv_w(keys[0], (C, C_prev_prev, 1, 1)),
        "pre1": conv_w(keys[1], (C, C_prev, 1, 1)),
        "edges": [edge(keys[2 + e]) for e in range(num_edges)],
    }


# ------------------------------------- demo --------------------------------------------

if __name__ == "__main__":
    key = jax.random.PRNGKey(0)
    k0, k1, ka, kp = jax.random.split(key, 4)

    steps, multiplier = 2, 2
    N, C, H, W = 2, 4, 16, 16            # N*C*W = 128 -> exactly one lane-dense slab
    C_prev_prev = C_prev = 8
    num_edges = sum(2 + i for i in range(steps))     # 5 MixedOp edges

    s0 = jax.random.normal(k0, (N, C_prev_prev, H, W), jnp.float32)
    s1 = jax.random.normal(k1, (N, C_prev, H, W), jnp.float32)
    alphas = jax.random.normal(ka, (num_edges, NUM_OPS), jnp.float32)
    weights = jax.nn.softmax(alphas, axis=-1)        # architecture weights per edge
    params = init_cell_params(kp, steps=steps, C=C,
                              C_prev_prev=C_prev_prev, C_prev=C_prev)

    # Pack once (outside the forward): composes every dw+pw pair into per-row-offset
    # (128,128) lane-mixing matrices and builds the BN / pool constants.
    packed = pack_cell_params(params, steps=steps, N=N, C=C, H=H, W=W)

    fwd = jax.jit(functools.partial(cell_forward, steps=steps, multiplier=multiplier))
    out = jax.block_until_ready(fwd(s0, s1, weights, packed))

    assert out.shape == (N, multiplier * C, H, W) and out.dtype == jnp.float32
    assert bool(jnp.all(jnp.isfinite(out)))
    print("KERNEL_OK")
</pallas_src>

<mosaic_0001>
module attributes {stable_mosaic.version = 11 : i64} {
  func.func @_preprocess_kernel(%arg0: i32, %arg1: memref<1x16x256xf32, #tpu.memory_space<vmem>>, %arg2: memref<1x256x128xf32, #tpu.memory_space<vmem>>, %arg3: memref<128x128xf32, #tpu.memory_space<vmem>>, %arg4: memref<1x16x128xf32, #tpu.memory_space<vmem>>) attributes {dimension_semantics = [#tpu.dimension_semantics<parallel>], iteration_bounds = array<i64: 2>, scalar_prefetch = 0 : i64, scratch_operands = 0 : i64, tpu.core_type = #tpu.core_type<tc>, window_params = [{transform_indices = @transform_0, window_bounds = array<i64: 1, 16, 256>}, {transform_indices = @transform_1, window_bounds = array<i64: 1, 256, 128>}, {pipeline_mode = #tpu.pipeline_mode<synchronous>, transform_indices = @transform_2, window_bounds = array<i64: 128, 128>}, {transform_indices = @transform_3, window_bounds = array<i64: 1, 16, 128>}]} {
    %c0 = arith.constant 0 : index
    %c0_0 = arith.constant 0 : index
    %c0_1 = arith.constant 0 : index
    %0 = vector.load %arg1[%c0, %c0_0, %c0_1] : memref<1x16x256xf32, #tpu.memory_space<vmem>>, vector<1x16x256xf32>
    %1 = vector.shape_cast %0 : vector<1x16x256xf32> to vector<16x256xf32>
    %cst = arith.constant 0.000000e+00 : f32
    %2 = vector.broadcast %cst : f32 to vector<16x256xf32>
    %3 = arith.maximumf %1, %2 : vector<16x256xf32>
    %c0_2 = arith.constant 0 : index
    %c0_3 = arith.constant 0 : index
    %c0_4 = arith.constant 0 : index
    %4 = vector.load %arg2[%c0_2, %c0_3, %c0_4] : memref<1x256x128xf32, #tpu.memory_space<vmem>>, vector<1x256x128xf32>
    %5 = vector.shape_cast %4 : vector<1x256x128xf32> to vector<256x128xf32>
    %cst_5 = arith.constant dense<0.000000e+00> : vector<16x128xf32>
    %6 = tpu.matmul %3, %5, %cst_5 {dimension_numbers = #tpu.dot_dimension_numbers<[1], [0], [0], [1], [0, 0, 1, 1], [], []>} : vector<16x256xf32>, vector<256x128xf32>, vector<16x128xf32> -> vector<16x128xf32>
    %cst_6 = arith.constant dense<0.000000e+00> : vector<128xf32>
    %7 = vector.multi_reduction <add>, %6, %cst_6 [0] : vector<16x128xf32> to vector<128xf32>
    %8 = vector.shape_cast %7 : vector<128xf32> to vector<1x128xf32>
    %9 = arith.mulf %6, %6 : vector<16x128xf32>
    %cst_7 = arith.constant dense<0.000000e+00> : vector<128xf32>
    %10 = vector.multi_reduction <add>, %9, %cst_7 [0] : vector<16x128xf32> to vector<128xf32>
    %11 = vector.shape_cast %10 : vector<128xf32> to vector<1x128xf32>
    %12 = tpu.concatenate %8, %11 in 0 : vector<1x128xf32>, vector<1x128xf32> -> vector<2x128xf32>
    %c0_8 = arith.constant 0 : index
    %c0_9 = arith.constant 0 : index
    %13 = vector.load %arg3[%c0_8, %c0_9] : memref<128x128xf32, #tpu.memory_space<vmem>>, vector<128x128xf32>
    %cst_10 = arith.constant dense<0.000000e+00> : vector<2x128xf32>
    %14 = tpu.matmul %12, %13, %cst_10 {dimension_numbers = #tpu.dot_dimension_numbers<[1], [0], [0], [1], [0, 0, 1, 1], [], []>} : vector<2x128xf32>, vector<128x128xf32>, vector<2x128xf32> -> vector<2x128xf32>
    %15 = vector.extract_strided_slice %14 {offsets = [0, 0], sizes = [1, 128], strides = [1, 1]} : vector<2x128xf32> to vector<1x128xf32>
    %16 = vector.extract_strided_slice %14 {offsets = [1, 0], sizes = [1, 128], strides = [1, 1]} : vector<2x128xf32> to vector<1x128xf32>
    %17 = arith.mulf %15, %15 : vector<1x128xf32>
    %18 = arith.subf %16, %17 : vector<1x128xf32>
    %cst_11 = arith.constant 0.000000e+00 : f32
    %19 = vector.broadcast %cst_11 : f32 to vector<1x128xf32>
    %20 = arith.maximumf %18, %19 : vector<1x128xf32>
    %21 = vector.broadcast %15 : vector<1x128xf32> to vector<16x128xf32>
    %22 = arith.subf %6, %21 : vector<16x128xf32>
    %cst_12 = arith.constant 9.99999974E-6 : f32
    %23 = vector.broadcast %cst_12 : f32 to vector<1x128xf32>
    %24 = arith.addf %20, %23 : vector<1x128xf32>
    %25 = math.rsqrt %24 : vector<1x128xf32>
    %26 = vector.broadcast %25 : vector<1x128xf32> to vector<16x128xf32>
    %27 = arith.mulf %22, %26 : vector<16x128xf32>
    %c0_13 = arith.constant 0 : index
    %c0_14 = arith.constant 0 : index
    %c0_15 = arith.constant 0 : index
    %28 = vector.load %arg4[%c0_13, %c0_14, %c0_15] : memref<1x16x128xf32, #tpu.memory_space<vmem>>, vector<1x16x128xf32>
    %29 = vector.shape_cast %28 : vector<1x16x128xf32> to vector<16x128xf32>
    %30 = vector.shape_cast %27 : vector<16x128xf32> to vector<1x16x128xf32>
    tpu.vector_store %arg4[%c0_13, %c0_14, %c0_15], %30 {strides = array<i32>} : memref<1x16x128xf32, #tpu.memory_space<vmem>>, vector<1x16x128xf32>,
    return
  }
  func.func @transform_0(%arg0: i32) -> (i32, i32, i32) {
    %c0_i32 = arith.constant 0 : i32
    %c0_i32_0 = arith.constant 0 : i32
    %c0_i32_1 = arith.constant 0 : i32
    return %arg0, %c0_i32, %c0_i32_0 : i32, i32, i32
  }
  func.func @transform_1(%arg0: i32) -> (i32, i32, i32) {
    %c0_i32 = arith.constant 0 : i32
    %c0_i32_0 = arith.constant 0 : i32
    %c0_i32_1 = arith.constant 0 : i32
    return %arg0, %c0_i32, %c0_i32_0 : i32, i32, i32
  }
  func.func @transform_2(%arg0: i32) -> (i32, i32) {
    %c0_i32 = arith.constant 0 : i32
    %c0_i32_0 = arith.constant 0 : i32
    %c0_i32_1 = arith.constant 0 : i32
    return %c0_i32, %c0_i32_0 : i32, i32
  }
  func.func @transform_3(%arg0: i32) -> (i32, i32, i32) {
    %c0_i32 = arith.constant 0 : i32
    %c0_i32_0 = arith.constant 0 : i32
    %c0_i32_1 = arith.constant 0 : i32
    return %arg0, %c0_i32, %c0_i32_0 : i32, i32, i32
  }
}

module attributes {stable_mosaic.version = 11 : i64} {
  func.func @_cell_kernel(%arg0: i32, %arg1: memref<1x8x128xf32, #tpu.memory_space<vmem>>, %arg2: memref<2x16x128xf32, #tpu.memory_space<vmem>>, %arg3: memref<128x128xf32, #tpu.memory_space<vmem>>, %arg4: memref<16x128xf32, #tpu.memory_space<vmem>>, %arg5: memref<1x24x128x128xf32, #tpu.memory_space<vmem>>, %arg6: memref<2x16x128xf32, #tpu.memory_space<vmem>>, %arg7: memref<4x16x128xf32, #tpu.memory_space<vmem>>) attributes {dimension_semantics = [#tpu.dimension_semantics<arbitrary>], iteration_bounds = array<i64: 5>, scalar_prefetch = 0 : i64, scratch_operands = 1 : i64, tpu.core_type = #tpu.core_type<tc>, window_params = [{transform_indices = @transform_0, window_bounds = array<i64: 1, 8, 128>}, {pipeline_mode = #tpu.pipeline_mode<synchronous>, transform_indices = @transform_1, window_bounds = array<i64: 2, 16, 128>}, {pipeline_mode = #tpu.pipeline_mode<synchronous>, transform_indices = @transform_2, window_bounds = array<i64: 128, 128>}, {pipeline_mode = #tpu.pipeline_mode<synchronous>, transform_indices = @transform_3, window_bounds = array<i64: 16, 128>}, {transform_indices = @transform_4, window_bounds = array<i64: 1, 24, 128, 128>}, {pipeline_mode = #tpu.pipeline_mode<synchronous>, transform_indices = @transform_5, window_bounds = array<i64: 2, 16, 128>}]} {
    %c0_i32 = arith.constant 0 : i32
    %0 = arith.cmpi eq, %arg0, %c0_i32 : i32
    %1 = arith.extui %0 : i1 to i32
    %c0_i32_0 = arith.constant 0 : i32
    %2 = arith.cmpi ne, %1, %c0_i32_0 : i32
    scf.if %2 {
      %c0_249 = arith.constant 0 : index
      %c0_250 = arith.constant 0 : index
      %c0_251 = arith.constant 0 : index
      %491 = vector.load %arg2[%c0_249, %c0_250, %c0_251] : memref<2x16x128xf32, #tpu.memory_space<vmem>>, vector<1x16x128xf32>
      %492 = vector.shape_cast %491 : vector<1x16x128xf32> to vector<16x128xf32>
      %c0_252 = arith.constant 0 : index
      %c0_253 = arith.constant 0 : index
      %c0_254 = arith.constant 0 : index
      %493 = vector.load %arg7[%c0_252, %c0_253, %c0_254] : memref<4x16x128xf32, #tpu.memory_space<vmem>>, vector<1x16x128xf32>
      %494 = vector.shape_cast %493 : vector<1x16x128xf32> to vector<16x128xf32>
      %495 = vector.shape_cast %492 : vector<16x128xf32> to vector<1x16x128xf32>
      tpu.vector_store %arg7[%c0_252, %c0_253, %c0_254], %495 {strides = array<i32>} : memref<4x16x128xf32, #tpu.memory_space<vmem>>, vector<1x16x128xf32>,
      %c1_255 = arith.constant 1 : index
      %c0_256 = arith.constant 0 : index
      %c0_257 = arith.constant 0 : index
      %496 = vector.load %arg2[%c1_255, %c0_256, %c0_257] : memref<2x16x128xf32, #tpu.memory_space<vmem>>, vector<1x16x128xf32>
      %497 = vector.shape_cast %496 : vector<1x16x128xf32> to vector<16x128xf32>
      %c1_258 = arith.constant 1 : index
      %c0_259 = arith.constant 0 : index
      %c0_260 = arith.constant 0 : index
      %498 = vector.load %arg7[%c1_258, %c0_259, %c0_260] : memref<4x16x128xf32, #tpu.memory_space<vmem>>, vector<1x16x128xf32>
      %499 = vector.shape_cast %498 : vector<1x16x128xf32> to vector<16x128xf32>
      %500 = vector.shape_cast %497 : vector<16x128xf32> to vector<1x16x128xf32>
      tpu.vector_store %arg7[%c1_258, %c0_259, %c0_260], %500 {strides = array<i32>} : memref<4x16x128xf32, #tpu.memory_space<vmem>>, vector<1x16x128xf32>,
      %cst_261 = arith.constant 0.000000e+00 : f32
      %501 = vector.broadcast %cst_261 : f32 to vector<16x128xf32>
      %c2_262 = arith.constant 2 : index
      %c0_263 = arith.constant 0 : index
      %c0_264 = arith.constant 0 : index
      %502 = vector.load %arg7[%c2_262, %c0_263, %c0_264] : memref<4x16x128xf32, #tpu.memory_space<vmem>>, vector<1x16x128xf32>
      %503 = vector.shape_cast %502 : vector<1x16x128xf32> to vector<16x128xf32>
      %504 = vector.shape_cast %501 : vector<16x128xf32> to vector<1x16x128xf32>
      tpu.vector_store %arg7[%c2_262, %c0_263, %c0_264], %504 {strides = array<i32>} : memref<4x16x128xf32, #tpu.memory_space<vmem>>, vector<1x16x128xf32>,
      %c3_265 = arith.constant 3 : index
      %c0_266 = arith.constant 0 : index
      %c0_267 = arith.constant 0 : index
      %505 = vector.load %arg7[%c3_265, %c0_266, %c0_267] : memref<4x16x128xf32, #tpu.memory_space<vmem>>, vector<1x16x128xf32>
      %506 = vector.shape_cast %505 : vector<1x16x128xf32> to vector<16x128xf32>
      %507 = vector.shape_cast %501 : vector<16x128xf32> to vector<1x16x128xf32>
      tpu.vector_store %arg7[%c3_265, %c0_266, %c0_267], %507 {strides = array<i32>} : memref<4x16x128xf32, #tpu.memory_space<vmem>>, vector<1x16x128xf32>,
    } else {
    }
    %c0_i32_1 = arith.constant 0 : i32
    %3 = arith.cmpi sge, %arg0, %c0_i32_1 : i32
    %c2_i32 = arith.constant 2 : i32
    %4 = arith.cmpi slt, %arg0, %c2_i32 : i32
    %5 = arith.andi %3, %4 : i1
    %c0_i32_2 = arith.constant 0 : i32
    %6 = arith.subi %arg0, %c0_i32_2 : i32
    %c0_i32_3 = arith.constant 0 : i32
    %7 = arith.select %5, %6, %c0_i32_3 : i32
    %c2_i32_4 = arith.constant 2 : i32
    %8 = arith.cmpi sge, %arg0, %c2_i32_4 : i32
    %c5_i32 = arith.constant 5 : i32
    %9 = arith.cmpi slt, %arg0, %c5_i32 : i32
    %10 = arith.andi %8, %9 : i1
    %c2_i32_5 = arith.constant 2 : i32
    %11 = arith.subi %arg0, %c2_i32_5 : i32
    %12 = arith.select %10, %11, %7 : i32
    %c0 = arith.constant 0 : index
    %c0_6 = arith.constant 0 : index
    %c0_7 = arith.constant 0 : index
    %13 = vector.load %arg7[%c0, %c0_6, %c0_7] : memref<4x16x128xf32, #tpu.memory_space<vmem>>, vector<1x16x128xf32>
    %14 = vector.shape_cast %13 : vector<1x16x128xf32> to vector<16x128xf32>
    %c1_i32 = arith.constant 1 : i32
    %15 = arith.cmpi eq, %12, %c1_i32 : i32
    %c1 = arith.constant 1 : index
    %c0_8 = arith.constant 0 : index
    %c0_9 = arith.constant 0 : index
    %16 = vector.load %arg7[%c1, %c0_8, %c0_9] : memref<4x16x128xf32, #tpu.memory_space<vmem>>, vector<1x16x128xf32>
    %17 = vector.shape_cast %16 : vector<1x16x128xf32> to vector<16x128xf32>
    %18 = arith.select %15, %17, %14 : vector<16x128xf32>
    %c2_i32_10 = arith.constant 2 : i32
    %19 = arith.cmpi eq, %12, %c2_i32_10 : i32
    %c2 = arith.constant 2 : index
    %c0_11 = arith.constant 0 : index
    %c0_12 = arith.constant 0 : index
    %20 = vector.load %arg7[%c2, %c0_11, %c0_12] : memref<4x16x128xf32, #tpu.memory_space<vmem>>, vector<1x16x128xf32>
    %21 = vector.shape_cast %20 : vector<1x16x128xf32> to vector<16x128xf32>
    %22 = arith.select %19, %21, %18 : vector<16x128xf32>
    %23 = tpu.iota {dimensions = array<i32: 1>} : vector<1x128xi32>
    %c16_i32 = arith.constant 16 : i32
    %c0_i32_13 = arith.constant 0 : i32
    %24 = arith.cmpi eq, %c16_i32, %c0_i32_13 : i32
    %c1_i32_14 = arith.constant 1 : i32
    %25 = arith.select %24, %c1_i32_14, %c16_i32 : i32
    %26 = vector.broadcast %25 : i32 to vector<1x128xi32>
    %27 = arith.remsi %23, %26 : vector<1x128xi32>
    %c0_i32_15 = arith.constant 0 : i32
    %28 = vector.broadcast %c0_i32_15 : i32 to vector<1x128xi32>
    %29 = arith.cmpi ne, %27, %28 : vector<1x128xi32>
    %c0_i32_16 = arith.constant 0 : i32
    %30 = vector.broadcast %c0_i32_16 : i32 to vector<1x128xi32>
    %31 = arith.cmpi slt, %27, %30 : vector<1x128xi32>
    %c0_i32_17 = arith.constant 0 : i32
    %32 = arith.cmpi slt, %25, %c0_i32_17 : i32
    %33 = vector.broadcast %32 : i1 to vector<1x128xi1>
    %34 = vector.broadcast %33 : vector<1x128xi1> to vector<1x128xi1>
    %35 = arith.xori %31, %34 : vector<1x128xi1>
    %36 = arith.andi %35, %29 : vector<1x128xi1>
    %37 = vector.broadcast %25 : i32 to vector<1x128xi32>
    %38 = arith.addi %27, %37 : vector<1x128xi32>
    %39 = arith.select %36, %38, %27 : vector<1x128xi1>, vector<1x128xi32>
    %c1_i32_18 = arith.constant 1 : i32
    %40 = vector.broadcast %c1_i32_18 : i32 to vector<1x128xi32>
    %41 = arith.cmpi sge, %39, %40 : vector<1x128xi32>
    %c15_i32 = arith.constant 15 : i32
    %42 = vector.broadcast %c15_i32 : i32 to vector<1x128xi32>
    %43 = arith.cmpi slt, %39, %42 : vector<1x128xi32>
    %cst = arith.constant 0.000000e+00 : f32
    %44 = vector.broadcast %cst : f32 to vector<16x128xf32>
    %45 = arith.maximumf %22, %44 : vector<16x128xf32>
    %c0_19 = arith.constant 0 : index
    %c3 = arith.constant 3 : index
    %c0_20 = arith.constant 0 : index
    %46 = vector.load %arg1[%c0_19, %c3, %c0_20] : memref<1x8x128xf32, #tpu.memory_space<vmem>>, vector<1x1x128xf32>
    %47 = vector.shape_cast %46 : vector<1x1x128xf32> to vector<1x128xf32>
    %48 = vector.broadcast %47 : vector<1x128xf32> to vector<16x128xf32>
    %49 = arith.mulf %48, %22 : vector<16x128xf32>
    %cst_21 = arith.constant 0xFF800000 : f32
    %50 = vector.broadcast %cst_21 : f32 to vector<1x128xf32>
    %51 = vector.extract_strided_slice %22 {offsets = [0, 0], sizes = [15, 128], strides = [1, 1]} : vector<16x128xf32> to vector<15x128xf32>
    %52 = tpu.concatenate %50, %51 in 0 : vector<1x128xf32>, vector<15x128xf32> -> vector<16x128xf32>
    %cst_22 = arith.constant 0.000000e+00 : f32
    %53 = vector.broadcast %cst_22 : f32 to vector<1x128xf32>
    %54 = vector.extract_strided_slice %22 {offsets = [0, 0], sizes = [15, 128], strides = [1, 1]} : vector<16x128xf32> to vector<15x128xf32>
    %55 = tpu.concatenate %53, %54 in 0 : vector<1x128xf32>, vector<15x128xf32> -> vector<16x128xf32>
    %c1_i32_23 = arith.constant 1 : i32
    %56 = tpu.dynamic_rotate %52 by %c1_i32_23 dim 1 : vector<16x128xf32>, i32 -> vector<16x128xf32>
    %cst_24 = arith.constant 0xFF800000 : f32
    %57 = vector.shape_cast %41 : vector<1x128xi1> to vector<1x128xi1>
    %58 = vector.broadcast %57 : vector<1x128xi1> to vector<16x128xi1>
    %59 = vector.broadcast %cst_24 : f32 to vector<16x128xf32>
    %60 = arith.select %58, %56, %59 : vector<16x128xi1>, vector<16x128xf32>
    %c1_i32_25 = arith.constant 1 : i32
    %61 = tpu.dynamic_rotate %55 by %c1_i32_25 dim 1 : vector<16x128xf32>, i32 -> vector<16x128xf32>
    %cst_26 = arith.constant 0.000000e+00 : f32
    %62 = vector.shape_cast %41 : vector<1x128xi1> to vector<1x128xi1>
    %63 = vector.broadcast %62 : vector<1x128xi1> to vector<16x128xi1>
    %64 = vector.broadcast %cst_26 : f32 to vector<16x128xf32>
    %65 = arith.select %63, %61, %64 : vector<16x128xi1>, vector<16x128xf32>
    %66 = arith.maximumf %60, %52 : vector<16x128xf32>
    %67 = arith.addf %65, %55 : vector<16x128xf32>
    %c127_i32 = arith.constant 127 : i32
    %68 = tpu.dynamic_rotate %52 by %c127_i32 dim 1 : vector<16x128xf32>, i32 -> vector<16x128xf32>
    %cst_27 = arith.constant 0xFF800000 : f32
    %69 = vector.shape_cast %43 : vector<1x128xi1> to vector<1x128xi1>
    %70 = vector.broadcast %69 : vector<1x128xi1> to vector<16x128xi1>
    %71 = vector.broadcast %cst_27 : f32 to vector<16x128xf32>
    %72 = arith.select %70, %68, %71 : vector<16x128xi1>, vector<16x128xf32>
    %c127_i32_28 = arith.constant 127 : i32
    %73 = tpu.dynamic_rotate %55 by %c127_i32_28 dim 1 : vector<16x128xf32>, i32 -> vector<16x128xf32>
    %cst_29 = arith.constant 0.000000e+00 : f32
    %74 = vector.shape_cast %43 : vector<1x128xi1> to vector<1x128xi1>
    %75 = vector.broadcast %74 : vector<1x128xi1> to vector<16x128xi1>
    %76 = vector.broadcast %cst_29 : f32 to vector<16x128xf32>
    %77 = arith.select %75, %73, %76 : vector<16x128xi1>, vector<16x128xf32>
    %78 = arith.maximumf %66, %72 : vector<16x128xf32>
    %79 = arith.addf %67, %77 : vector<16x128xf32>
    %c1_i32_30 = arith.constant 1 : i32
    %80 = tpu.dynamic_rotate %22 by %c1_i32_30 dim 1 : vector<16x128xf32>, i32 -> vector<16x128xf32>
    %cst_31 = arith.constant 0xFF800000 : f32
    %81 = vector.shape_cast %41 : vector<1x128xi1> to vector<1x128xi1>
    %82 = vector.broadcast %81 : vector<1x128xi1> to vector<16x128xi1>
    %83 = vector.broadcast %cst_31 : f32 to vector<16x128xf32>
    %84 = arith.select %82, %80, %83 : vector<16x128xi1>, vector<16x128xf32>
    %c1_i32_32 = arith.constant 1 : i32
    %85 = tpu.dynamic_rotate %22 by %c1_i32_32 dim 1 : vector<16x128xf32>, i32 -> vector<16x128xf32>
    %cst_33 = arith.constant 0.000000e+00 : f32
    %86 = vector.shape_cast %41 : vector<1x128xi1> to vector<1x128xi1>
    %87 = vector.broadcast %86 : vector<1x128xi1> to vector<16x128xi1>
    %88 = vector.broadcast %cst_33 : f32 to vector<16x128xf32>
    %89 = arith.select %87, %85, %88 : vector<16x128xi1>, vector<16x128xf32>
    %90 = arith.maximumf %78, %84 : vector<16x128xf32>
    %91 = arith.addf %79, %89 : vector<16x128xf32>
    %92 = arith.maximumf %90, %22 : vector<16x128xf32>
    %93 = arith.addf %91, %22 : vector<16x128xf32>
    %c127_i32_34 = arith.constant 127 : i32
    %94 = tpu.dynamic_rotate %22 by %c127_i32_34 dim 1 : vector<16x128xf32>, i32 -> vector<16x128xf32>
    %cst_35 = arith.constant 0xFF800000 : f32
    %95 = vector.shape_cast %43 : vector<1x128xi1> to vector<1x128xi1>
    %96 = vector.broadcast %95 : vector<1x128xi1> to vector<16x128xi1>
    %97 = vector.broadcast %cst_35 : f32 to vector<16x128xf32>
    %98 = arith.select %96, %94, %97 : vector<16x128xi1>, vector<16x128xf32>
    %c127_i32_36 = arith.constant 127 : i32
    %99 = tpu.dynamic_rotate %22 by %c127_i32_36 dim 1 : vector<16x128xf32>, i32 -> vector<16x128xf32>
    %cst_37 = arith.constant 0.000000e+00 : f32
    %100 = vector.shape_cast %43 : vector<1x128xi1> to vector<1x128xi1>
    %101 = vector.broadcast %100 : vector<1x128xi1> to vector<16x128xi1>
    %102 = vector.broadcast %cst_37 : f32 to vector<16x128xf32>
    %103 = arith.select %101, %99, %102 : vector<16x128xi1>, vector<16x128xf32>
    %104 = arith.maximumf %92, %98 : vector<16x128xf32>
    %105 = arith.addf %93, %103 : vector<16x128xf32>
    %cst_38 = arith.constant 0xFF800000 : f32
    %106 = vector.broadcast %cst_38 : f32 to vector<1x128xf32>
    %107 = vector.extract_strided_slice %22 {offsets = [1, 0], sizes = [15, 128], strides = [1, 1]} : vector<16x128xf32> to vector<15x128xf32>
    %108 = tpu.concatenate %107, %106 in 0 : vector<15x128xf32>, vector<1x128xf32> -> vector<16x128xf32>
    %cst_39 = arith.constant 0.000000e+00 : f32
    %109 = vector.broadcast %cst_39 : f32 to vector<1x128xf32>
    %110 = vector.extract_strided_slice %22 {offsets = [1, 0], sizes = [15, 128], strides = [1, 1]} : vector<16x128xf32> to vector<15x128xf32>
    %111 = tpu.concatenate %110, %109 in 0 : vector<15x128xf32>, vector<1x128xf32> -> vector<16x128xf32>
    %c1_i32_40 = arith.constant 1 : i32
    %112 = tpu.dynamic_rotate %108 by %c1_i32_40 dim 1 : vector<16x128xf32>, i32 -> vector<16x128xf32>
    %cst_41 = arith.constant 0xFF800000 : f32
    %113 = vector.shape_cast %41 : vector<1x128xi1> to vector<1x128xi1>
    %114 = vector.broadcast %113 : vector<1x128xi1> to vector<16x128xi1>
    %115 = vector.broadcast %cst_41 : f32 to vector<16x128xf32>
    %116 = arith.select %114, %112, %115 : vector<16x128xi1>, vector<16x128xf32>
    %c1_i32_42 = arith.constant 1 : i32
    %117 = tpu.dynamic_rotate %111 by %c1_i32_42 dim 1 : vector<16x128xf32>, i32 -> vector<16x128xf32>
    %cst_43 = arith.constant 0.000000e+00 : f32
    %118 = vector.shape_cast %41 : vector<1x128xi1> to vector<1x128xi1>
    %119 = vector.broadcast %118 : vector<1x128xi1> to vector<16x128xi1>
    %120 = vector.broadcast %cst_43 : f32 to vector<16x128xf32>
    %121 = arith.select %119, %117, %120 : vector<16x128xi1>, vector<16x128xf32>
    %122 = arith.maximumf %104, %116 : vector<16x128xf32>
    %123 = arith.addf %105, %121 : vector<16x128xf32>
    %124 = arith.maximumf %122, %108 : vector<16x128xf32>
    %125 = arith.addf %123, %111 : vector<16x128xf32>
    %c127_i32_44 = arith.constant 127 : i32
    %126 = tpu.dynamic_rotate %108 by %c127_i32_44 dim 1 : vector<16x128xf32>, i32 -> vector<16x128xf32>
    %cst_45 = arith.constant 0xFF800000 : f32
    %127 = vector.shape_cast %43 : vector<1x128xi1> to vector<1x128xi1>
    %128 = vector.broadcast %127 : vector<1x128xi1> to vector<16x128xi1>
    %129 = vector.broadcast %cst_45 : f32 to vector<16x128xf32>
    %130 = arith.select %128, %126, %129 : vector<16x128xi1>, vector<16x128xf32>
    %c127_i32_46 = arith.constant 127 : i32
    %131 = tpu.dynamic_rotate %111 by %c127_i32_46 dim 1 : vector<16x128xf32>, i32 -> vector<16x128xf32>
    %cst_47 = arith.constant 0.000000e+00 : f32
    %132 = vector.shape_cast %43 : vector<1x128xi1> to vector<1x128xi1>
    %133 = vector.broadcast %132 : vector<1x128xi1> to vector<16x128xi1>
    %134 = vector.broadcast %cst_47 : f32 to vector<16x128xf32>
    %135 = arith.select %133, %131, %134 : vector<16x128xi1>, vector<16x128xf32>
    %136 = arith.maximumf %124, %130 : vector<16x128xf32>
    %137 = arith.addf %125, %135 : vector<16x128xf32>
    %c0_48 = arith.constant 0 : index
    %c1_49 = arith.constant 1 : index
    %c0_50 = arith.constant 0 : index
    %138 = vector.load %arg1[%c0_48, %c1_49, %c0_50] : memref<1x8x128xf32, #tpu.memory_space<vmem>>, vector<1x1x128xf32>
    %139 = vector.shape_cast %138 : vector<1x1x128xf32> to vector<1x128xf32>
    %cst_51 = arith.constant dense<0.000000e+00> : vector<128xf32>
    %140 = vector.multi_reduction <add>, %136, %cst_51 [0] : vector<16x128xf32> to vector<128xf32>
    %141 = vector.shape_cast %140 : vector<128xf32> to vector<1x128xf32>
    %142 = arith.mulf %136, %136 : vector<16x128xf32>
    %cst_52 = arith.constant dense<0.000000e+00> : vector<128xf32>
    %143 = vector.multi_reduction <add>, %142, %cst_52 [0] : vector<16x128xf32> to vector<128xf32>
    %144 = vector.shape_cast %143 : vector<128xf32> to vector<1x128xf32>
    %145 = tpu.concatenate %141, %144 in 0 : vector<1x128xf32>, vector<1x128xf32> -> vector<2x128xf32>
    %c0_53 = arith.constant 0 : index
    %c0_54 = arith.constant 0 : index
    %146 = vector.load %arg3[%c0_53, %c0_54] : memref<128x128xf32, #tpu.memory_space<vmem>>, vector<128x128xf32>
    %cst_55 = arith.constant dense<0.000000e+00> : vector<2x128xf32>
    %147 = tpu.matmul %145, %146, %cst_55 {dimension_numbers = #tpu.dot_dimension_numbers<[1], [0], [0], [1], [0, 0, 1, 1], [], []>} : vector<2x128xf32>, vector<128x128xf32>, vector<2x128xf32> -> vector<2x128xf32>
    %148 = vector.extract_strided_slice %147 {offsets = [0, 0], sizes = [1, 128], strides = [1, 1]} : vector<2x128xf32> to vector<1x128xf32>
    %149 = vector.extract_strided_slice %147 {offsets = [1, 0], sizes = [1, 128], strides = [1, 1]} : vector<2x128xf32> to vector<1x128xf32>
    %150 = arith.mulf %148, %148 : vector<1x128xf32>
    %151 = arith.subf %149, %150 : vector<1x128xf32>
    %cst_56 = arith.constant 0.000000e+00 : f32
    %152 = vector.broadcast %cst_56 : f32 to vector<1x128xf32>
    %153 = arith.maximumf %151, %152 : vector<1x128xf32>
    %154 = vector.broadcast %148 : vector<1x128xf32> to vector<16x128xf32>
    %155 = arith.subf %136, %154 : vector<16x128xf32>
    %cst_57 = arith.constant 9.99999974E-6 : f32
    %156 = vector.broadcast %cst_57 : f32 to vector<1x128xf32>
    %157 = arith.addf %153, %156 : vector<1x128xf32>
    %158 = math.rsqrt %157 : vector<1x128xf32>
    %159 = arith.mulf %158, %139 : vector<1x128xf32>
    %160 = vector.broadcast %159 : vector<1x128xf32> to vector<16x128xf32>
    %161 = arith.mulf %155, %160 : vector<16x128xf32>
    %162 = arith.addf %49, %161 : vector<16x128xf32>
    %c0_58 = arith.constant 0 : index
    %c0_59 = arith.constant 0 : index
    %163 = vector.load %arg4[%c0_58, %c0_59] : memref<16x128xf32, #tpu.memory_space<vmem>>, vector<16x128xf32>
    %164 = arith.mulf %137, %163 : vector<16x128xf32>
    %c0_60 = arith.constant 0 : index
    %c2_61 = arith.constant 2 : index
    %c0_62 = arith.constant 0 : index
    %165 = vector.load %arg1[%c0_60, %c2_61, %c0_62] : memref<1x8x128xf32, #tpu.memory_space<vmem>>, vector<1x1x128xf32>
    %166 = vector.shape_cast %165 : vector<1x1x128xf32> to vector<1x128xf32>
    %cst_63 = arith.constant dense<0.000000e+00> : vector<128xf32>
    %167 = vector.multi_reduction <add>, %164, %cst_63 [0] : vector<16x128xf32> to vector<128xf32>
    %168 = vector.shape_cast %167 : vector<128xf32> to vector<1x128xf32>
    %169 = arith.mulf %164, %164 : vector<16x128xf32>
    %cst_64 = arith.constant dense<0.000000e+00> : vector<128xf32>
    %170 = vector.multi_reduction <add>, %169, %cst_64 [0] : vector<16x128xf32> to vector<128xf32>
    %171 = vector.shape_cast %170 : vector<128xf32> to vector<1x128xf32>
    %172 = tpu.concatenate %168, %171 in 0 : vector<1x128xf32>, vector<1x128xf32> -> vector<2x128xf32>
    %c0_65 = arith.constant 0 : index
    %c0_66 = arith.constant 0 : index
    %173 = vector.load %arg3[%c0_65, %c0_66] : memref<128x128xf32, #tpu.memory_space<vmem>>, vector<128x128xf32>
    %cst_67 = arith.constant dense<0.000000e+00> : vector<2x128xf32>
    %174 = tpu.matmul %172, %173, %cst_67 {dimension_numbers = #tpu.dot_dimension_numbers<[1], [0], [0], [1], [0, 0, 1, 1], [], []>} : vector<2x128xf32>, vector<128x128xf32>, vector<2x128xf32> -> vector<2x128xf32>
    %175 = vector.extract_strided_slice %174 {offsets = [0, 0], sizes = [1, 128], strides = [1, 1]} : vector<2x128xf32> to vector<1x128xf32>
    %176 = vector.extract_strided_slice %174 {offsets = [1, 0], sizes = [1, 128], strides = [1, 1]} : vector<2x128xf32> to vector<1x128xf32>
    %177 = arith.mulf %175, %175 : vector<1x128xf32>
    %178 = arith.subf %176, %177 : vector<1x128xf32>
    %cst_68 = arith.constant 0.000000e+00 : f32
    %179 = vector.broadcast %cst_68 : f32 to vector<1x128xf32>
    %180 = arith.maximumf %178, %179 : vector<1x128xf32>
    %181 = vector.broadcast %175 : vector<1x128xf32> to vector<16x128xf32>
    %182 = arith.subf %164, %181 : vector<16x128xf32>
    %cst_69 = arith.constant 9.99999974E-6 : f32
    %183 = vector.broadcast %cst_69 : f32 to vector<1x128xf32>
    %184 = arith.addf %180, %183 : vector<1x128xf32>
    %185 = math.rsqrt %184 : vector<1x128xf32>
    %186 = arith.mulf %185, %166 : vector<1x128xf32>
    %187 = vector.broadcast %186 : vector<1x128xf32> to vector<16x128xf32>
    %188 = arith.mulf %182, %187 : vector<16x128xf32>
    %189 = arith.addf %162, %188 : vector<16x128xf32>
    %cst_70 = arith.constant 0.000000e+00 : f32
    %190 = vector.broadcast %cst_70 : f32 to vector<1x128xf32>
    %191 = vector.extract_strided_slice %45 {offsets = [0, 0], sizes = [15, 128], strides = [1, 1]} : vector<16x128xf32> to vector<15x128xf32>
    %192 = tpu.concatenate %190, %191 in 0 : vector<1x128xf32>, vector<15x128xf32> -> vector<16x128xf32>
    %c0_71 = arith.constant 0 : index
    %c0_72 = arith.constant 0 : index
    %c0_73 = arith.constant 0 : index
    %c0_74 = arith.constant 0 : index
    %193 = vector.load %arg5[%c0_71, %c0_72, %c0_73, %c0_74] : memref<1x24x128x128xf32, #tpu.memory_space<vmem>>, vector<1x1x128x128xf32>
    %194 = vector.shape_cast %193 : vector<1x1x128x128xf32> to vector<128x128xf32>
    %cst_75 = arith.constant dense<0.000000e+00> : vector<16x128xf32>
    %195 = tpu.matmul %192, %194, %cst_75 {dimension_numbers = #tpu.dot_dimension_numbers<[1], [0], [0], [1], [0, 0, 1, 1], [], []>} : vector<16x128xf32>, vector<128x128xf32>, vector<16x128xf32> -> vector<16x128xf32>
    %c0_76 = arith.constant 0 : index
    %c1_77 = arith.constant 1 : index
    %c0_78 = arith.constant 0 : index
    %c0_79 = arith.constant 0 : index
    %196 = vector.load %arg5[%c0_76, %c1_77, %c0_78, %c0_79] : memref<1x24x128x128xf32, #tpu.memory_space<vmem>>, vector<1x1x128x128xf32>
    %197 = vector.shape_cast %196 : vector<1x1x128x128xf32> to vector<128x128xf32>
    %cst_80 = arith.constant dense<0.000000e+00> : vector<16x128xf32>
    %198 = tpu.matmul %45, %197, %cst_80 {dimension_numbers = #tpu.dot_dimension_numbers<[1], [0], [0], [1], [0, 0, 1, 1], [], []>} : vector<16x128xf32>, vector<128x128xf32>, vector<16x128xf32> -> vector<16x128xf32>
    %199 = arith.addf %195, %198 : vector<16x128xf32>
    %cst_81 = arith.constant 0.000000e+00 : f32
    %200 = vector.broadcast %cst_81 : f32 to vector<1x128xf32>
    %201 = vector.extract_strided_slice %45 {offsets = [1, 0], sizes = [15, 128], strides = [1, 1]} : vector<16x128xf32> to vector<15x128xf32>
    %202 = tpu.concatenate %201, %200 in 0 : vector<15x128xf32>, vector<1x128xf32> -> vector<16x128xf32>
    %c0_82 = arith.constant 0 : index
    %c2_83 = arith.constant 2 : index
    %c0_84 = arith.constant 0 : index
    %c0_85 = arith.constant 0 : index
    %203 = vector.load %arg5[%c0_82, %c2_83, %c0_84, %c0_85] : memref<1x24x128x128xf32, #tpu.memory_space<vmem>>, vector<1x1x128x128xf32>
    %204 = vector.shape_cast %203 : vector<1x1x128x128xf32> to vector<128x128xf32>
    %cst_86 = arith.constant dense<0.000000e+00> : vector<16x128xf32>
    %205 = tpu.matmul %202, %204, %cst_86 {dimension_numbers = #tpu.dot_dimension_numbers<[1], [0], [0], [1], [0, 0, 1, 1], [], []>} : vector<16x128xf32>, vector<128x128xf32>, vector<16x128xf32> -> vector<16x128xf32>
    %206 = arith.addf %199, %205 : vector<16x128xf32>
    %cst_87 = arith.constant dense<0.000000e+00> : vector<128xf32>
    %207 = vector.multi_reduction <add>, %206, %cst_87 [0] : vector<16x128xf32> to vector<128xf32>
    %208 = vector.shape_cast %207 : vector<128xf32> to vector<1x128xf32>
    %209 = arith.mulf %206, %206 : vector<16x128xf32>
    %cst_88 = arith.constant dense<0.000000e+00> : vector<128xf32>
    %210 = vector.multi_reduction <add>, %209, %cst_88 [0] : vector<16x128xf32> to vector<128xf32>
    %211 = vector.shape_cast %210 : vector<128xf32> to vector<1x128xf32>
    %212 = tpu.concatenate %208, %211 in 0 : vector<1x128xf32>, vector<1x128xf32> -> vector<2x128xf32>
    %c0_89 = arith.constant 0 : index
    %c0_90 = arith.constant 0 : index
    %213 = vector.load %arg3[%c0_89, %c0_90] : memref<128x128xf32, #tpu.memory_space<vmem>>, vector<128x128xf32>
    %cst_91 = arith.constant dense<0.000000e+00> : vector<2x128xf32>
    %214 = tpu.matmul %212, %213, %cst_91 {dimension_numbers = #tpu.dot_dimension_numbers<[1], [0], [0], [1], [0, 0, 1, 1], [], []>} : vector<2x128xf32>, vector<128x128xf32>, vector<2x128xf32> -> vector<2x128xf32>
    %215 = vector.extract_strided_slice %214 {offsets = [0, 0], sizes = [1, 128], strides = [1, 1]} : vector<2x128xf32> to vector<1x128xf32>
    %216 = vector.extract_strided_slice %214 {offsets = [1, 0], sizes = [1, 128], strides = [1, 1]} : vector<2x128xf32> to vector<1x128xf32>
    %217 = arith.mulf %215, %215 : vector<1x128xf32>
    %218 = arith.subf %216, %217 : vector<1x128xf32>
    %cst_92 = arith.constant 0.000000e+00 : f32
    %219 = vector.broadcast %cst_92 : f32 to vector<1x128xf32>
    %220 = arith.maximumf %218, %219 : vector<1x128xf32>
    %221 = vector.broadcast %215 : vector<1x128xf32> to vector<16x128xf32>
    %222 = arith.subf %206, %221 : vector<16x128xf32>
    %cst_93 = arith.constant 9.99999974E-6 : f32
    %223 = vector.broadcast %cst_93 : f32 to vector<1x128xf32>
    %224 = arith.addf %220, %223 : vector<1x128xf32>
    %225 = math.rsqrt %224 : vector<1x128xf32>
    %cst_94 = arith.constant 1.000000e+00 : f32
    %226 = vector.broadcast %cst_94 : f32 to vector<1x128xf32>
    %227 = arith.mulf %225, %226 : vector<1x128xf32>
    %228 = vector.broadcast %227 : vector<1x128xf32> to vector<16x128xf32>
    %229 = arith.mulf %222, %228 : vector<16x128xf32>
    %cst_95 = arith.constant 0.000000e+00 : f32
    %230 = vector.broadcast %cst_95 : f32 to vector<16x128xf32>
    %231 = arith.maximumf %229, %230 : vector<16x128xf32>
    %cst_96 = arith.constant 0.000000e+00 : f32
    %232 = vector.broadcast %cst_96 : f32 to vector<1x128xf32>
    %233 = vector.extract_strided_slice %231 {offsets = [0, 0], sizes = [15, 128], strides = [1, 1]} : vector<16x128xf32> to vector<15x128xf32>
    %234 = tpu.concatenate %232, %233 in 0 : vector<1x128xf32>, vector<15x128xf32> -> vector<16x128xf32>
    %c0_97 = arith.constant 0 : index
    %c3_98 = arith.constant 3 : index
    %c0_99 = arith.constant 0 : index
    %c0_100 = arith.constant 0 : index
    %235 = vector.load %arg5[%c0_97, %c3_98, %c0_99, %c0_100] : memref<1x24x128x128xf32, #tpu.memory_space<vmem>>, vector<1x1x128x128xf32>
    %236 = vector.shape_cast %235 : vector<1x1x128x128xf32> to vector<128x128xf32>
    %cst_101 = arith.constant dense<0.000000e+00> : vector<16x128xf32>
    %237 = tpu.matmul %234, %236, %cst_101 {dimension_numbers = #tpu.dot_dimension_numbers<[1], [0], [0], [1], [0, 0, 1, 1], [], []>} : vector<16x128xf32>, vector<128x128xf32>, vector<16x128xf32> -> vector<16x128xf32>
    %c0_102 = arith.constant 0 : index
    %c4 = arith.constant 4 : index
    %c0_103 = arith.constant 0 : index
    %c0_104 = arith.constant 0 : index
    %238 = vector.load %arg5[%c0_102, %c4, %c0_103, %c0_104] : memref<1x24x128x128xf32, #tpu.memory_space<vmem>>, vector<1x1x128x128xf32>
    %239 = vector.shape_cast %238 : vector<1x1x128x128xf32> to vector<128x128xf32>
    %cst_105 = arith.constant dense<0.000000e+00> : vector<16x128xf32>
    %240 = tpu.matmul %231, %239, %cst_105 {dimension_numbers = #tpu.dot_dimension_numbers<[1], [0], [0], [1], [0, 0, 1, 1], [], []>} : vector<16x128xf32>, vector<128x128xf32>, vector<16x128xf32> -> vector<16x128xf32>
    %241 = arith.addf %237, %240 : vector<16x128xf32>
    %cst_106 = arith.constant 0.000000e+00 : f32
    %242 = vector.broadcast %cst_106 : f32 to vector<1x128xf32>
    %243 = vector.extract_strided_slice %231 {offsets = [1, 0], sizes = [15, 128], strides = [1, 1]} : vector<16x128xf32> to vector<15x128xf32>
    %244 = tpu.concatenate %243, %242 in 0 : vector<15x128xf32>, vector<1x128xf32> -> vector<16x128xf32>
    %c0_107 = arith.constant 0 : index
    %c5 = arith.constant 5 : index
    %c0_108 = arith.constant 0 : index
    %c0_109 = arith.constant 0 : index
    %245 = vector.load %arg5[%c0_107, %c5, %c0_108, %c0_109] : memref<1x24x128x128xf32, #tpu.memory_space<vmem>>, vector<1x1x128x128xf32>
    %246 = vector.shape_cast %245 : vector<1x1x128x128xf32> to vector<128x128xf32>
    %cst_110 = arith.constant dense<0.000000e+00> : vector<16x128xf32>
    %247 = tpu.matmul %244, %246, %cst_110 {dimension_numbers = #tpu.dot_dimension_numbers<[1], [0], [0], [1], [0, 0, 1, 1], [], []>} : vector<16x128xf32>, vector<128x128xf32>, vector<16x128xf32> -> vector<16x128xf32>
    %248 = arith.addf %241, %247 : vector<16x128xf32>
    %c0_111 = arith.constant 0 : index
    %c4_112 = arith.constant 4 : index
    %c0_113 = arith.constant 0 : index
    %249 = vector.load %arg1[%c0_111, %c4_112, %c0_113] : memref<1x8x128xf32, #tpu.memory_space<vmem>>, vector<1x1x128xf32>
    %250 = vector.shape_cast %249 : vector<1x1x128xf32> to vector<1x128xf32>
    %cst_114 = arith.constant dense<0.000000e+00> : vector<128xf32>
    %251 = vector.multi_reduction <add>, %248, %cst_114 [0] : vector<16x128xf32> to vector<128xf32>
    %252 = vector.shape_cast %251 : vector<128xf32> to vector<1x128xf32>
    %253 = arith.mulf %248, %248 : vector<16x128xf32>
    %cst_115 = arith.constant dense<0.000000e+00> : vector<128xf32>
    %254 = vector.multi_reduction <add>, %253, %cst_115 [0] : vector<16x128xf32> to vector<128xf32>
    %255 = vector.shape_cast %254 : vector<128xf32> to vector<1x128xf32>
    %256 = tpu.concatenate %252, %255 in 0 : vector<1x128xf32>, vector<1x128xf32> -> vector<2x128xf32>
    %c0_116 = arith.constant 0 : index
    %c0_117 = arith.constant 0 : index
    %257 = vector.load %arg3[%c0_116, %c0_117] : memref<128x128xf32, #tpu.memory_space<vmem>>, vector<128x128xf32>
    %cst_118 = arith.constant dense<0.000000e+00> : vector<2x128xf32>
    %258 = tpu.matmul %256, %257, %cst_118 {dimension_numbers = #tpu.dot_dimension_numbers<[1], [0], [0], [1], [0, 0, 1, 1], [], []>} : vector<2x128xf32>, vector<128x128xf32>, vector<2x128xf32> -> vector<2x128xf32>
    %259 = vector.extract_strided_slice %258 {offsets = [0, 0], sizes = [1, 128], strides = [1, 1]} : vector<2x128xf32> to vector<1x128xf32>
    %260 = vector.extract_strided_slice %258 {offsets = [1, 0], sizes = [1, 128], strides = [1, 1]} : vector<2x128xf32> to vector<1x128xf32>
    %261 = arith.mulf %259, %259 : vector<1x128xf32>
    %262 = arith.subf %260, %261 : vector<1x128xf32>
    %cst_119 = arith.constant 0.000000e+00 : f32
    %263 = vector.broadcast %cst_119 : f32 to vector<1x128xf32>
    %264 = arith.maximumf %262, %263 : vector<1x128xf32>
    %265 = vector.broadcast %259 : vector<1x128xf32> to vector<16x128xf32>
    %266 = arith.subf %248, %265 : vector<16x128xf32>
    %cst_120 = arith.constant 9.99999974E-6 : f32
    %267 = vector.broadcast %cst_120 : f32 to vector<1x128xf32>
    %268 = arith.addf %264, %267 : vector<1x128xf32>
    %269 = math.rsqrt %268 : vector<1x128xf32>
    %270 = arith.mulf %269, %250 : vector<1x128xf32>
    %271 = vector.broadcast %270 : vector<1x128xf32> to vector<16x128xf32>
    %272 = arith.mulf %266, %271 : vector<16x128xf32>
    %273 = arith.addf %189, %272 : vector<16x128xf32>
    %cst_121 = arith.constant 0.000000e+00 : f32
    %274 = vector.broadcast %cst_121 : f32 to vector<2x128xf32>
    %275 = vector.extract_strided_slice %45 {offsets = [0, 0], sizes = [14, 128], strides = [1, 1]} : vector<16x128xf32> to vector<14x128xf32>
    %276 = tpu.concatenate %274, %275 in 0 : vector<2x128xf32>, vector<14x128xf32> -> vector<16x128xf32>
    %c0_122 = arith.constant 0 : index
    %c6 = arith.constant 6 : index
    %c0_123 = arith.constant 0 : index
    %c0_124 = arith.constant 0 : index
    %277 = vector.load %arg5[%c0_122, %c6, %c0_123, %c0_124] : memref<1x24x128x128xf32, #tpu.memory_space<vmem>>, vector<1x1x128x128xf32>
    %278 = vector.shape_cast %277 : vector<1x1x128x128xf32> to vector<128x128xf32>
    %cst_125 = arith.constant dense<0.000000e+00> : vector<16x128xf32>
    %279 = tpu.matmul %276, %278, %cst_125 {dimension_numbers = #tpu.dot_dimension_numbers<[1], [0], [0], [1], [0, 0, 1, 1], [], []>} : vector<16x128xf32>, vector<128x128xf32>, vector<16x128xf32> -> vector<16x128xf32>
    %cst_126 = arith.constant 0.000000e+00 : f32
    %280 = vector.broadcast %cst_126 : f32 to vector<1x128xf32>
    %281 = vector.extract_strided_slice %45 {offsets = [0, 0], sizes = [15, 128], strides = [1, 1]} : vector<16x128xf32> to vector<15x128xf32>
    %282 = tpu.concatenate %280, %281 in 0 : vector<1x128xf32>, vector<15x128xf32> -> vector<16x128xf32>
    %c0_127 = arith.constant 0 : index
    %c7 = arith.constant 7 : index
    %c0_128 = arith.constant 0 : index
    %c0_129 = arith.constant 0 : index
    %283 = vector.load %arg5[%c0_127, %c7, %c0_128, %c0_129] : memref<1x24x128x128xf32, #tpu.memory_space<vmem>>, vector<1x1x128x128xf32>
    %284 = vector.shape_cast %283 : vector<1x1x128x128xf32> to vector<128x128xf32>
    %cst_130 = arith.constant dense<0.000000e+00> : vector<16x128xf32>
    %285 = tpu.matmul %282, %284, %cst_130 {dimension_numbers = #tpu.dot_dimension_numbers<[1], [0], [0], [1], [0, 0, 1, 1], [], []>} : vector<16x128xf32>, vector<128x128xf32>, vector<16x128xf32> -> vector<16x128xf32>
    %286 = arith.addf %279, %285 : vector<16x128xf32>
    %c0_131 = arith.constant 0 : index
    %c8 = arith.constant 8 : index
    %c0_132 = arith.constant 0 : index
    %c0_133 = arith.constant 0 : index
    %287 = vector.load %arg5[%c0_131, %c8, %c0_132, %c0_133] : memref<1x24x128x128xf32, #tpu.memory_space<vmem>>, vector<1x1x128x128xf32>
    %288 = vector.shape_cast %287 : vector<1x1x128x128xf32> to vector<128x128xf32>
    %cst_134 = arith.constant dense<0.000000e+00> : vector<16x128xf32>
    %289 = tpu.matmul %45, %288, %cst_134 {dimension_numbers = #tpu.dot_dimension_numbers<[1], [0], [0], [1], [0, 0, 1, 1], [], []>} : vector<16x128xf32>, vector<128x128xf32>, vector<16x128xf32> -> vector<16x128xf32>
    %290 = arith.addf %286, %289 : vector<16x128xf32>
    %cst_135 = arith.constant 0.000000e+00 : f32
    %291 = vector.broadcast %cst_135 : f32 to vector<1x128xf32>
    %292 = vector.extract_strided_slice %45 {offsets = [1, 0], sizes = [15, 128], strides = [1, 1]} : vector<16x128xf32> to vector<15x128xf32>
    %293 = tpu.concatenate %292, %291 in 0 : vector<15x128xf32>, vector<1x128xf32> -> vector<16x128xf32>
    %c0_136 = arith.constant 0 : index
    %c9 = arith.constant 9 : index
    %c0_137 = arith.constant 0 : index
    %c0_138 = arith.constant 0 : index
    %294 = vector.load %arg5[%c0_136, %c9, %c0_137, %c0_138] : memref<1x24x128x128xf32, #tpu.memory_space<vmem>>, vector<1x1x128x128xf32>
    %295 = vector.shape_cast %294 : vector<1x1x128x128xf32> to vector<128x128xf32>
    %cst_139 = arith.constant dense<0.000000e+00> : vector<16x128xf32>
    %296 = tpu.matmul %293, %295, %cst_139 {dimension_numbers = #tpu.dot_dimension_numbers<[1], [0], [0], [1], [0, 0, 1, 1], [], []>} : vector<16x128xf32>, vector<128x128xf32>, vector<16x128xf32> -> vector<16x128xf32>
    %297 = arith.addf %290, %296 : vector<16x128xf32>
    %cst_140 = arith.constant 0.000000e+00 : f32
    %298 = vector.broadcast %cst_140 : f32 to vector<2x128xf32>
    %299 = vector.extract_strided_slice %45 {offsets = [2, 0], sizes = [14, 128], strides = [1, 1]} : vector<16x128xf32> to vector<14x128xf32>
    %300 = tpu.concatenate %299, %298 in 0 : vector<14x128xf32>, vector<2x128xf32> -> vector<16x128xf32>
    %c0_141 = arith.constant 0 : index
    %c10 = arith.constant 10 : index
    %c0_142 = arith.constant 0 : index
    %c0_143 = arith.constant 0 : index
    %301 = vector.load %arg5[%c0_141, %c10, %c0_142, %c0_143] : memref<1x24x128x128xf32, #tpu.memory_space<vmem>>, vector<1x1x128x128xf32>
    %302 = vector.shape_cast %301 : vector<1x1x128x128xf32> to vector<128x128xf32>
    %cst_144 = arith.constant dense<0.000000e+00> : vector<16x128xf32>
    %303 = tpu.matmul %300, %302, %cst_144 {dimension_numbers = #tpu.dot_dimension_numbers<[1], [0], [0], [1], [0, 0, 1, 1], [], []>} : vector<16x128xf32>, vector<128x128xf32>, vector<16x128xf32> -> vector<16x128xf32>
    %304 = arith.addf %297, %303 : vector<16x128xf32>
    %cst_145 = arith.constant dense<0.000000e+00> : vector<128xf32>
    %305 = vector.multi_reduction <add>, %304, %cst_145 [0] : vector<16x128xf32> to vector<128xf32>
    %306 = vector.shape_cast %305 : vector<128xf32> to vector<1x128xf32>
    %307 = arith.mulf %304, %304 : vector<16x128xf32>
    %cst_146 = arith.constant dense<0.000000e+00> : vector<128xf32>
    %308 = vector.multi_reduction <add>, %307, %cst_146 [0] : vector<16x128xf32> to vector<128xf32>
    %309 = vector.shape_cast %308 : vector<128xf32> to vector<1x128xf32>
    %310 = tpu.concatenate %306, %309 in 0 : vector<1x128xf32>, vector<1x128xf32> -> vector<2x128xf32>
    %c0_147 = arith.constant 0 : index
    %c0_148 = arith.constant 0 : index
    %311 = vector.load %arg3[%c0_147, %c0_148] : memref<128x128xf32, #tpu.memory_space<vmem>>, vector<128x128xf32>
    %cst_149 = arith.constant dense<0.000000e+00> : vector<2x128xf32>
    %312 = tpu.matmul %310, %311, %cst_149 {dimension_numbers = #tpu.dot_dimension_numbers<[1], [0], [0], [1], [0, 0, 1, 1], [], []>} : vector<2x128xf32>, vector<128x128xf32>, vector<2x128xf32> -> vector<2x128xf32>
    %313 = vector.extract_strided_slice %312 {offsets = [0, 0], sizes = [1, 128], strides = [1, 1]} : vector<2x128xf32> to vector<1x128xf32>
    %314 = vector.extract_strided_slice %312 {offsets = [1, 0], sizes = [1, 128], strides = [1, 1]} : vector<2x128xf32> to vector<1x128xf32>
    %315 = arith.mulf %313, %313 : vector<1x128xf32>
    %316 = arith.subf %314, %315 : vector<1x128xf32>
    %cst_150 = arith.constant 0.000000e+00 : f32
    %317 = vector.broadcast %cst_150 : f32 to vector<1x128xf32>
    %318 = arith.maximumf %316, %317 : vector<1x128xf32>
    %319 = vector.broadcast %313 : vector<1x128xf32> to vector<16x128xf32>
    %320 = arith.subf %304, %319 : vector<16x128xf32>
    %cst_151 = arith.constant 9.99999974E-6 : f32
    %321 = vector.broadcast %cst_151 : f32 to vector<1x128xf32>
    %322 = arith.addf %318, %321 : vector<1x128xf32>
    %323 = math.rsqrt %322 : vector<1x128xf32>
    %cst_152 = arith.constant 1.000000e+00 : f32
    %324 = vector.broadcast %cst_152 : f32 to vector<1x128xf32>
    %325 = arith.mulf %323, %324 : vector<1x128xf32>
    %326 = vector.broadcast %325 : vector<1x128xf32> to vector<16x128xf32>
    %327 = arith.mulf %320, %326 : vector<16x128xf32>
    %cst_153 = arith.constant 0.000000e+00 : f32
    %328 = vector.broadcast %cst_153 : f32 to vector<16x128xf32>
    %329 = arith.maximumf %327, %328 : vector<16x128xf32>
    %cst_154 = arith.constant 0.000000e+00 : f32
    %330 = vector.broadcast %cst_154 : f32 to vector<2x128xf32>
    %331 = vector.extract_strided_slice %329 {offsets = [0, 0], sizes = [14, 128], strides = [1, 1]} : vector<16x128xf32> to vector<14x128xf32>
    %332 = tpu.concatenate %330, %331 in 0 : vector<2x128xf32>, vector<14x128xf32> -> vector<16x128xf32>
    %c0_155 = arith.constant 0 : index
    %c11 = arith.constant 11 : index
    %c0_156 = arith.constant 0 : index
    %c0_157 = arith.constant 0 : index
    %333 = vector.load %arg5[%c0_155, %c11, %c0_156, %c0_157] : memref<1x24x128x128xf32, #tpu.memory_space<vmem>>, vector<1x1x128x128xf32>
    %334 = vector.shape_cast %333 : vector<1x1x128x128xf32> to vector<128x128xf32>
    %cst_158 = arith.constant dense<0.000000e+00> : vector<16x128xf32>
    %335 = tpu.matmul %332, %334, %cst_158 {dimension_numbers = #tpu.dot_dimension_numbers<[1], [0], [0], [1], [0, 0, 1, 1], [], []>} : vector<16x128xf32>, vector<128x128xf32>, vector<16x128xf32> -> vector<16x128xf32>
    %cst_159 = arith.constant 0.000000e+00 : f32
    %336 = vector.broadcast %cst_159 : f32 to vector<1x128xf32>
    %337 = vector.extract_strided_slice %329 {offsets = [0, 0], sizes = [15, 128], strides = [1, 1]} : vector<16x128xf32> to vector<15x128xf32>
    %338 = tpu.concatenate %336, %337 in 0 : vector<1x128xf32>, vector<15x128xf32> -> vector<16x128xf32>
    %c0_160 = arith.constant 0 : index
    %c12 = arith.constant 12 : index
    %c0_161 = arith.constant 0 : index
    %c0_162 = arith.constant 0 : index
    %339 = vector.load %arg5[%c0_160, %c12, %c0_161, %c0_162] : memref<1x24x128x128xf32, #tpu.memory_space<vmem>>, vector<1x1x128x128xf32>
    %340 = vector.shape_cast %339 : vector<1x1x128x128xf32> to vector<128x128xf32>
    %cst_163 = arith.constant dense<0.000000e+00> : vector<16x128xf32>
    %341 = tpu.matmul %338, %340, %cst_163 {dimension_numbers = #tpu.dot_dimension_numbers<[1], [0], [0], [1], [0, 0, 1, 1], [], []>} : vector<16x128xf32>, vector<128x128xf32>, vector<16x128xf32> -> vector<16x128xf32>
    %342 = arith.addf %335, %341 : vector<16x128xf32>
    %c0_164 = arith.constant 0 : index
    %c13 = arith.constant 13 : index
    %c0_165 = arith.constant 0 : index
    %c0_166 = arith.constant 0 : index
    %343 = vector.load %arg5[%c0_164, %c13, %c0_165, %c0_166] : memref<1x24x128x128xf32, #tpu.memory_space<vmem>>, vector<1x1x128x128xf32>
    %344 = vector.shape_cast %343 : vector<1x1x128x128xf32> to vector<128x128xf32>
    %cst_167 = arith.constant dense<0.000000e+00> : vector<16x128xf32>
    %345 = tpu.matmul %329, %344, %cst_167 {dimension_numbers = #tpu.dot_dimension_numbers<[1], [0], [0], [1], [0, 0, 1, 1], [], []>} : vector<16x128xf32>, vector<128x128xf32>, vector<16x128xf32> -> vector<16x128xf32>
    %346 = arith.addf %342, %345 : vector<16x128xf32>
    %cst_168 = arith.constant 0.000000e+00 : f32
    %347 = vector.broadcast %cst_168 : f32 to vector<1x128xf32>
    %348 = vector.extract_strided_slice %329 {offsets = [1, 0], sizes = [15, 128], strides = [1, 1]} : vector<16x128xf32> to vector<15x128xf32>
    %349 = tpu.concatenate %348, %347 in 0 : vector<15x128xf32>, vector<1x128xf32> -> vector<16x128xf32>
    %c0_169 = arith.constant 0 : index
    %c14 = arith.constant 14 : index
    %c0_170 = arith.constant 0 : index
    %c0_171 = arith.constant 0 : index
    %350 = vector.load %arg5[%c0_169, %c14, %c0_170, %c0_171] : memref<1x24x128x128xf32, #tpu.memory_space<vmem>>, vector<1x1x128x128xf32>
    %351 = vector.shape_cast %350 : vector<1x1x128x128xf32> to vector<128x128xf32>
    %cst_172 = arith.constant dense<0.000000e+00> : vector<16x128xf32>
    %352 = tpu.matmul %349, %351, %cst_172 {dimension_numbers = #tpu.dot_dimension_numbers<[1], [0], [0], [1], [0, 0, 1, 1], [], []>} : vector<16x128xf32>, vector<128x128xf32>, vector<16x128xf32> -> vector<16x128xf32>
    %353 = arith.addf %346, %352 : vector<16x128xf32>
    %cst_173 = arith.constant 0.000000e+00 : f32
    %354 = vector.broadcast %cst_173 : f32 to vector<2x128xf32>
    %355 = vector.extract_strided_slice %329 {offsets = [2, 0], sizes = [14, 128], strides = [1, 1]} : vector<16x128xf32> to vector<14x128xf32>
    %356 = tpu.concatenate %355, %354 in 0 : vector<14x128xf32>, vector<2x128xf32> -> vector<16x128xf32>
    %c0_174 = arith.constant 0 : index
    %c15 = arith.constant 15 : index
    %c0_175 = arith.constant 0 : index
    %c0_176 = arith.constant 0 : index
    %357 = vector.load %arg5[%c0_174, %c15, %c0_175, %c0_176] : memref<1x24x128x128xf32, #tpu.memory_space<vmem>>, vector<1x1x128x128xf32>
    %358 = vector.shape_cast %357 : vector<1x1x128x128xf32> to vector<128x128xf32>
    %cst_177 = arith.constant dense<0.000000e+00> : vector<16x128xf32>
    %359 = tpu.matmul %356, %358, %cst_177 {dimension_numbers = #tpu.dot_dimension_numbers<[1], [0], [0], [1], [0, 0, 1, 1], [], []>} : vector<16x128xf32>, vector<128x128xf32>, vector<16x128xf32> -> vector<16x128xf32>
    %360 = arith.addf %353, %359 : vector<16x128xf32>
    %c0_178 = arith.constant 0 : index
    %c5_179 = arith.constant 5 : index
    %c0_180 = arith.constant 0 : index
    %361 = vector.load %arg1[%c0_178, %c5_179, %c0_180] : memref<1x8x128xf32, #tpu.memory_space<vmem>>, vector<1x1x128xf32>
    %362 = vector.shape_cast %361 : vector<1x1x128xf32> to vector<1x128xf32>
    %cst_181 = arith.constant dense<0.000000e+00> : vector<128xf32>
    %363 = vector.multi_reduction <add>, %360, %cst_181 [0] : vector<16x128xf32> to vector<128xf32>
    %364 = vector.shape_cast %363 : vector<128xf32> to vector<1x128xf32>
    %365 = arith.mulf %360, %360 : vector<16x128xf32>
    %cst_182 = arith.constant dense<0.000000e+00> : vector<128xf32>
    %366 = vector.multi_reduction <add>, %365, %cst_182 [0] : vector<16x128xf32> to vector<128xf32>
    %367 = vector.shape_cast %366 : vector<128xf32> to vector<1x128xf32>
    %368 = tpu.concatenate %364, %367 in 0 : vector<1x128xf32>, vector<1x128xf32> -> vector<2x128xf32>
    %c0_183 = arith.constant 0 : index
    %c0_184 = arith.constant 0 : index
    %369 = vector.load %arg3[%c0_183, %c0_184] : memref<128x128xf32, #tpu.memory_space<vmem>>, vector<128x128xf32>
    %cst_185 = arith.constant dense<0.000000e+00> : vector<2x128xf32>
    %370 = tpu.matmul %368, %369, %cst_185 {dimension_numbers = #tpu.dot_dimension_numbers<[1], [0], [0], [1], [0, 0, 1, 1], [], []>} : vector<2x128xf32>, vector<128x128xf32>, vector<2x128xf32> -> vector<2x128xf32>
    %371 = vector.extract_strided_slice %370 {offsets = [0, 0], sizes = [1, 128], strides = [1, 1]} : vector<2x128xf32> to vector<1x128xf32>
    %372 = vector.extract_strided_slice %370 {offsets = [1, 0], sizes = [1, 128], strides = [1, 1]} : vector<2x128xf32> to vector<1x128xf32>
    %373 = arith.mulf %371, %371 : vector<1x128xf32>
    %374 = arith.subf %372, %373 : vector<1x128xf32>
    %cst_186 = arith.constant 0.000000e+00 : f32
    %375 = vector.broadcast %cst_186 : f32 to vector<1x128xf32>
    %376 = arith.maximumf %374, %375 : vector<1x128xf32>
    %377 = vector.broadcast %371 : vector<1x128xf32> to vector<16x128xf32>
    %378 = arith.subf %360, %377 : vector<16x128xf32>
    %cst_187 = arith.constant 9.99999974E-6 : f32
    %379 = vector.broadcast %cst_187 : f32 to vector<1x128xf32>
    %380 = arith.addf %376, %379 : vector<1x128xf32>
    %381 = math.rsqrt %380 : vector<1x128xf32>
    %382 = arith.mulf %381, %362 : vector<1x128xf32>
    %383 = vector.broadcast %382 : vector<1x128xf32> to vector<16x128xf32>
    %384 = arith.mulf %378, %383 : vector<16x128xf32>
    %385 = arith.addf %273, %384 : vector<16x128xf32>
    %cst_188 = arith.constant 0.000000e+00 : f32
    %386 = vector.broadcast %cst_188 : f32 to vector<2x128xf32>
    %387 = vector.extract_strided_slice %45 {offsets = [0, 0], sizes = [14, 128], strides = [1, 1]} : vector<16x128xf32> to vector<14x128xf32>
    %388 = tpu.concatenate %386, %387 in 0 : vector<2x128xf32>, vector<14x128xf32> -> vector<16x128xf32>
    %c0_189 = arith.constant 0 : index
    %c16 = arith.constant 16 : index
    %c0_190 = arith.constant 0 : index
    %c0_191 = arith.constant 0 : index
    %389 = vector.load %arg5[%c0_189, %c16, %c0_190, %c0_191] : memref<1x24x128x128xf32, #tpu.memory_space<vmem>>, vector<1x1x128x128xf32>
    %390 = vector.shape_cast %389 : vector<1x1x128x128xf32> to vector<128x128xf32>
    %cst_192 = arith.constant dense<0.000000e+00> : vector<16x128xf32>
    %391 = tpu.matmul %388, %390, %cst_192 {dimension_numbers = #tpu.dot_dimension_numbers<[1], [0], [0], [1], [0, 0, 1, 1], [], []>} : vector<16x128xf32>, vector<128x128xf32>, vector<16x128xf32> -> vector<16x128xf32>
    %c0_193 = arith.constant 0 : index
    %c17 = arith.constant 17 : index
    %c0_194 = arith.constant 0 : index
    %c0_195 = arith.constant 0 : index
    %392 = vector.load %arg5[%c0_193, %c17, %c0_194, %c0_195] : memref<1x24x128x128xf32, #tpu.memory_space<vmem>>, vector<1x1x128x128xf32>
    %393 = vector.shape_cast %392 : vector<1x1x128x128xf32> to vector<128x128xf32>
    %cst_196 = arith.constant dense<0.000000e+00> : vector<16x128xf32>
    %394 = tpu.matmul %45, %393, %cst_196 {dimension_numbers = #tpu.dot_dimension_numbers<[1], [0], [0], [1], [0, 0, 1, 1], [], []>} : vector<16x128xf32>, vector<128x128xf32>, vector<16x128xf32> -> vector<16x128xf32>
    %395 = arith.addf %391, %394 : vector<16x128xf32>
    %cst_197 = arith.constant 0.000000e+00 : f32
    %396 = vector.broadcast %cst_197 : f32 to vector<2x128xf32>
    %397 = vector.extract_strided_slice %45 {offsets = [2, 0], sizes = [14, 128], strides = [1, 1]} : vector<16x128xf32> to vector<14x128xf32>
    %398 = tpu.concatenate %397, %396 in 0 : vector<14x128xf32>, vector<2x128xf32> -> vector<16x128xf32>
    %c0_198 = arith.constant 0 : index
    %c18 = arith.constant 18 : index
    %c0_199 = arith.constant 0 : index
    %c0_200 = arith.constant 0 : index
    %399 = vector.load %arg5[%c0_198, %c18, %c0_199, %c0_200] : memref<1x24x128x128xf32, #tpu.memory_space<vmem>>, vector<1x1x128x128xf32>
    %400 = vector.shape_cast %399 : vector<1x1x128x128xf32> to vector<128x128xf32>
    %cst_201 = arith.constant dense<0.000000e+00> : vector<16x128xf32>
    %401 = tpu.matmul %398, %400, %cst_201 {dimension_numbers = #tpu.dot_dimension_numbers<[1], [0], [0], [1], [0, 0, 1, 1], [], []>} : vector<16x128xf32>, vector<128x128xf32>, vector<16x128xf32> -> vector<16x128xf32>
    %402 = arith.addf %395, %401 : vector<16x128xf32>
    %c0_202 = arith.constant 0 : index
    %c6_203 = arith.constant 6 : index
    %c0_204 = arith.constant 0 : index
    %403 = vector.load %arg1[%c0_202, %c6_203, %c0_204] : memref<1x8x128xf32, #tpu.memory_space<vmem>>, vector<1x1x128xf32>
    %404 = vector.shape_cast %403 : vector<1x1x128xf32> to vector<1x128xf32>
    %cst_205 = arith.constant dense<0.000000e+00> : vector<128xf32>
    %405 = vector.multi_reduction <add>, %402, %cst_205 [0] : vector<16x128xf32> to vector<128xf32>
    %406 = vector.shape_cast %405 : vector<128xf32> to vector<1x128xf32>
    %407 = arith.mulf %402, %402 : vector<16x128xf32>
    %cst_206 = arith.constant dense<0.000000e+00> : vector<128xf32>
    %408 = vector.multi_reduction <add>, %407, %cst_206 [0] : vector<16x128xf32> to vector<128xf32>
    %409 = vector.shape_cast %408 : vector<128xf32> to vector<1x128xf32>
    %410 = tpu.concatenate %406, %409 in 0 : vector<1x128xf32>, vector<1x128xf32> -> vector<2x128xf32>
    %c0_207 = arith.constant 0 : index
    %c0_208 = arith.constant 0 : index
    %411 = vector.load %arg3[%c0_207, %c0_208] : memref<128x128xf32, #tpu.memory_space<vmem>>, vector<128x128xf32>
    %cst_209 = arith.constant dense<0.000000e+00> : vector<2x128xf32>
    %412 = tpu.matmul %410, %411, %cst_209 {dimension_numbers = #tpu.dot_dimension_numbers<[1], [0], [0], [1], [0, 0, 1, 1], [], []>} : vector<2x128xf32>, vector<128x128xf32>, vector<2x128xf32> -> vector<2x128xf32>
    %413 = vector.extract_strided_slice %412 {offsets = [0, 0], sizes = [1, 128], strides = [1, 1]} : vector<2x128xf32> to vector<1x128xf32>
    %414 = vector.extract_strided_slice %412 {offsets = [1, 0], sizes = [1, 128], strides = [1, 1]} : vector<2x128xf32> to vector<1x128xf32>
    %415 = arith.mulf %413, %413 : vector<1x128xf32>
    %416 = arith.subf %414, %415 : vector<1x128xf32>
    %cst_210 = arith.constant 0.000000e+00 : f32
    %417 = vector.broadcast %cst_210 : f32 to vector<1x128xf32>
    %418 = arith.maximumf %416, %417 : vector<1x128xf32>
    %419 = vector.broadcast %413 : vector<1x128xf32> to vector<16x128xf32>
    %420 = arith.subf %402, %419 : vector<16x128xf32>
    %cst_211 = arith.constant 9.99999974E-6 : f32
    %421 = vector.broadcast %cst_211 : f32 to vector<1x128xf32>
    %422 = arith.addf %418, %421 : vector<1x128xf32>
    %423 = math.rsqrt %422 : vector<1x128xf32>
    %424 = arith.mulf %423, %404 : vector<1x128xf32>
    %425 = vector.broadcast %424 : vector<1x128xf32> to vector<16x128xf32>
    %426 = arith.mulf %420, %425 : vector<16x128xf32>
    %427 = arith.addf %385, %426 : vector<16x128xf32>
    %cst_212 = arith.constant 0.000000e+00 : f32
    %428 = vector.broadcast %cst_212 : f32 to vector<4x128xf32>
    %429 = vector.extract_strided_slice %45 {offsets = [0, 0], sizes = [12, 128], strides = [1, 1]} : vector<16x128xf32> to vector<12x128xf32>
    %430 = tpu.concatenate %428, %429 in 0 : vector<4x128xf32>, vector<12x128xf32> -> vector<16x128xf32>
    %c0_213 = arith.constant 0 : index
    %c19 = arith.constant 19 : index
    %c0_214 = arith.constant 0 : index
    %c0_215 = arith.constant 0 : index
    %431 = vector.load %arg5[%c0_213, %c19, %c0_214, %c0_215] : memref<1x24x128x128xf32, #tpu.memory_space<vmem>>, vector<1x1x128x128xf32>
    %432 = vector.shape_cast %431 : vector<1x1x128x128xf32> to vector<128x128xf32>
    %cst_216 = arith.constant dense<0.000000e+00> : vector<16x128xf32>
    %433 = tpu.matmul %430, %432, %cst_216 {dimension_numbers = #tpu.dot_dimension_numbers<[1], [0], [0], [1], [0, 0, 1, 1], [], []>} : vector<16x128xf32>, vector<128x128xf32>, vector<16x128xf32> -> vector<16x128xf32>
    %cst_217 = arith.constant 0.000000e+00 : f32
    %434 = vector.broadcast %cst_217 : f32 to vector<2x128xf32>
    %435 = vector.extract_strided_slice %45 {offsets = [0, 0], sizes = [14, 128], strides = [1, 1]} : vector<16x128xf32> to vector<14x128xf32>
    %436 = tpu.concatenate %434, %435 in 0 : vector<2x128xf32>, vector<14x128xf32> -> vector<16x128xf32>
    %c0_218 = arith.constant 0 : index
    %c20 = arith.constant 20 : index
    %c0_219 = arith.constant 0 : index
    %c0_220 = arith.constant 0 : index
    %437 = vector.load %arg5[%c0_218, %c20, %c0_219, %c0_220] : memref<1x24x128x128xf32, #tpu.memory_space<vmem>>, vector<1x1x128x128xf32>
    %438 = vector.shape_cast %437 : vector<1x1x128x128xf32> to vector<128x128xf32>
    %cst_221 = arith.constant dense<0.000000e+00> : vector<16x128xf32>
    %439 = tpu.matmul %436, %438, %cst_221 {dimension_numbers = #tpu.dot_dimension_numbers<[1], [0], [0], [1], [0, 0, 1, 1], [], []>} : vector<16x128xf32>, vector<128x128xf32>, vector<16x128xf32> -> vector<16x128xf32>
    %440 = arith.addf %433, %439 : vector<16x128xf32>
    %c0_222 = arith.constant 0 : index
    %c21 = arith.constant 21 : index
    %c0_223 = arith.constant 0 : index
    %c0_224 = arith.constant 0 : index
    %441 = vector.load %arg5[%c0_222, %c21, %c0_223, %c0_224] : memref<1x24x128x128xf32, #tpu.memory_space<vmem>>, vector<1x1x128x128xf32>
    %442 = vector.shape_cast %441 : vector<1x1x128x128xf32> to vector<128x128xf32>
    %cst_225 = arith.constant dense<0.000000e+00> : vector<16x128xf32>
    %443 = tpu.matmul %45, %442, %cst_225 {dimension_numbers = #tpu.dot_dimension_numbers<[1], [0], [0], [1], [0, 0, 1, 1], [], []>} : vector<16x128xf32>, vector<128x128xf32>, vector<16x128xf32> -> vector<16x128xf32>
    %444 = arith.addf %440, %443 : vector<16x128xf32>
    %cst_226 = arith.constant 0.000000e+00 : f32
    %445 = vector.broadcast %cst_226 : f32 to vector<2x128xf32>
    %446 = vector.extract_strided_slice %45 {offsets = [2, 0], sizes = [14, 128], strides = [1, 1]} : vector<16x128xf32> to vector<14x128xf32>
    %447 = tpu.concatenate %446, %445 in 0 : vector<14x128xf32>, vector<2x128xf32> -> vector<16x128xf32>
    %c0_227 = arith.constant 0 : index
    %c22 = arith.constant 22 : index
    %c0_228 = arith.constant 0 : index
    %c0_229 = arith.constant 0 : index
    %448 = vector.load %arg5[%c0_227, %c22, %c0_228, %c0_229] : memref<1x24x128x128xf32, #tpu.memory_space<vmem>>, vector<1x1x128x128xf32>
    %449 = vector.shape_cast %448 : vector<1x1x128x128xf32> to vector<128x128xf32>
    %cst_230 = arith.constant dense<0.000000e+00> : vector<16x128xf32>
    %450 = tpu.matmul %447, %449, %cst_230 {dimension_numbers = #tpu.dot_dimension_numbers<[1], [0], [0], [1], [0, 0, 1, 1], [], []>} : vector<16x128xf32>, vector<128x128xf32>, vector<16x128xf32> -> vector<16x128xf32>
    %451 = arith.addf %444, %450 : vector<16x128xf32>
    %cst_231 = arith.constant 0.000000e+00 : f32
    %452 = vector.broadcast %cst_231 : f32 to vector<4x128xf32>
    %453 = vector.extract_strided_slice %45 {offsets = [4, 0], sizes = [12, 128], strides = [1, 1]} : vector<16x128xf32> to vector<12x128xf32>
    %454 = tpu.concatenate %453, %452 in 0 : vector<12x128xf32>, vector<4x128xf32> -> vector<16x128xf32>
    %c0_232 = arith.constant 0 : index
    %c23 = arith.constant 23 : index
    %c0_233 = arith.constant 0 : index
    %c0_234 = arith.constant 0 : index
    %455 = vector.load %arg5[%c0_232, %c23, %c0_233, %c0_234] : memref<1x24x128x128xf32, #tpu.memory_space<vmem>>, vector<1x1x128x128xf32>
    %456 = vector.shape_cast %455 : vector<1x1x128x128xf32> to vector<128x128xf32>
    %cst_235 = arith.constant dense<0.000000e+00> : vector<16x128xf32>
    %457 = tpu.matmul %454, %456, %cst_235 {dimension_numbers = #tpu.dot_dimension_numbers<[1], [0], [0], [1], [0, 0, 1, 1], [], []>} : vector<16x128xf32>, vector<128x128xf32>, vector<16x128xf32> -> vector<16x128xf32>
    %458 = arith.addf %451, %457 : vector<16x128xf32>
    %c0_236 = arith.constant 0 : index
    %c7_237 = arith.constant 7 : index
    %c0_238 = arith.constant 0 : index
    %459 = vector.load %arg1[%c0_236, %c7_237, %c0_238] : memref<1x8x128xf32, #tpu.memory_space<vmem>>, vector<1x1x128xf32>
    %460 = vector.shape_cast %459 : vector<1x1x128xf32> to vector<1x128xf32>
    %cst_239 = arith.constant dense<0.000000e+00> : vector<128xf32>
    %461 = vector.multi_reduction <add>, %458, %cst_239 [0] : vector<16x128xf32> to vector<128xf32>
    %462 = vector.shape_cast %461 : vector<128xf32> to vector<1x128xf32>
    %463 = arith.mulf %458, %458 : vector<16x128xf32>
    %cst_240 = arith.constant dense<0.000000e+00> : vector<128xf32>
    %464 = vector.multi_reduction <add>, %463, %cst_240 [0] : vector<16x128xf32> to vector<128xf32>
    %465 = vector.shape_cast %464 : vector<128xf32> to vector<1x128xf32>
    %466 = tpu.concatenate %462, %465 in 0 : vector<1x128xf32>, vector<1x128xf32> -> vector<2x128xf32>
    %c0_241 = arith.constant 0 : index
    %c0_242 = arith.constant 0 : index
    %467 = vector.load %arg3[%c0_241, %c0_242] : memref<128x128xf32, #tpu.memory_space<vmem>>, vector<128x128xf32>
    %cst_243 = arith.constant dense<0.000000e+00> : vector<2x128xf32>
    %468 = tpu.matmul %466, %467, %cst_243 {dimension_numbers = #tpu.dot_dimension_numbers<[1], [0], [0], [1], [0, 0, 1, 1], [], []>} : vector<2x128xf32>, vector<128x128xf32>, vector<2x128xf32> -> vector<2x128xf32>
    %469 = vector.extract_strided_slice %468 {offsets = [0, 0], sizes = [1, 128], strides = [1, 1]} : vector<2x128xf32> to vector<1x128xf32>
    %470 = vector.extract_strided_slice %468 {offsets = [1, 0], sizes = [1, 128], strides = [1, 1]} : vector<2x128xf32> to vector<1x128xf32>
    %471 = arith.mulf %469, %469 : vector<1x128xf32>
    %472 = arith.subf %470, %471 : vector<1x128xf32>
    %cst_244 = arith.constant 0.000000e+00 : f32
    %473 = vector.broadcast %cst_244 : f32 to vector<1x128xf32>
    %474 = arith.maximumf %472, %473 : vector<1x128xf32>
    %475 = vector.broadcast %469 : vector<1x128xf32> to vector<16x128xf32>
    %476 = arith.subf %458, %475 : vector<16x128xf32>
    %cst_245 = arith.constant 9.99999974E-6 : f32
    %477 = vector.broadcast %cst_245 : f32 to vector<1x128xf32>
    %478 = arith.addf %474, %477 : vector<1x128xf32>
    %479 = math.rsqrt %478 : vector<1x128xf32>
    %480 = arith.mulf %479, %460 : vector<1x128xf32>
    %481 = vector.broadcast %480 : vector<1x128xf32> to vector<16x128xf32>
    %482 = arith.mulf %476, %481 : vector<16x128xf32>
    %483 = arith.addf %427, %482 : vector<16x128xf32>
    %484 = arith.extui %5 : i1 to i32
    %c0_i32_246 = arith.constant 0 : i32
    %485 = arith.cmpi ne, %484, %c0_i32_246 : i32
    scf.if %485 {
      %c2_249 = arith.constant 2 : index
      %c0_250 = arith.constant 0 : index
      %c0_251 = arith.constant 0 : index
      %491 = vector.load %arg7[%c2_249, %c0_250, %c0_251] : memref<4x16x128xf32, #tpu.memory_space<vmem>>, vector<1x16x128xf32>
      %492 = vector.shape_cast %491 : vector<1x16x128xf32> to vector<16x128xf32>
      %493 = arith.addf %492, %483 : vector<16x128xf32>
      %c2_252 = arith.constant 2 : index
      %c0_253 = arith.constant 0 : index
      %c0_254 = arith.constant 0 : index
      %494 = vector.load %arg7[%c2_252, %c0_253, %c0_254] : memref<4x16x128xf32, #tpu.memory_space<vmem>>, vector<1x16x128xf32>
      %495 = vector.shape_cast %494 : vector<1x16x128xf32> to vector<16x128xf32>
      %496 = vector.shape_cast %493 : vector<16x128xf32> to vector<1x16x128xf32>
      tpu.vector_store %arg7[%c2_252, %c0_253, %c0_254], %496 {strides = array<i32>} : memref<4x16x128xf32, #tpu.memory_space<vmem>>, vector<1x16x128xf32>,
    } else {
    }
    %486 = arith.extui %10 : i1 to i32
    %c0_i32_247 = arith.constant 0 : i32
    %487 = arith.cmpi ne, %486, %c0_i32_247 : i32
    scf.if %487 {
      %c3_249 = arith.constant 3 : index
      %c0_250 = arith.constant 0 : index
      %c0_251 = arith.constant 0 : index
      %491 = vector.load %arg7[%c3_249, %c0_250, %c0_251] : memref<4x16x128xf32, #tpu.memory_space<vmem>>, vector<1x16x128xf32>
      %492 = vector.shape_cast %491 : vector<1x16x128xf32> to vector<16x128xf32>
      %493 = arith.addf %492, %483 : vector<16x128xf32>
      %c3_252 = arith.constant 3 : index
      %c0_253 = arith.constant 0 : index
      %c0_254 = arith.constant 0 : index
      %494 = vector.load %arg7[%c3_252, %c0_253, %c0_254] : memref<4x16x128xf32, #tpu.memory_space<vmem>>, vector<1x16x128xf32>
      %495 = vector.shape_cast %494 : vector<1x16x128xf32> to vector<16x128xf32>
      %496 = vector.shape_cast %493 : vector<16x128xf32> to vector<1x16x128xf32>
      tpu.vector_store %arg7[%c3_252, %c0_253, %c0_254], %496 {strides = array<i32>} : memref<4x16x128xf32, #tpu.memory_space<vmem>>, vector<1x16x128xf32>,
    } else {
    }
    %c4_i32 = arith.constant 4 : i32
    %488 = arith.cmpi eq, %arg0, %c4_i32 : i32
    %489 = arith.extui %488 : i1 to i32
    %c0_i32_248 = arith.constant 0 : i32
    %490 = arith.cmpi ne, %489, %c0_i32_248 : i32
    scf.if %490 {
      %c2_249 = arith.constant 2 : index
      %c0_250 = arith.constant 0 : index
      %c0_251 = arith.constant 0 : index
      %491 = vector.load %arg7[%c2_249, %c0_250, %c0_251] : memref<4x16x128xf32, #tpu.memory_space<vmem>>, vector<1x16x128xf32>
      %492 = vector.shape_cast %491 : vector<1x16x128xf32> to vector<16x128xf32>
      %c0_252 = arith.constant 0 : index
      %c0_253 = arith.constant 0 : index
      %c0_254 = arith.constant 0 : index
      %493 = vector.load %arg6[%c0_252, %c0_253, %c0_254] : memref<2x16x128xf32, #tpu.memory_space<vmem>>, vector<1x16x128xf32>
      %494 = vector.shape_cast %493 : vector<1x16x128xf32> to vector<16x128xf32>
      %495 = vector.shape_cast %492 : vector<16x128xf32> to vector<1x16x128xf32>
      tpu.vector_store %arg6[%c0_252, %c0_253, %c0_254], %495 {strides = array<i32>} : memref<2x16x128xf32, #tpu.memory_space<vmem>>, vector<1x16x128xf32>,
      %c3_255 = arith.constant 3 : index
      %c0_256 = arith.constant 0 : index
      %c0_257 = arith.constant 0 : index
      %496 = vector.load %arg7[%c3_255, %c0_256, %c0_257] : memref<4x16x128xf32, #tpu.memory_space<vmem>>, vector<1x16x128xf32>
      %497 = vector.shape_cast %496 : vector<1x16x128xf32> to vector<16x128xf32>
      %c1_258 = arith.constant 1 : index
      %c0_259 = arith.constant 0 : index
      %c0_260 = arith.constant 0 : index
      %498 = vector.load %arg6[%c1_258, %c0_259, %c0_260] : memref<2x16x128xf32, #tpu.memory_space<vmem>>, vector<1x16x128xf32>
      %499 = vector.shape_cast %498 : vector<1x16x128xf32> to vector<16x128xf32>
      %500 = vector.shape_cast %497 : vector<16x128xf32> to vector<1x16x128xf32>
      tpu.vector_store %arg6[%c1_258, %c0_259, %c0_260], %500 {strides = array<i32>} : memref<2x16x128xf32, #tpu.memory_space<vmem>>, vector<1x16x128xf32>,
    } else {
    }
    return
  }
  func.func @transform_0(%arg0: i32) -> (i32, i32, i32) {
    %c0_i32 = arith.constant 0 : i32
    %c0_i32_0 = arith.constant 0 : i32
    %c0_i32_1 = arith.constant 0 : i32
    return %arg0, %c0_i32, %c0_i32_0 : i32, i32, i32
  }
  func.func @transform_1(%arg0: i32) -> (i32, i32, i32) {
    %c0_i32 = arith.constant 0 : i32
    %c0_i32_0 = arith.constant 0 : i32
    %c0_i32_1 = arith.constant 0 : i32
    %c0_i32_2 = arith.constant 0 : i32
    return %c0_i32, %c0_i32_0, %c0_i32_1 : i32, i32, i32
  }
  func.func @transform_2(%arg0: i32) -> (i32, i32) {
    %c0_i32 = arith.constant 0 : i32
    %c0_i32_0 = arith.constant 0 : i32
    %c0_i32_1 = arith.constant 0 : i32
    return %c0_i32, %c0_i32_0 : i32, i32
  }
  func.func @transform_3(%arg0: i32) -> (i32, i32) {
    %c0_i32 = arith.constant 0 : i32
    %c0_i32_0 = arith.constant 0 : i32
    %c0_i32_1 = arith.constant 0 : i32
    return %c0_i32, %c0_i32_0 : i32, i32
  }
  func.func @transform_4(%arg0: i32) -> (i32, i32, i32, i32) {
    %c0_i32 = arith.constant 0 : i32
    %c0_i32_0 = arith.constant 0 : i32
    %c0_i32_1 = arith.constant 0 : i32
    %c0_i32_2 = arith.constant 0 : i32
    return %arg0, %c0_i32, %c0_i32_0, %c0_i32_1 : i32, i32, i32, i32
  }
  func.func @transform_5(%arg0: i32) -> (i32, i32, i32) {
    %c0_i32 = arith.constant 0 : i32
    %c0_i32_0 = arith.constant 0 : i32
    %c0_i32_1 = arith.constant 0 : i32
    %c0_i32_2 = arith.constant 0 : i32
    return %c0_i32, %c0_i32_0, %c0_i32_1 : i32, i32, i32
  }
}

</mosaic_0001>

<llo_original>
// kernel: cell_forward.2
$region0: #{cell_forward.2}
  #allocation0 [shape = 'u32[]', space=smem, size = 0x4, offset = 0x4, fixed_abs, tag = 'smem constant byte address 0x4 - core index']
  #allocation1 [shape = 'u32[144,128]{1,0:T(1,128)}', space=vmem, size = 0x12000, scoped, tag = 'internal scratch']
  %s0 = inlined_call_operand.vmem [shape: f32[2,16,256], index: 0, kind: input, shape index: {}]
  %s1 = inlined_call_operand.hbm [shape: f32[2,256,128], index: 1, kind: input, shape index: {}]
  %s2 = inlined_call_operand.hbm [shape: f32[128,128], index: 2, kind: input, shape index: {}]
  %s3 = inlined_call_operand.vmem [shape: f32[2,16,128], index: 3, kind: output, shape index: {}]
  %s4 = sld [smem:[#allocation0]]
  $region53: #{cell_forward.2} parent=0
    _
  %s6 = ssub.s32 1, %s4
  %s7 = scalar_select 0, %s6, %s4
  $region1: #{cell_forward.2} parent=0
    #allocation2 [shape = 'u8[262144]{0}', space=vmem, size = 0x40000, scoped, tag = 'input window, operand 1']
    #allocation3 [shape = 's32[2]{0}', space=sflag, size = 0x8, scoped, tag = 'scoped memory for cell_forward.2']
    #allocation4 [shape = 'u8[65536]{0}', space=vmem, size = 0x10000, scoped, tag = 'input window, operand 2, single buffered']
    #allocation5 [shape = 's32[1]{0}', space=sflag, size = 0x4, scoped, tag = 'scoped memory for cell_forward.2']
    %8 = vsyncpa [#allocation3], 0
    %s9 = scalar_lea.sflag [#allocation3], 1
    %10 = vsyncpa %s9, 0
    %11 = vsyncpa [#allocation5], 0
    loop: start=0, step=1, limit=4
    $region2: #{cell_forward.2} parent=1 // loop_pre_header
      _
    $region3: #{cell_forward.2} parent=1 // loop_header
      %s13 = sphi 0, %s17
      %p14 = scmp.ge.s32.totalorder %s13, 4
      %s23 = sphi 0, %s25
      %s26 = sphi 0, %s23
      %s27 = sphi 0, %s26
      %s43 = sphi 0, %s27
      %s49 = sphi 0, %s51
      %s52 = sphi 0, %s49
      %s53 = sphi 0, %s52
      %s69 = sphi 0, %s53
      %s73 = sphi 0, %s73
      %s75 = sphi 0, %s73
      %s76 = sphi 0, %s75
      %s90 = sphi 0, %s76
      %s96 = sphi 0, %s98
      %s99 = sphi 0, %s96
      %s100 = sphi 0, %s99
      %s116 = sphi 0, %s100
    $region4: #{cell_forward.2} parent=1 // loop_header_branch
      %16 = sbr.rel (%p14) target = $region8
    $region5: #{cell_forward.2} parent=1 // loop_body
      %s18 = ssub.s32 %s13, 1
      %s19 = ssub.s32 %s13, 2
      %s20 = sadd.s32 %s13, 1
      %s21 = ssub.s32 %s13, %s20
      %p22 = scmp.eq.s32.totalorder %s21, 0
      %s24 = sadd.s32 %s23, 1
      %s25 = scalar_select %p22, %s23, %s24
      %p28 = pneg %p22
      %p29 = scmp.eq.s32.totalorder %s13, 1
      %p30 = por %p28, %p29
      %p31 = scmp.ne.s32.totalorder %s23, %s26
      %p32 = scmp.eq.s32.totalorder %s13, 0
      %p33 = por %p31, %p32
      %p34 = scmp.ne.s32.totalorder %s23, %s26
      %p35 = scmp.eq.s32.totalorder %s18, 1
      %p36 = por %p34, %p35
      %p37 = scmp.ne.s32.totalorder %s26, %s27
      %p38 = scmp.eq.s32.totalorder %s18, 0
      %p39 = por %p37, %p38
      %p40 = scmp.ne.s32.totalorder %s26, %s27
      %p41 = scmp.eq.s32.totalorder %s19, 1
      %p42 = por %p40, %p41
      %p44 = scmp.ne.s32.totalorder %s27, %s43
      %p45 = scmp.eq.s32.totalorder %s19, 0
      %p46 = por %p44, %p45
      %s47 = ssub.s32 %s13, %s20
      %p48 = scmp.eq.s32.totalorder %s47, 0
      %s50 = sadd.s32 %s49, 1
      %s51 = scalar_select %p48, %s49, %s50
      %p54 = pneg %p48
      %p55 = scmp.eq.s32.totalorder %s13, 1
      %p56 = por %p54, %p55
      %p57 = scmp.ne.s32.totalorder %s49, %s52
      %p58 = scmp.eq.s32.totalorder %s13, 0
      %p59 = por %p57, %p58
      %p60 = scmp.ne.s32.totalorder %s49, %s52
      %p61 = scmp.eq.s32.totalorder %s18, 1
      %p62 = por %p60, %p61
      %p63 = scmp.ne.s32.totalorder %s52, %s53
      %p64 = scmp.eq.s32.totalorder %s18, 0
      %p65 = por %p63, %p64
      %p66 = scmp.ne.s32.totalorder %s52, %s53
      %p67 = scmp.eq.s32.totalorder %s19, 1
      %p68 = por %p66, %p67
      %p70 = scmp.ne.s32.totalorder %s53, %s69
      %p71 = scmp.eq.s32.totalorder %s19, 0
      %p72 = por %p70, %p71
      %s74 = sadd.s32 %s73, 1
      %p77 = scmp.eq.s32.totalorder %s13, 1
      %p78 = scmp.ne.s32.totalorder %s73, %s75
      %p79 = scmp.eq.s32.totalorder %s13, 0
      %p80 = por %p78, %p79
      %p81 = scmp.ne.s32.totalorder %s73, %s75
      %p82 = scmp.eq.s32.totalorder %s18, 1
      %p83 = por %p81, %p82
      %p84 = scmp.ne.s32.totalorder %s75, %s76
      %p85 = scmp.eq.s32.totalorder %s18, 0
      %p86 = por %p84, %p85
      %p87 = scmp.ne.s32.totalorder %s75, %s76
      %p88 = scmp.eq.s32.totalorder %s19, 1
      %p89 = por %p87, %p88
      %p91 = scmp.ne.s32.totalorder %s76, %s90
      %p92 = scmp.eq.s32.totalorder %s19, 0
      %p93 = por %p91, %p92
      %s94 = ssub.s32 %s13, %s20
      %p95 = scmp.eq.s32.totalorder %s94, 0
      %s97 = sadd.s32 %s96, 1
      %s98 = scalar_select %p95, %s96, %s97
      %p101 = pneg %p95
      %p102 = scmp.eq.s32.totalorder %s13, 1
      %p103 = por %p101, %p102
      %p104 = scmp.ne.s32.totalorder %s96, %s99
      %p105 = scmp.eq.s32.totalorder %s13, 0
      %p106 = por %p104, %p105
      %p107 = scmp.ne.s32.totalorder %s96, %s99
      %p108 = scmp.eq.s32.totalorder %s18, 1
      %p109 = por %p107, %p108
      %p110 = scmp.ne.s32.totalorder %s99, %s100
      %p111 = scmp.eq.s32.totalorder %s18, 0
      %p112 = por %p110, %p111
      %p113 = scmp.ne.s32.totalorder %s99, %s100
      %p114 = scmp.eq.s32.totalorder %s19, 1
      %p115 = por %p113, %p114
      %p117 = scmp.ne.s32.totalorder %s100, %s116
      %p118 = scmp.eq.s32.totalorder %s19, 0
      %p119 = por %p117, %p118
      %p120 = scmp.le.s32.totalorder 1, %s13
      %p121 = scmp.lt.s32.totalorder %s13, 3
      %p122 = pnand %p120, %p121
      %p123 = pneg %p122
      // Predicated region
      $region9: #{cell_forward.2} parent=5 // pred_check
        _
      $region10: #{cell_forward.2} parent=5 // pred_check_branch
        %125 = sbr.rel (%p122) target = $region12
      $region11: #{cell_forward.2} parent=5 // pred_region
        %s126 = ssub.s32 %s13, 1
        // Predicated region
        $region13: #{cell_forward.2} parent=11 // pred_check
          %p127 = pneg %p86
        $region14: #{cell_forward.2} parent=11 // pred_check_branch
          %129 = sbr.rel (%p127) target = $region16
        $region15: #{cell_forward.2} parent=11 // pred_region
          %s131 = ssub.s32 2048, 2048
          %132 = vsyncadd [#allocation5], %s131
          %s133 = sshll.u32 [#allocation4], 4
          %s134 = int_to_ptr.vmem [resolvable:$true] %s133
          %139 = dma.hbm_to_vmem [thread:$0]  %s2, 2048, %s134, [#allocation5], 128, 128, 8
        $region16: #{cell_forward.2} parent=11 // pred_fallthru
          _
      $region12: #{cell_forward.2} parent=5 // pred_fallthru
        _
      %p140 = scmp.lt.s32.totalorder %s13, 2
      // Predicated region
      $region17: #{cell_forward.2} parent=5 // pred_check
        %p141 = pneg %p140
      $region18: #{cell_forward.2} parent=5 // pred_check_branch
        %143 = sbr.rel (%p141) target = $region20
      $region19: #{cell_forward.2} parent=5 // pred_region
        // Predicated region
        $region21: #{cell_forward.2} parent=19 // pred_check
          %p144 = pneg %p33
        $region22: #{cell_forward.2} parent=19 // pred_check_branch
          %146 = sbr.rel (%p144) target = $region24
        $region23: #{cell_forward.2} parent=19 // pred_region
          %p147 = scmp.lt.s32.totalorder %s13, 1
          %s148 = scalar_select %p147, %s13, 1
          %s149 = smul.addr %s148, 4
          %s150 = smul.addr %s149, 8
          %s151 = scalar_lea.vmem %s0, %s150
        $region24: #{cell_forward.2} parent=19 // pred_fallthru
          _
        // Predicated region
        $region25: #{cell_forward.2} parent=19 // pred_check
          %p152 = pneg %p59
        $region26: #{cell_forward.2} parent=19 // pred_check_branch
          %154 = sbr.rel (%p152) target = $region28
        $region27: #{cell_forward.2} parent=19 // pred_region
          %s155 = sand.u32 %s49, 1
          %s156 = scalar_lea.sflag [#allocation3], %s155
          %s157 = sand.u32 %s49, 1
          %s158 = smul.addr %s157, 256
          %s159 = scalar_lea.vmem [#allocation2], %s158
          %s161 = ssub.s32 4096, 4096
          %162 = vsyncadd %s156, %s161
          %s163 = smul.addr %s13, 32
          %s164 = smul.addr %s163, 128
          %s165 = scalar_lea.hbm %s1, %s164
          %s166 = sshll.u32 %s159, 4
          %s167 = int_to_ptr.vmem [resolvable:$true] %s166
          %172 = dma.hbm_to_vmem [thread:$0]  %s165, 4096, %s167, %s156, 128, 128, 8
        $region28: #{cell_forward.2} parent=19 // pred_fallthru
          _
      $region20: #{cell_forward.2} parent=5 // pred_fallthru
        _
      %p173 = scmp.le.s32.totalorder 1, %s13
      %p174 = scmp.lt.s32.totalorder %s13, 3
      %p175 = pnand %p173, %p174
      %p176 = pneg %p175
      // Predicated region
      $region29: #{cell_forward.2} parent=5 // pred_check
        _
      $region30: #{cell_forward.2} parent=5 // pred_check_branch
        %178 = sbr.rel (%p175) target = $region32
      $region31: #{cell_forward.2} parent=5 // pred_region
        %s179 = ssub.s32 %s13, 1
        %s180 = sand.u32 %s52, 1
        %s181 = scalar_lea.sflag [#allocation3], %s180
        %s182 = sand.u32 %s52, 1
        %s183 = smul.addr %s182, 256
        %s184 = scalar_lea.vmem [#allocation2], %s183
        // Predicated region
        $region33: #{cell_forward.2} parent=31 // pred_check
          %p185 = pneg %p65
        $region34: #{cell_forward.2} parent=31 // pred_check_branch
          %187 = sbr.rel (%p185) target = $region36
        $region35: #{cell_forward.2} parent=31 // pred_region
          %188 = dma.done %s181, 4096
        $region36: #{cell_forward.2} parent=31 // pred_fallthru
          _
        // Predicated region
        $region37: #{cell_forward.2} parent=31 // pred_check
          %p189 = pneg %p86
        $region38: #{cell_forward.2} parent=31 // pred_check_branch
          %191 = sbr.rel (%p189) target = $region40
        $region39: #{cell_forward.2} parent=31 // pred_region
          %192 = dma.done [#allocation5], 2048
        $region40: #{cell_forward.2} parent=31 // pred_fallthru
          _
        %p193 = scmp.lt.s32.totalorder %s18, 1
        %s194 = scalar_select %p193, %s18, 1
        %s195 = smul.addr %s194, 4
        %s196 = smul.addr %s195, 8
        %s197 = scalar_lea.vmem %s0, %s196
        %p198 = pneg %p39
        %p199 = pneg %p36
        %s200 = sand.u32 %s52, 1
        %s201 = scalar_lea.sflag [#allocation3], %s200
        %s202 = sand.u32 %s52, 1
        %s203 = smul.addr %s202, 256
        %s204 = scalar_lea.vmem [#allocation2], %s203
        %p205 = pneg %p65
        %p206 = pneg %p62
        %p207 = pneg %p86
        %p208 = pneg %p83
        %p209 = pneg %p112
        %p210 = pneg %p109
        %p211 = scmp.lt.s32.totalorder %s18, 1
        %s212 = scalar_select %p211, %s18, 1
        %s213 = smul.addr %s212, 2
        %s214 = smul.addr %s213, 8
        %s215 = scalar_lea.vmem %s3, %s214
        %p216 = scmp.lt.s32.totalorder %s18, 1
        %s217 = scalar_select %p216, %s18, 1
        %s218 = smul.addr %s217, 4
        %s219 = smul.addr %s218, 8
        %s220 = scalar_lea.vmem %s0, %s219
        %p221 = scmp.lt.s32.totalorder %s18, 1
        %s222 = scalar_select %p221, %s18, 1
        %s223 = smul.addr %s222, 2
        %s224 = smul.addr %s223, 8
        %s225 = scalar_lea.vmem %s3, %s224
        %v226 = vld [vmem:[%s220] sm:$0xff]
        %v227 = vld [vmem:[%s220 + $0x8] sm:$0xff]
        %v228 = vld [vmem:[%s220 + $0x10] sm:$0xff]
        %v229 = vld [vmem:[%s220 + $0x18] sm:$0xff]
        %v230 = vmax.f32 %v226, 0.0
        %v231 = vmax.f32 %v227, 0.0
        %v232 = vmax.f32 %v228, 0.0
        %v233 = vmax.f32 %v229, 0.0
        %v234 = vld [vmem:[%s184] sm:$0xff]
        %v235 = vld [vmem:[%s184 + $0x8] sm:$0xff]
        %v236 = vld [vmem:[%s184 + $0x10] sm:$0xff]
        %v237 = vld [vmem:[%s184 + $0x18] sm:$0xff]
        %v238 = vld [vmem:[%s184 + $0x20] sm:$0xff]
        %v239 = vld [vmem:[%s184 + $0x28] sm:$0xff]
        %v240 = vld [vmem:[%s184 + $0x30] sm:$0xff]
        %v241 = vld [vmem:[%s184 + $0x38] sm:$0xff]
        %v242 = vld [vmem:[%s184 + $0x40] sm:$0xff]
        %v243 = vld [vmem:[%s184 + $0x48] sm:$0xff]
        %v244 = vld [vmem:[%s184 + $0x50] sm:$0xff]
        %v245 = vld [vmem:[%s184 + $0x58] sm:$0xff]
        %v246 = vld [vmem:[%s184 + $0x60] sm:$0xff]
        %v247 = vld [vmem:[%s184 + $0x68] sm:$0xff]
        %v248 = vld [vmem:[%s184 + $0x70] sm:$0xff]
        %v249 = vld [vmem:[%s184 + $0x78] sm:$0xff]
        %v250 = vld [vmem:[%s184 + $0x80] sm:$0xff]
        %v251 = vld [vmem:[%s184 + $0x88] sm:$0xff]
        %v252 = vld [vmem:[%s184 + $0x90] sm:$0xff]
        %v253 = vld [vmem:[%s184 + $0x98] sm:$0xff]
        %v254 = vld [vmem:[%s184 + $0xa0] sm:$0xff]
        %v255 = vld [vmem:[%s184 + $0xa8] sm:$0xff]
        %v256 = vld [vmem:[%s184 + $0xb0] sm:$0xff]
        %v257 = vld [vmem:[%s184 + $0xb8] sm:$0xff]
        %v258 = vld [vmem:[%s184 + $0xc0] sm:$0xff]
        %v259 = vld [vmem:[%s184 + $0xc8] sm:$0xff]
        %v260 = vld [vmem:[%s184 + $0xd0] sm:$0xff]
        %v261 = vld [vmem:[%s184 + $0xd8] sm:$0xff]
        %v262 = vld [vmem:[%s184 + $0xe0] sm:$0xff]
        %v263 = vld [vmem:[%s184 + $0xe8] sm:$0xff]
        %v264 = vld [vmem:[%s184 + $0xf0] sm:$0xff]
        %v265 = vld [vmem:[%s184 + $0xf8] sm:$0xff]
        %266 = vmatprep.subr.mxu0 0.0
        %267 = vmatpush1.msra.mxu0 %v234
        %268 = vmatprep.subr.mxu0 0.0
        %269 = vmatpush1.msra.mxu0 %v235
        %270 = vmatprep.subr.mxu0 0.0
        %271 = vmatpush1.msra.mxu0 %v236
        %272 = vmatprep.subr.mxu0 0.0
        %273 = vmatpush1.msra.mxu0 %v237
        %274 = vmatprep.subr.mxu0 0.0
        %275 = vmatpush1.msra.mxu0 %v238
        %276 = vmatprep.subr.mxu0 0.0
        %277 = vmatpush1.msra.mxu0 %v239
        %278 = vmatprep.subr.mxu0 0.0
        %279 = vmatpush1.msra.mxu0 %v240
        %280 = vmatprep.subr.mxu0 0.0
        %281 = vmatpush1.msra.mxu0 %v241
        %282 = vmatprep.subr.mxu0 0.0
        %283 = vmatpush1.msra.mxu0 %v242
        %284 = vmatprep.subr.mxu0 0.0
        %285 = vmatpush1.msra.mxu0 %v243
        %286 = vmatprep.subr.mxu0 0.0
        %287 = vmatpush1.msra.mxu0 %v244
        %288 = vmatprep.subr.mxu0 0.0
        %289 = vmatpush1.msra.mxu0 %v245
        %290 = vmatprep.subr.mxu0 0.0
        %291 = vmatpush1.msra.mxu0 %v246
        %292 = vmatprep.subr.mxu0 0.0
        %293 = vmatpush1.msra.mxu0 %v247
        %294 = vmatprep.subr.mxu0 0.0
        %295 = vmatpush1.msra.mxu0 %v248
        %296 = vmatprep.subr.mxu0 0.0
        %297 = vmatpush1.msra.mxu0 %v249
        %298 = vmatprep.subr.mxu0 0.0
        %299 = vmatpush1.msra.mxu0 %v250
        %300 = vmatprep.subr.mxu0 0.0
        %301 = vmatpush1.msra.mxu0 %v251
        %302 = vmatprep.subr.mxu0 0.0
        %303 = vmatpush1.msra.mxu0 %v252
        %304 = vmatprep.subr.mxu0 0.0
        %305 = vmatpush1.msra.mxu0 %v253
        %306 = vmatprep.subr.mxu0 0.0
        %307 = vmatpush1.msra.mxu0 %v254
        %308 = vmatprep.subr.mxu0 0.0
        %309 = vmatpush1.msra.mxu0 %v255
        %310 = vmatprep.subr.mxu0 0.0
        %311 = vmatpush1.msra.mxu0 %v256
        %312 = vmatprep.subr.mxu0 0.0
        %313 = vmatpush1.msra.mxu0 %v257
        %314 = vmatprep.subr.mxu0 0.0
        %315 = vmatpush1.msra.mxu0 %v258
        %316 = vmatprep.subr.mxu0 0.0
        %317 = vmatpush1.msra.mxu0 %v259
        %318 = vmatprep.subr.mxu0 0.0
        %319 = vmatpush1.msra.mxu0 %v260
        %320 = vmatprep.subr.mxu0 0.0
        %321 = vmatpush1.msra.mxu0 %v261
        %322 = vmatprep.subr.mxu0 0.0
        %323 = vmatpush1.msra.mxu0 %v262
        %324 = vmatprep.subr.mxu0 0.0
        %325 = vmatpush1.msra.mxu0 %v263
        %326 = vmatprep.subr.mxu0 0.0
        %327 = vmatpush1.msra.mxu0 %v264
        %328 = vmatprep.subr.mxu0 0.0
        %329 = vmatpush1.msra.mxu0 %v265
        %330 = vmatprep.mubr.f32.mxu0 %v231
        %331 = vmatmul.mubr.f32.gmra.mrb[0].mxu0 %v230
        %v332 = vpop.f32.mrb[0].mxu0
        %v333 = vadd.f32 0.0, %v332
        %v334 = vpop.f32.mrb[0].mxu0
        %335 = vmatprep.mubr.f32.mxu0 %v233
        %336 = vmatmul.mubr.f32.gmra.mrb[0].mxu0 %v232
        %v337 = vpop.f32.mrb[0].mxu0
        %v338 = vadd.f32 0.0, %v337
        %v339 = vpop.f32.mrb[0].mxu0
        %340 = vdwg.mxu0
        %v341 = vadd.f32 %v333, %v338
        %v342 = vrot.slane %v341, 4
        %v343 = vadd.f32 %v341, %v342
        %v344 = vrot.slane %v343, 2
        %v345 = vadd.f32 %v343, %v344
        %v346 = vrot.slane %v345, 1
        %v347 = vadd.f32 %v345, %v346
        %v348 = vmul.f32 %v333, %v333
        %v349 = vmul.f32 %v338, %v338
        %v350 = vadd.f32 %v348, %v349
        %v351 = vrot.slane %v350, 4
        %v352 = vadd.f32 %v350, %v351
        %v353 = vrot.slane %v352, 2
        %v354 = vadd.f32 %v352, %v353
        %v355 = vrot.slane %v354, 1
        %v356 = vadd.f32 %v354, %v355
        %vm357 = vcmask 1040384
        %v358 = vsel %vm357, %v347, %v356
        %v359 = vld [vmem:[#allocation4] sm:$0xff]
        %v360 = vld [vmem:[#allocation4 + $0x8] sm:$0xff]
        %v361 = vld [vmem:[#allocation4 + $0x10] sm:$0xff]
        %v362 = vld [vmem:[#allocation4 + $0x18] sm:$0xff]
        %v363 = vld [vmem:[#allocation4 + $0x20] sm:$0xff]
        %v364 = vld [vmem:[#allocation4 + $0x28] sm:$0xff]
        %v365 = vld [vmem:[#allocation4 + $0x30] sm:$0xff]
        %v366 = vld [vmem:[#allocation4 + $0x38] sm:$0xff]
        %v367 = vld [vmem:[#allocation4 + $0x40] sm:$0xff]
        %v368 = vld [vmem:[#allocation4 + $0x48] sm:$0xff]
        %v369 = vld [vmem:[#allocation4 + $0x50] sm:$0xff]
        %v370 = vld [vmem:[#allocation4 + $0x58] sm:$0xff]
        %v371 = vld [vmem:[#allocation4 + $0x60] sm:$0xff]
        %v372 = vld [vmem:[#allocation4 + $0x68] sm:$0xff]
        %v373 = vld [vmem:[#allocation4 + $0x70] sm:$0xff]
        %v374 = vld [vmem:[#allocation4 + $0x78] sm:$0xff]
        %375 = vmatprep.subr.mxu0 0.0
        %376 = vmatpush1.msra.mxu0 %v359
        %377 = vmatprep.subr.mxu0 0.0
        %378 = vmatpush1.msra.mxu0 %v360
        %379 = vmatprep.subr.mxu0 0.0
        %380 = vmatpush1.msra.mxu0 %v361
        %381 = vmatprep.subr.mxu0 0.0
        %382 = vmatpush1.msra.mxu0 %v362
        %383 = vmatprep.subr.mxu0 0.0
        %384 = vmatpush1.msra.mxu0 %v363
        %385 = vmatprep.subr.mxu0 0.0
        %386 = vmatpush1.msra.mxu0 %v364
        %387 = vmatprep.subr.mxu0 0.0
        %388 = vmatpush1.msra.mxu0 %v365
        %389 = vmatprep.subr.mxu0 0.0
        %390 = vmatpush1.msra.mxu0 %v366
        %391 = vmatprep.subr.mxu0 0.0
        %392 = vmatpush1.msra.mxu0 %v367
        %393 = vmatprep.subr.mxu0 0.0
        %394 = vmatpush1.msra.mxu0 %v368
        %395 = vmatprep.subr.mxu0 0.0
        %396 = vmatpush1.msra.mxu0 %v369
        %397 = vmatprep.subr.mxu0 0.0
        %398 = vmatpush1.msra.mxu0 %v370
        %399 = vmatprep.subr.mxu0 0.0
        %400 = vmatpush1.msra.mxu0 %v371
        %401 = vmatprep.subr.mxu0 0.0
        %402 = vmatpush1.msra.mxu0 %v372
        %403 = vmatprep.subr.mxu0 0.0
        %404 = vmatpush1.msra.mxu0 %v373
        %405 = vmatprep.subr.mxu0 0.0
        %406 = vmatpush1.msra.mxu0 %v374
        %407 = vmatprep.subr.mxu0 0.0
        %408 = vmatpush1.msra.mxu0 0.0
        %409 = vmatprep.subr.mxu0 0.0
        %410 = vmatpush1.msra.mxu0 0.0
        %411 = vmatprep.subr.mxu0 0.0
        %412 = vmatpush1.msra.mxu0 0.0
        %413 = vmatprep.subr.mxu0 0.0
        %414 = vmatpush1.msra.mxu0 0.0
        %415 = vmatprep.subr.mxu0 0.0
        %416 = vmatpush1.msra.mxu0 0.0
        %417 = vmatprep.subr.mxu0 0.0
        %418 = vmatpush1.msra.mxu0 0.0
        %419 = vmatprep.subr.mxu0 0.0
        %420 = vmatpush1.msra.mxu0 0.0
        %421 = vmatprep.subr.mxu0 0.0
        %422 = vmatpush1.msra.mxu0 0.0
        %423 = vmatprep.subr.mxu0 0.0
        %424 = vmatpush1.msra.mxu0 0.0
        %425 = vmatprep.subr.mxu0 0.0
        %426 = vmatpush1.msra.mxu0 0.0
        %427 = vmatprep.subr.mxu0 0.0
        %428 = vmatpush1.msra.mxu0 0.0
        %429 = vmatprep.subr.mxu0 0.0
        %430 = vmatpush1.msra.mxu0 0.0
        %431 = vmatprep.subr.mxu0 0.0
        %432 = vmatpush1.msra.mxu0 0.0
        %433 = vmatprep.subr.mxu0 0.0
        %434 = vmatpush1.msra.mxu0 0.0
        %435 = vmatprep.subr.mxu0 0.0
        %436 = vmatpush1.msra.mxu0 0.0
        %437 = vmatprep.subr.mxu0 0.0
        %438 = vmatpush1.msra.mxu0 0.0
        %439 = vmatprep.mubr.f32.mxu0 0.0
        %440 = vmatmul.mubr.f32.gmra.mrb[0].mxu0 %v358
        %v441 = vpop.f32.mrb[0].mxu0
        %v442 = vadd.f32 0.0, %v441
        %v443 = vpop.f32.mrb[0].mxu0
        %444 = vdwg.mxu0
        %v445 = vmul.f32 %v442, %v442
        %v447 = vrot.slane %v445, 7
        %v449 = vsub.f32 %v442, %v447
        %v450 = vmax.f32 %v449, 0.0
        %v451 = vlaneseq
        %v452 = vshrl.u32 %v451, 7
        %v453 = vsub.s32 0, %v452
        %v454 = vrot.slane %v442, %v453
        %v455 = vsub.f32 %v333, %v454
        %v456 = vsub.f32 %v338, %v454
        %v457 = vadd.f32 %v450, 1e-05
        %v458 = vrsqrt.pop %v457
        %v459 = vlaneseq
        %v460 = vshrl.u32 %v459, 7
        %v461 = vsub.s32 1, %v460
        %v462 = vrot.slane %v458, %v461
        %v463 = vmul.f32 %v455, %v462
        %v464 = vmul.f32 %v456, %v462
        %465 = vst [vmem:[%s225] sm:$0xff] %v463
        %466 = vst [vmem:[%s225 + $0x8] sm:$0xff] %v464
        %p467 = scmp.lt.s32.totalorder %s18, 1
        %s468 = scalar_select %p467, %s18, 1
        %s469 = smul.addr %s468, 2
        %s470 = smul.addr %s469, 8
        %s471 = scalar_lea.vmem %s3, %s470
        // Predicated region
        $region41: #{cell_forward.2} parent=31 // pred_check
          %p472 = pneg %p109
        $region42: #{cell_forward.2} parent=31 // pred_check_branch
          %474 = sbr.rel (%p472) target = $region44
        $region43: #{cell_forward.2} parent=31 // pred_region
          _
        $region44: #{cell_forward.2} parent=31 // pred_fallthru
          _
      $region32: #{cell_forward.2} parent=5 // pred_fallthru
        _
      %p475 = scmp.le.s32.totalorder 2, %s13
      // Predicated region
      $region45: #{cell_forward.2} parent=5 // pred_check
        %p476 = pneg %p475
      $region46: #{cell_forward.2} parent=5 // pred_check_branch
        %478 = sbr.rel (%p476) target = $region48
      $region47: #{cell_forward.2} parent=5 // pred_region
        %s479 = ssub.s32 %s13, 2
        // Predicated region
        $region49: #{cell_forward.2} parent=47 // pred_check
          %p480 = pneg %p115
        $region50: #{cell_forward.2} parent=47 // pred_check_branch
          %482 = sbr.rel (%p480) target = $region52
        $region51: #{cell_forward.2} parent=47 // pred_region
          %p483 = scmp.lt.s32.totalorder %s19, 1
          %s484 = scalar_select %p483, %s19, 1
          %s485 = smul.addr %s484, 2
          %s486 = smul.addr %s485, 8
          %s487 = scalar_lea.vmem %s3, %s486
        $region52: #{cell_forward.2} parent=47 // pred_fallthru
          _
      $region48: #{cell_forward.2} parent=5 // pred_fallthru
        _
    $region6: #{cell_forward.2} parent=1 // loop_footer
      %s17 = sadd.s32 1, %s13
    $region7: #{cell_forward.2} parent=1 // loop_footer_branch
      %12 = sbr.rel target = $region3
    $region8: #{cell_forward.2} parent=1 // loop_exit
      _
    %488 = vsyncpa [#allocation3], 1
    %s489 = scalar_lea.sflag [#allocation3], 1
    %490 = vsyncpa %s489, 1
    %491 = vsyncpa [#allocation5], 1

// kernel: cell_forward.3
$region0: #{cell_forward.3}
  #allocation0 [shape = 'u32[]', space=smem, size = 0x4, offset = 0x4, fixed_abs, tag = 'smem constant byte address 0x4 - core index']
  #allocation1 [shape = 'u32[144,128]{1,0:T(1,128)}', space=vmem, size = 0x12000, scoped, tag = 'internal scratch']
  #allocation2 [shape = 'f32[4,16,128]{2,1,0:T(8,128)}', space=vmem, size = 0x8000, scoped, tag = 'scratch operand']
  %s0 = inlined_call_operand.vmem [shape: f32[5,8,128], index: 0, kind: input, shape index: {}]
  %s1 = inlined_call_operand.vmem [shape: f32[2,16,128], index: 1, kind: input, shape index: {}]
  %s2 = inlined_call_operand.hbm [shape: f32[128,128], index: 2, kind: input, shape index: {}]
  %s3 = inlined_call_operand.hbm [shape: f32[16,128], index: 3, kind: input, shape index: {}]
  %s4 = inlined_call_operand.hbm [shape: f32[5,24,128,128], index: 4, kind: input, shape index: {}]
  %s5 = inlined_call_operand.vmem [shape: f32[2,16,128], index: 5, kind: output, shape index: {}]
  %s6 = sld [smem:[#allocation0]]
  $region81: #{cell_forward.3} parent=0
    _
  %s8 = ssub.s32 1, %s6
  %s9 = scalar_select 0, %s8, %s6
  $region1: #{cell_forward.3} parent=0
    #allocation3 [shape = 'u8[65536]{0}', space=vmem, size = 0x10000, scoped, tag = 'input window, operand 2, single buffered']
    #allocation4 [shape = 's32[2]{0}', space=sflag, size = 0x8, scoped, tag = 'scoped memory for cell_forward.3']
    #allocation5 [shape = 'u8[8192]{0}', space=vmem, size = 0x2000, scoped, tag = 'input window, operand 3, single buffered']
    #allocation6 [shape = 's32[1]{0}', space=sflag, size = 0x4, scoped, tag = 'scoped memory for cell_forward.3']
    #allocation7 [shape = 'u8[3145728]{0}', space=vmem, size = 0x300000, scoped, tag = 'input window, operand 4']
    %10 = vsyncpa [#allocation4], 0
    %11 = vsyncpa [#allocation6], 0
    loop: start=0, step=1, limit=7
    $region2: #{cell_forward.3} parent=1 // loop_pre_header
      _
    $region3: #{cell_forward.3} parent=1 // loop_header
      %s13 = sphi 0, %s17
      %p14 = scmp.ge.s32.totalorder %s13, 7
      %s23 = sphi 0, %s25
      %s26 = sphi 0, %s23
      %s27 = sphi 0, %s26
      %s43 = sphi 0, %s27
      %s47 = sphi 0, %s47
      %s49 = sphi 0, %s47
      %s50 = sphi 0, %s49
      %s64 = sphi 0, %s50
      %s68 = sphi 0, %s68
      %s70 = sphi 0, %s68
      %s71 = sphi 0, %s70
      %s85 = sphi 0, %s71
      %s89 = sphi 0, %s89
      %s91 = sphi 0, %s89
      %s92 = sphi 0, %s91
      %s106 = sphi 0, %s92
      %s112 = sphi 0, %s114
      %s115 = sphi 0, %s112
      %s116 = sphi 0, %s115
      %s132 = sphi 0, %s116
      %s136 = sphi 0, %s136
      %s138 = sphi 0, %s136
      %s139 = sphi 0, %s138
      %s153 = sphi 0, %s139
    $region4: #{cell_forward.3} parent=1 // loop_header_branch
      %16 = sbr.rel (%p14) target = $region8
    $region5: #{cell_forward.3} parent=1 // loop_body
      %s18 = ssub.s32 %s13, 1
      %s19 = ssub.s32 %s13, 2
      %s20 = sadd.s32 %s13, 1
      %s21 = ssub.s32 %s13, %s20
      %p22 = scmp.eq.s32.totalorder %s21, 0
      %s24 = sadd.s32 %s23, 1
      %s25 = scalar_select %p22, %s23, %s24
      %p28 = pneg %p22
      %p29 = scmp.eq.s32.totalorder %s13, 4
      %p30 = por %p28, %p29
      %p31 = scmp.ne.s32.totalorder %s23, %s26
      %p32 = scmp.eq.s32.totalorder %s13, 0
      %p33 = por %p31, %p32
      %p34 = scmp.ne.s32.totalorder %s23, %s26
      %p35 = scmp.eq.s32.totalorder %s18, 4
      %p36 = por %p34, %p35
      %p37 = scmp.ne.s32.totalorder %s26, %s27
      %p38 = scmp.eq.s32.totalorder %s18, 0
      %p39 = por %p37, %p38
      %p40 = scmp.ne.s32.totalorder %s26, %s27
      %p41 = scmp.eq.s32.totalorder %s19, 4
      %p42 = por %p40, %p41
      %p44 = scmp.ne.s32.totalorder %s27, %s43
      %p45 = scmp.eq.s32.totalorder %s19, 0
      %p46 = por %p44, %p45
      %s48 = sadd.s32 %s47, 1
      %p51 = scmp.eq.s32.totalorder %s13, 4
      %p52 = scmp.ne.s32.totalorder %s47, %s49
      %p53 = scmp.eq.s32.totalorder %s13, 0
      %p54 = por %p52, %p53
      %p55 = scmp.ne.s32.totalorder %s47, %s49
      %p56 = scmp.eq.s32.totalorder %s18, 4
      %p57 = por %p55, %p56
      %p58 = scmp.ne.s32.totalorder %s49, %s50
      %p59 = scmp.eq.s32.totalorder %s18, 0
      %p60 = por %p58, %p59
      %p61 = scmp.ne.s32.totalorder %s49, %s50
      %p62 = scmp.eq.s32.totalorder %s19, 4
      %p63 = por %p61, %p62
      %p65 = scmp.ne.s32.totalorder %s50, %s64
      %p66 = scmp.eq.s32.totalorder %s19, 0
      %p67 = por %p65, %p66
      %s69 = sadd.s32 %s68, 1
      %p72 = scmp.eq.s32.totalorder %s13, 4
      %p73 = scmp.ne.s32.totalorder %s68, %s70
      %p74 = scmp.eq.s32.totalorder %s13, 0
      %p75 = por %p73, %p74
      %p76 = scmp.ne.s32.totalorder %s68, %s70
      %p77 = scmp.eq.s32.totalorder %s18, 4
      %p78 = por %p76, %p77
      %p79 = scmp.ne.s32.totalorder %s70, %s71
      %p80 = scmp.eq.s32.totalorder %s18, 0
      %p81 = por %p79, %p80
      %p82 = scmp.ne.s32.totalorder %s70, %s71
      %p83 = scmp.eq.s32.totalorder %s19, 4
      %p84 = por %p82, %p83
      %p86 = scmp.ne.s32.totalorder %s71, %s85
      %p87 = scmp.eq.s32.totalorder %s19, 0
      %p88 = por %p86, %p87
      %s90 = sadd.s32 %s89, 1
      %p93 = scmp.eq.s32.totalorder %s13, 4
      %p94 = scmp.ne.s32.totalorder %s89, %s91
      %p95 = scmp.eq.s32.totalorder %s13, 0
      %p96 = por %p94, %p95
      %p97 = scmp.ne.s32.totalorder %s89, %s91
      %p98 = scmp.eq.s32.totalorder %s18, 4
      %p99 = por %p97, %p98
      %p100 = scmp.ne.s32.totalorder %s91, %s92
      %p101 = scmp.eq.s32.totalorder %s18, 0
      %p102 = por %p100, %p101
      %p103 = scmp.ne.s32.totalorder %s91, %s92
      %p104 = scmp.eq.s32.totalorder %s19, 4
      %p105 = por %p103, %p104
      %p107 = scmp.ne.s32.totalorder %s92, %s106
      %p108 = scmp.eq.s32.totalorder %s19, 0
      %p109 = por %p107, %p108
      %s110 = ssub.s32 %s13, %s20
      %p111 = scmp.eq.s32.totalorder %s110, 0
      %s113 = sadd.s32 %s112, 1
      %s114 = scalar_select %p111, %s112, %s113
      %p117 = pneg %p111
      %p118 = scmp.eq.s32.totalorder %s13, 4
      %p119 = por %p117, %p118
      %p120 = scmp.ne.s32.totalorder %s112, %s115
      %p121 = scmp.eq.s32.totalorder %s13, 0
      %p122 = por %p120, %p121
      %p123 = scmp.ne.s32.totalorder %s112, %s115
      %p124 = scmp.eq.s32.totalorder %s18, 4
      %p125 = por %p123, %p124
      %p126 = scmp.ne.s32.totalorder %s115, %s116
      %p127 = scmp.eq.s32.totalorder %s18, 0
      %p128 = por %p126, %p127
      %p129 = scmp.ne.s32.totalorder %s115, %s116
      %p130 = scmp.eq.s32.totalorder %s19, 4
      %p131 = por %p129, %p130
      %p133 = scmp.ne.s32.totalorder %s116, %s132
      %p134 = scmp.eq.s32.totalorder %s19, 0
      %p135 = por %p133, %p134
      %s137 = sadd.s32 %s136, 1
      %p140 = scmp.eq.s32.totalorder %s13, 4
      %p141 = scmp.ne.s32.totalorder %s136, %s138
      %p142 = scmp.eq.s32.totalorder %s13, 0
      %p143 = por %p141, %p142
      %p144 = scmp.ne.s32.totalorder %s136, %s138
      %p145 = scmp.eq.s32.totalorder %s18, 4
      %p146 = por %p144, %p145
      %p147 = scmp.ne.s32.totalorder %s138, %s139
      %p148 = scmp.eq.s32.totalorder %s18, 0
      %p149 = por %p147, %p148
      %p150 = scmp.ne.s32.totalorder %s138, %s139
      %p151 = scmp.eq.s32.totalorder %s19, 4
      %p152 = por %p150, %p151
      %p154 = scmp.ne.s32.totalorder %s139, %s153
      %p155 = scmp.eq.s32.totalorder %s19, 0
      %p156 = por %p154, %p155
      %p157 = scmp.le.s32.totalorder 1, %s13
      %p158 = scmp.lt.s32.totalorder %s13, 6
      %p159 = pnand %p157, %p158
      %p160 = pneg %p159
      // Predicated region
      $region9: #{cell_forward.3} parent=5 // pred_check
        _
      $region10: #{cell_forward.3} parent=5 // pred_check_branch
        %162 = sbr.rel (%p159) target = $region12
      $region11: #{cell_forward.3} parent=5 // pred_region
        %s163 = ssub.s32 %s13, 1
        // Predicated region
        $region13: #{cell_forward.3} parent=11 // pred_check
          %p164 = pneg %p60
        $region14: #{cell_forward.3} parent=11 // pred_check_branch
          %166 = sbr.rel (%p164) target = $region16
        $region15: #{cell_forward.3} parent=11 // pred_region
          _
        $region16: #{cell_forward.3} parent=11 // pred_fallthru
          _
        // Predicated region
        $region17: #{cell_forward.3} parent=11 // pred_check
          %p167 = pneg %p81
        $region18: #{cell_forward.3} parent=11 // pred_check_branch
          %169 = sbr.rel (%p167) target = $region20
        $region19: #{cell_forward.3} parent=11 // pred_region
          %s171 = ssub.s32 2048, 2048
          %172 = vsyncadd [#allocation4], %s171
          %s173 = sshll.u32 [#allocation3], 4
          %s174 = int_to_ptr.vmem [resolvable:$true] %s173
          %179 = dma.hbm_to_vmem [thread:$0]  %s2, 2048, %s174, [#allocation4], 128, 128, 8
        $region20: #{cell_forward.3} parent=11 // pred_fallthru
          _
        // Predicated region
        $region21: #{cell_forward.3} parent=11 // pred_check
          %p180 = pneg %p102
        $region22: #{cell_forward.3} parent=11 // pred_check_branch
          %182 = sbr.rel (%p180) target = $region24
        $region23: #{cell_forward.3} parent=11 // pred_region
          %s184 = ssub.s32 256, 256
          %185 = vsyncadd [#allocation6], %s184
          %s186 = sshll.u32 [#allocation5], 4
          %s187 = int_to_ptr.vmem [resolvable:$true] %s186
          %192 = dma.hbm_to_vmem [thread:$0]  %s3, 256, %s187, [#allocation6], 128, 128, 8
        $region24: #{cell_forward.3} parent=11 // pred_fallthru
          _
      $region12: #{cell_forward.3} parent=5 // pred_fallthru
        _
      %p193 = scmp.lt.s32.totalorder %s13, 5
      // Predicated region
      $region25: #{cell_forward.3} parent=5 // pred_check
        %p194 = pneg %p193
      $region26: #{cell_forward.3} parent=5 // pred_check_branch
        %196 = sbr.rel (%p194) target = $region28
      $region27: #{cell_forward.3} parent=5 // pred_region
        // Predicated region
        $region29: #{cell_forward.3} parent=27 // pred_check
          %p197 = pneg %p33
        $region30: #{cell_forward.3} parent=27 // pred_check_branch
          %199 = sbr.rel (%p197) target = $region32
        $region31: #{cell_forward.3} parent=27 // pred_region
          %p200 = scmp.lt.s32.totalorder %s13, 4
          %s201 = scalar_select %p200, %s13, 4
          %s202 = smul.addr %s201, 8
          %s203 = scalar_lea.vmem %s0, %s202
        $region32: #{cell_forward.3} parent=27 // pred_fallthru
          _
        // Predicated region
        $region33: #{cell_forward.3} parent=27 // pred_check
          %p204 = pneg %p122
        $region34: #{cell_forward.3} parent=27 // pred_check_branch
          %206 = sbr.rel (%p204) target = $region36
        $region35: #{cell_forward.3} parent=27 // pred_region
          %s207 = sand.u32 %s13, 1
          %s208 = scalar_lea.sflag [#allocation4], %s207
          %s209 = sand.u32 %s112, 1
          %s210 = smul.addr %s209, 3072
          %s211 = scalar_lea.vmem [#allocation7], %s210
          %s213 = ssub.s32 49152, 49152
          %214 = vsyncadd %s208, %s213
          %s215 = smul.addr %s13, 384
          %s216 = smul.addr %s215, 128
          %s217 = scalar_lea.hbm %s4, %s216
          %s218 = sshll.u32 %s211, 4
          %s219 = int_to_ptr.vmem [resolvable:$true] %s218
          %224 = dma.hbm_to_vmem [thread:$0]  %s217, 49152, %s219, %s208, 128, 128, 8
        $region36: #{cell_forward.3} parent=27 // pred_fallthru
          _
      $region28: #{cell_forward.3} parent=5 // pred_fallthru
        _
      %p225 = scmp.le.s32.totalorder 1, %s13
      %p226 = scmp.lt.s32.totalorder %s13, 6
      %p227 = pnand %p225, %p226
      %p228 = pneg %p227
      // Predicated region
      $region37: #{cell_forward.3} parent=5 // pred_check
        _
      $region38: #{cell_forward.3} parent=5 // pred_check_branch
        %230 = sbr.rel (%p227) target = $region40
      $region39: #{cell_forward.3} parent=5 // pred_region
        %s231 = ssub.s32 %s13, 1
        // Predicated region
        $region41: #{cell_forward.3} parent=39 // pred_check
          %p232 = pneg %p81
        $region42: #{cell_forward.3} parent=39 // pred_check_branch
          %234 = sbr.rel (%p232) target = $region44
        $region43: #{cell_forward.3} parent=39 // pred_region
          %235 = dma.done [#allocation4], 2048
        $region44: #{cell_forward.3} parent=39 // pred_fallthru
          _
        // Predicated region
        $region45: #{cell_forward.3} parent=39 // pred_check
          %p236 = pneg %p102
        $region46: #{cell_forward.3} parent=39 // pred_check_branch
          %238 = sbr.rel (%p236) target = $region48
        $region47: #{cell_forward.3} parent=39 // pred_region
          %239 = dma.done [#allocation6], 256
        $region48: #{cell_forward.3} parent=39 // pred_fallthru
          _
        %s240 = sand.u32 %s18, 1
        %s241 = scalar_lea.sflag [#allocation4], %s240
        %s242 = sand.u32 %s115, 1
        %s243 = smul.addr %s242, 3072
        %s244 = scalar_lea.vmem [#allocation7], %s243
        // Predicated region
        $region49: #{cell_forward.3} parent=39 // pred_check
          %p245 = pneg %p128
        $region50: #{cell_forward.3} parent=39 // pred_check_branch
          %247 = sbr.rel (%p245) target = $region52
        $region51: #{cell_forward.3} parent=39 // pred_region
          %248 = dma.done %s241, 49152
        $region52: #{cell_forward.3} parent=39 // pred_fallthru
          _
        %p249 = scmp.lt.s32.totalorder %s18, 4
        %s250 = scalar_select %p249, %s18, 4
        %s251 = smul.addr %s250, 8
        %s252 = scalar_lea.vmem %s0, %s251
        %p253 = pneg %p39
        %p254 = pneg %p36
        %p255 = pneg %p60
        %p256 = pneg %p57
        %p257 = pneg %p81
        %p258 = pneg %p78
        %p259 = pneg %p102
        %p260 = pneg %p99
        %s261 = sand.u32 %s18, 1
        %s262 = scalar_lea.sflag [#allocation4], %s261
        %s263 = sand.u32 %s115, 1
        %s264 = smul.addr %s263, 3072
        %s265 = scalar_lea.vmem [#allocation7], %s264
        %p266 = pneg %p128
        %p267 = pneg %p125
        %p268 = pneg %p149
        %p269 = pneg %p146
        %p270 = scmp.lt.s32.totalorder %s18, 4
        %s271 = scalar_select %p270, %s18, 4
        %s272 = smul.addr %s271, 8
        %s273 = scalar_lea.vmem %s0, %s272
        %p274 = scmp.eq.s32.totalorder %s18, 0
        // Predicated region
        $region53: #{cell_forward.3} parent=39 // pred_check
          %p275 = pneg %p274
        $region54: #{cell_forward.3} parent=39 // pred_check_branch
          %277 = sbr.rel (%p275) target = $region56
        $region55: #{cell_forward.3} parent=39 // pred_region
          %v278 = vld [vmem:[%s1] sm:$0xff]
          %v279 = vld [vmem:[%s1 + $0x8] sm:$0xff]
          %280 = vst [vmem:[#allocation2] sm:$0xff] %v278
          %281 = vst [vmem:[#allocation2 + $0x8] sm:$0xff] %v279
          %s282 = scalar_lea.vmem %s1, 16
          %v283 = vld [vmem:[%s282] sm:$0xff]
          %v284 = vld [vmem:[%s282 + $0x8] sm:$0xff]
          %s285 = scalar_lea.vmem [#allocation2], 16
          %286 = vst [vmem:[%s285] sm:$0xff] %v283
          %287 = vst [vmem:[%s285 + $0x8] sm:$0xff] %v284
          %s288 = scalar_lea.vmem [#allocation2], 32
          %289 = vst [vmem:[%s288] sm:$0xff] 0.0
          %290 = vst [vmem:[%s288 + $0x8] sm:$0xff] 0.0
          %s291 = scalar_lea.vmem [#allocation2], 48
          %292 = vst [vmem:[%s291] sm:$0xff] 0.0
          %293 = vst [vmem:[%s291 + $0x8] sm:$0xff] 0.0
        $region56: #{cell_forward.3} parent=39 // pred_fallthru
          _
        %p294 = scmp.ge.s32.totalorder %s18, 0
        %p295 = scmp.lt.s32.totalorder %s18, 2
        %p296 = pnand %p294, %p295
        %p297 = pneg %p296
        %s298 = scalar_select %p297, %s18, 0
        %p299 = scmp.ge.s32.totalorder %s18, 2
        %p300 = scmp.lt.s32.totalorder %s18, 5
        %p301 = pnand %p299, %p300
        %p302 = pneg %p301
        %s303 = ssub.s32 %s18, 2
        %s304 = scalar_select %p302, %s303, %s298
        %v305 = vld [vmem:[#allocation2] sm:$0xff]
        %v306 = vld [vmem:[#allocation2 + $0x8] sm:$0xff]
        %p307 = scmp.eq.s32.totalorder %s304, 1
        %s308 = scalar_lea.vmem [#allocation2], 16
        %v309 = vld [vmem:[%s308] sm:$0xff]
        %v310 = vld [vmem:[%s308 + $0x8] sm:$0xff]
        %s311 = scalar_select %p307, 1, 0
        %v312 = vstv %s311
        %vm313 = vcmp.eq.s32.totalorder %v312, 1
        %v314 = vsel %vm313, %v309, %v305
        %v315 = vsel %vm313, %v310, %v306
        %p316 = scmp.eq.s32.totalorder %s304, 2
        %s317 = scalar_lea.vmem [#allocation2], 32
        %v318 = vld [vmem:[%s317] sm:$0xff]
        %v319 = vld [vmem:[%s317 + $0x8] sm:$0xff]
        %s320 = scalar_select %p316, 1, 0
        %v321 = vstv %s320
        %vm322 = vcmp.eq.s32.totalorder %v321, 1
        %v323 = vsel %vm322, %v318, %v314
        %v324 = vsel %vm322, %v319, %v315
        %v325 = vlaneseq
        %v326 = vand.u32 %v325, 127
        %vm327 = vcmp.lt.s32.totalorder %v326, 0
        %v328 = vsub.s32 0, %v326
        %v329 = vsel %vm327, %v328, %v326
        %v330 = vshrl.u32 %v329, 4
        %v331 = vand.u32 %v329, 15
        %v332 = vsub.s32 0, %v331
        %v333 = vsel %vm327, %v332, %v331
        %vm334 = vcmp.ne.s32.totalorder %v333, 0
        %vm335 = vcmp.lt.s32.totalorder %v333, 0
        %vm336 = vmand %vm335, %vm334
        %v337 = vadd.s32 %v333, 16
        %v338 = vsel %vm336, %v337, %v333
        %vm339 = vcmp.ge.s32.totalorder %v338, 1
        %vm340 = vcmp.lt.s32.totalorder %v338, 15
        %v341 = vmax.f32 %v323, 0.0
        %v342 = vmax.f32 %v324, 0.0
        %v343 = vld [vmem:[%s273 + $0x3] sm:$0x1]
        %v344 = vlaneseq
        %v345 = vshrl.u32 %v344, 7
        %v346 = vsub.s32 0, %v345
        %v347 = vrot.slane %v343, %v346
        %v348 = vmul.f32 %v347, %v323
        %v349 = vmul.f32 %v347, %v324
        %vm352 = vcmask 1040384
        %v353 = vrot.slane %v323, 7
        %v354 = vrot.slane %v324, 7
        %v355 = vsel %vm352, %v353, %v354
        %v358 = vsel %vm352, -inf, %v353
        %v359 = vsel %vm352, 0.0, %v353
        %360 = vrot.lane.b32.xlu0 %v358, 1
        %v361 = vpop.permute.xlu0 %360
        %362 = vrot.lane.b32.xlu0 %v355, 1
        %v363 = vpop.permute.xlu0 %362
        %v364 = vsel %vm339, 1, 0
        %vm365 = vcmp.eq.s32.totalorder %v364, 1
        %v366 = vsel %vm365, %v361, -inf
        %v367 = vsel %vm365, %v363, -inf
        %368 = vrot.lane.b32.xlu0 %v359, 1
        %v369 = vpop.permute.xlu0 %368
        %v370 = vsel %vm365, %v369, 0.0
        %v371 = vsel %vm365, %v363, 0.0
        %v372 = vmax.f32 %v366, %v358
        %v373 = vmax.f32 %v367, %v355
        %v374 = vadd.f32 %v370, %v359
        %v375 = vadd.f32 %v371, %v355
        %376 = vrot.lane.b32.xlu0 %v358, 127
        %v377 = vpop.permute.xlu0 %376
        %378 = vrot.lane.b32.xlu0 %v355, 127
        %v379 = vpop.permute.xlu0 %378
        %v380 = vsel %vm340, 1, 0
        %vm381 = vcmp.eq.s32.totalorder %v380, 1
        %v382 = vsel %vm381, %v377, -inf
        %v383 = vsel %vm381, %v379, -inf
        %384 = vrot.lane.b32.xlu0 %v359, 127
        %v385 = vpop.permute.xlu0 %384
        %v386 = vsel %vm381, %v385, 0.0
        %v387 = vsel %vm381, %v379, 0.0
        %v388 = vmax.f32 %v372, %v382
        %v389 = vmax.f32 %v373, %v383
        %v390 = vadd.f32 %v374, %v386
        %v391 = vadd.f32 %v375, %v387
        %392 = vrot.lane.b32.xlu0 %v323, 1
        %v393 = vpop.permute.xlu0 %392
        %394 = vrot.lane.b32.xlu0 %v324, 1
        %v395 = vpop.permute.xlu0 %394
        %v396 = vsel %vm365, %v393, -inf
        %v397 = vsel %vm365, %v395, -inf
        %v398 = vsel %vm365, %v393, 0.0
        %v399 = vsel %vm365, %v395, 0.0
        %v400 = vmax.f32 %v388, %v396
        %v401 = vmax.f32 %v389, %v397
        %v402 = vadd.f32 %v390, %v398
        %v403 = vadd.f32 %v391, %v399
        %v404 = vmax.f32 %v400, %v323
        %v405 = vmax.f32 %v401, %v324
        %v406 = vadd.f32 %v402, %v323
        %v407 = vadd.f32 %v403, %v324
        %408 = vrot.lane.b32.xlu0 %v323, 127
        %v409 = vpop.permute.xlu0 %408
        %410 = vrot.lane.b32.xlu0 %v324, 127
        %v411 = vpop.permute.xlu0 %410
        %v412 = vsel %vm381, %v409, -inf
        %v413 = vsel %vm381, %v411, -inf
        %v414 = vsel %vm381, %v409, 0.0
        %v415 = vsel %vm381, %v411, 0.0
        %v416 = vmax.f32 %v404, %v412
        %v417 = vmax.f32 %v405, %v413
        %v418 = vadd.f32 %v406, %v414
        %v419 = vadd.f32 %v407, %v415
        %vm420 = vcmask 1046528
        %v421 = vrot.slane %v323, 1
        %v422 = vrot.slane %v324, 1
        %v423 = vsel %vm420, %v421, %v422
        %v426 = vsel %vm420, %v422, -inf
        %v427 = vsel %vm420, %v422, 0.0
        %428 = vrot.lane.b32.xlu0 %v423, 1
        %v429 = vpop.permute.xlu0 %428
        %430 = vrot.lane.b32.xlu0 %v426, 1
        %v431 = vpop.permute.xlu0 %430
        %v432 = vsel %vm365, %v429, -inf
        %v433 = vsel %vm365, %v431, -inf
        %434 = vrot.lane.b32.xlu0 %v427, 1
        %v435 = vpop.permute.xlu0 %434
        %v436 = vsel %vm365, %v429, 0.0
        %v437 = vsel %vm365, %v435, 0.0
        %v438 = vmax.f32 %v416, %v432
        %v439 = vmax.f32 %v417, %v433
        %v440 = vadd.f32 %v418, %v436
        %v441 = vadd.f32 %v419, %v437
        %v442 = vmax.f32 %v438, %v423
        %v443 = vmax.f32 %v439, %v426
        %v444 = vadd.f32 %v440, %v423
        %v445 = vadd.f32 %v441, %v427
        %446 = vrot.lane.b32.xlu0 %v423, 127
        %v447 = vpop.permute.xlu0 %446
        %448 = vrot.lane.b32.xlu0 %v426, 127
        %v449 = vpop.permute.xlu0 %448
        %v450 = vsel %vm381, %v447, -inf
        %v451 = vsel %vm381, %v449, -inf
        %452 = vrot.lane.b32.xlu0 %v427, 127
        %v453 = vpop.permute.xlu0 %452
        %v454 = vsel %vm381, %v447, 0.0
        %v455 = vsel %vm381, %v453, 0.0
        %v456 = vmax.f32 %v442, %v450
        %v457 = vmax.f32 %v443, %v451
        %v458 = vadd.f32 %v444, %v454
        %v459 = vadd.f32 %v445, %v455
        %v460 = vld [vmem:[%s273 + $0x1] sm:$0x1]
        %v461 = vadd.f32 %v456, %v457
        %v462 = vrot.slane %v461, 4
        %v463 = vadd.f32 %v461, %v462
        %v464 = vrot.slane %v463, 2
        %v465 = vadd.f32 %v463, %v464
        %v466 = vrot.slane %v465, 1
        %v467 = vadd.f32 %v465, %v466
        %v468 = vmul.f32 %v456, %v456
        %v469 = vmul.f32 %v457, %v457
        %v470 = vadd.f32 %v468, %v469
        %v471 = vrot.slane %v470, 4
        %v472 = vadd.f32 %v470, %v471
        %v473 = vrot.slane %v472, 2
        %v474 = vadd.f32 %v472, %v473
        %v475 = vrot.slane %v474, 1
        %v476 = vadd.f32 %v474, %v475
        %v477 = vsel %vm352, %v467, %v476
        %v478 = vld [vmem:[#allocation3] sm:$0xff]
        %v479 = vld [vmem:[#allocation3 + $0x8] sm:$0xff]
        %v480 = vld [vmem:[#allocation3 + $0x10] sm:$0xff]
        %v481 = vld [vmem:[#allocation3 + $0x18] sm:$0xff]
        %v482 = vld [vmem:[#allocation3 + $0x20] sm:$0xff]
        %v483 = vld [vmem:[#allocation3 + $0x28] sm:$0xff]
        %v484 = vld [vmem:[#allocation3 + $0x30] sm:$0xff]
        %v485 = vld [vmem:[#allocation3 + $0x38] sm:$0xff]
        %v486 = vld [vmem:[#allocation3 + $0x40] sm:$0xff]
        %v487 = vld [vmem:[#allocation3 + $0x48] sm:$0xff]
        %v488 = vld [vmem:[#allocation3 + $0x50] sm:$0xff]
        %v489 = vld [vmem:[#allocation3 + $0x58] sm:$0xff]
        %v490 = vld [vmem:[#allocation3 + $0x60] sm:$0xff]
        %v491 = vld [vmem:[#allocation3 + $0x68] sm:$0xff]
        %v492 = vld [vmem:[#allocation3 + $0x70] sm:$0xff]
        %v493 = vld [vmem:[#allocation3 + $0x78] sm:$0xff]
        %494 = vmatprep.subr.mxu0 0.0
        %495 = vmatpush1.msra.mxu0 %v478
        %496 = vmatprep.subr.mxu0 0.0
        %497 = vmatpush1.msra.mxu0 %v479
        %498 = vmatprep.subr.mxu0 0.0
        %499 = vmatpush1.msra.mxu0 %v480
        %500 = vmatprep.subr.mxu0 0.0
        %501 = vmatpush1.msra.mxu0 %v481
        %502 = vmatprep.subr.mxu0 0.0
        %503 = vmatpush1.msra.mxu0 %v482
        %504 = vmatprep.subr.mxu0 0.0
        %505 = vmatpush1.msra.mxu0 %v483
        %506 = vmatprep.subr.mxu0 0.0
        %507 = vmatpush1.msra.mxu0 %v484
        %508 = vmatprep.subr.mxu0 0.0
        %509 = vmatpush1.msra.mxu0 %v485
        %510 = vmatprep.subr.mxu0 0.0
        %511 = vmatpush1.msra.mxu0 %v486
        %512 = vmatprep.subr.mxu0 0.0
        %513 = vmatpush1.msra.mxu0 %v487
        %514 = vmatprep.subr.mxu0 0.0
        %515 = vmatpush1.msra.mxu0 %v488
        %516 = vmatprep.subr.mxu0 0.0
        %517 = vmatpush1.msra.mxu0 %v489
        %518 = vmatprep.subr.mxu0 0.0
        %519 = vmatpush1.msra.mxu0 %v490
        %520 = vmatprep.subr.mxu0 0.0
        %521 = vmatpush1.msra.mxu0 %v491
        %522 = vmatprep.subr.mxu0 0.0
        %523 = vmatpush1.msra.mxu0 %v492
        %524 = vmatprep.subr.mxu0 0.0
        %525 = vmatpush1.msra.mxu0 %v493
        %526 = vmatprep.subr.mxu0 0.0
        %527 = vmatpush1.msra.mxu0 0.0
        %528 = vmatprep.subr.mxu0 0.0
        %529 = vmatpush1.msra.mxu0 0.0
        %530 = vmatprep.subr.mxu0 0.0
        %531 = vmatpush1.msra.mxu0 0.0
        %532 = vmatprep.subr.mxu0 0.0
        %533 = vmatpush1.msra.mxu0 0.0
        %534 = vmatprep.subr.mxu0 0.0
        %535 = vmatpush1.msra.mxu0 0.0
        %536 = vmatprep.subr.mxu0 0.0
        %537 = vmatpush1.msra.mxu0 0.0
        %538 = vmatprep.subr.mxu0 0.0
        %539 = vmatpush1.msra.mxu0 0.0
        %540 = vmatprep.subr.mxu0 0.0
        %541 = vmatpush1.msra.mxu0 0.0
        %542 = vmatprep.subr.mxu0 0.0
        %543 = vmatpush1.msra.mxu0 0.0
        %544 = vmatprep.subr.mxu0 0.0
        %545 = vmatpush1.msra.mxu0 0.0
        %546 = vmatprep.subr.mxu0 0.0
        %547 = vmatpush1.msra.mxu0 0.0
        %548 = vmatprep.subr.mxu0 0.0
        %549 = vmatpush1.msra.mxu0 0.0
        %550 = vmatprep.subr.mxu0 0.0
        %551 = vmatpush1.msra.mxu0 0.0
        %552 = vmatprep.subr.mxu0 0.0
        %553 = vmatpush1.msra.mxu0 0.0
        %554 = vmatprep.subr.mxu0 0.0
        %555 = vmatpush1.msra.mxu0 0.0
        %556 = vmatprep.subr.mxu0 0.0
        %557 = vmatpush1.msra.mxu0 0.0
        %558 = vmatprep.mubr.f32.mxu0 0.0
        %559 = vmatmul.mubr.f32.gmra.mrb[0].mxu0 %v477
        %v560 = vpop.f32.mrb[0].mxu0
        %v561 = vadd.f32 0.0, %v560
        %v562 = vpop.f32.mrb[0].mxu0
        %563 = vdwg.mxu0
        %v564 = vmul.f32 %v561, %v561
        %v566 = vrot.slane %v564, 7
        %v568 = vsub.f32 %v561, %v566
        %v569 = vmax.f32 %v568, 0.0
        %v570 = vlaneseq
        %v571 = vshrl.u32 %v570, 7
        %v572 = vsub.s32 0, %v571
        %v573 = vrot.slane %v561, %v572
        %v574 = vsub.f32 %v456, %v573
        %v575 = vsub.f32 %v457, %v573
        %v576 = vadd.f32 %v569, 1e-05
        %v577 = vrsqrt.pop %v576
        %v579 = vrot.slane %v460, 7
        %v581 = vmul.f32 %v577, %v579
        %v582 = vlaneseq
        %v583 = vshrl.u32 %v582, 7
        %v584 = vsub.s32 1, %v583
        %v585 = vrot.slane %v581, %v584
        %v586 = vmul.f32 %v574, %v585
        %v587 = vmul.f32 %v575, %v585
        %v588 = vadd.f32 %v348, %v586
        %v589 = vadd.f32 %v349, %v587
        %v590 = vld [vmem:[#allocation5] sm:$0xff]
        %v591 = vld [vmem:[#allocation5 + $0x8] sm:$0xff]
        %v592 = vmul.f32 %v458, %v590
        %v593 = vmul.f32 %v459, %v591
        %v594 = vld [vmem:[%s273 + $0x2] sm:$0x1]
        %v595 = vadd.f32 %v592, %v593
        %v596 = vrot.slane %v595, 4
        %v597 = vadd.f32 %v595, %v596
        %v598 = vrot.slane %v597, 2
        %v599 = vadd.f32 %v597, %v598
        %v600 = vrot.slane %v599, 1
        %v601 = vadd.f32 %v599, %v600
        %v602 = vmul.f32 %v592, %v592
        %v603 = vmul.f32 %v593, %v593
        %v604 = vadd.f32 %v602, %v603
        %v605 = vrot.slane %v604, 4
        %v606 = vadd.f32 %v604, %v605
        %v607 = vrot.slane %v606, 2
        %v608 = vadd.f32 %v606, %v607
        %v609 = vrot.slane %v608, 1
        %v610 = vadd.f32 %v608, %v609
        %v611 = vsel %vm352, %v601, %v610
        %612 = vmatprep.subr.mxu0 0.0
        %613 = vmatpush1.msra.mxu0 %v478
        %614 = vmatprep.subr.mxu0 0.0
        %615 = vmatpush1.msra.mxu0 %v479
        %616 = vmatprep.subr.mxu0 0.0
        %617 = vmatpush1.msra.mxu0 %v480
        %618 = vmatprep.subr.mxu0 0.0
        %619 = vmatpush1.msra.mxu0 %v481
        %620 = vmatprep.subr.mxu0 0.0
        %621 = vmatpush1.msra.mxu0 %v482
        %622 = vmatprep.subr.mxu0 0.0
        %623 = vmatpush1.msra.mxu0 %v483
        %624 = vmatprep.subr.mxu0 0.0
        %625 = vmatpush1.msra.mxu0 %v484
        %626 = vmatprep.subr.mxu0 0.0
        %627 = vmatpush1.msra.mxu0 %v485
        %628 = vmatprep.subr.mxu0 0.0
        %629 = vmatpush1.msra.mxu0 %v486
        %630 = vmatprep.subr.mxu0 0.0
        %631 = vmatpush1.msra.mxu0 %v487
        %632 = vmatprep.subr.mxu0 0.0
        %633 = vmatpush1.msra.mxu0 %v488
        %634 = vmatprep.subr.mxu0 0.0
        %635 = vmatpush1.msra.mxu0 %v489
        %636 = vmatprep.subr.mxu0 0.0
        %637 = vmatpush1.msra.mxu0 %v490
        %638 = vmatprep.subr.mxu0 0.0
        %639 = vmatpush1.msra.mxu0 %v491
        %640 = vmatprep.subr.mxu0 0.0
        %641 = vmatpush1.msra.mxu0 %v492
        %642 = vmatprep.subr.mxu0 0.0
        %643 = vmatpush1.msra.mxu0 %v493
        %644 = vmatprep.subr.mxu0 0.0
        %645 = vmatpush1.msra.mxu0 0.0
        %646 = vmatprep.subr.mxu0 0.0
        %647 = vmatpush1.msra.mxu0 0.0
        %648 = vmatprep.subr.mxu0 0.0
        %649 = vmatpush1.msra.mxu0 0.0
        %650 = vmatprep.subr.mxu0 0.0
        %651 = vmatpush1.msra.mxu0 0.0
        %652 = vmatprep.subr.mxu0 0.0
        %653 = vmatpush1.msra.mxu0 0.0
        %654 = vmatprep.subr.mxu0 0.0
        %655 = vmatpush1.msra.mxu0 0.0
        %656 = vmatprep.subr.mxu0 0.0
        %657 = vmatpush1.msra.mxu0 0.0
        %658 = vmatprep.subr.mxu0 0.0
        %659 = vmatpush1.msra.mxu0 0.0
        %660 = vmatprep.subr.mxu0 0.0
        %661 = vmatpush1.msra.mxu0 0.0
        %662 = vmatprep.subr.mxu0 0.0
        %663 = vmatpush1.msra.mxu0 0.0
        %664 = vmatprep.subr.mxu0 0.0
        %665 = vmatpush1.msra.mxu0 0.0
        %666 = vmatprep.subr.mxu0 0.0
        %667 = vmatpush1.msra.mxu0 0.0
        %668 = vmatprep.subr.mxu0 0.0
        %669 = vmatpush1.msra.mxu0 0.0
        %670 = vmatprep.subr.mxu0 0.0
        %671 = vmatpush1.msra.mxu0 0.0
        %672 = vmatprep.subr.mxu0 0.0
        %673 = vmatpush1.msra.mxu0 0.0
        %674 = vmatprep.subr.mxu0 0.0
        %675 = vmatpush1.msra.mxu0 0.0
        %676 = vmatprep.mubr.f32.mxu0 0.0
        %677 = vmatmul.mubr.f32.gmra.mrb[0].mxu0 %v611
        %v678 = vpop.f32.mrb[0].mxu0
        %v679 = vadd.f32 0.0, %v678
        %v680 = vpop.f32.mrb[0].mxu0
        %681 = vdwg.mxu0
        %v682 = vmul.f32 %v679, %v679
        %v684 = vrot.slane %v682, 7
        %v686 = vsub.f32 %v679, %v684
        %v687 = vmax.f32 %v686, 0.0
        %v688 = vlaneseq
        %v689 = vshrl.u32 %v688, 7
        %v690 = vsub.s32 0, %v689
        %v691 = vrot.slane %v679, %v690
        %v692 = vsub.f32 %v592, %v691
        %v693 = vsub.f32 %v593, %v691
        %v694 = vadd.f32 %v687, 1e-05
        %v695 = vrsqrt.pop %v694
        %v697 = vrot.slane %v594, 7
        %v699 = vmul.f32 %v695, %v697
        %v700 = vlaneseq
        %v701 = vshrl.u32 %v700, 7
        %v702 = vsub.s32 1, %v701
        %v703 = vrot.slane %v699, %v702
        %v704 = vmul.f32 %v692, %v703
        %v705 = vmul.f32 %v693, %v703
        %v706 = vadd.f32 %v588, %v704
        %v707 = vadd.f32 %v589, %v705
        %v710 = vrot.slane %v341, 7
        %v711 = vrot.slane %v342, 7
        %v712 = vsel %vm352, %v710, %v711
        %v715 = vsel %vm352, 0.0, %v710
        %v716 = vld [vmem:[%s244] sm:$0xff]
        %v717 = vld [vmem:[%s244 + $0x8] sm:$0xff]
        %v718 = vld [vmem:[%s244 + $0x10] sm:$0xff]
        %v719 = vld [vmem:[%s244 + $0x18] sm:$0xff]
        %v720 = vld [vmem:[%s244 + $0x20] sm:$0xff]
        %v721 = vld [vmem:[%s244 + $0x28] sm:$0xff]
        %v722 = vld [vmem:[%s244 + $0x30] sm:$0xff]
        %v723 = vld [vmem:[%s244 + $0x38] sm:$0xff]
        %v724 = vld [vmem:[%s244 + $0x40] sm:$0xff]
        %v725 = vld [vmem:[%s244 + $0x48] sm:$0xff]
        %v726 = vld [vmem:[%s244 + $0x50] sm:$0xff]
        %v727 = vld [vmem:[%s244 + $0x58] sm:$0xff]
        %v728 = vld [vmem:[%s244 + $0x60] sm:$0xff]
        %v729 = vld [vmem:[%s244 + $0x68] sm:$0xff]
        %v730 = vld [vmem:[%s244 + $0x70] sm:$0xff]
        %v731 = vld [vmem:[%s244 + $0x78] sm:$0xff]
        %s732 = scalar_lea.vmem %s244, 128 [#allocation7]
        %v733 = vld [vmem:[%s732] sm:$0xff]
        %v734 = vld [vmem:[%s732 + $0x8] sm:$0xff]
        %v735 = vld [vmem:[%s732 + $0x10] sm:$0xff]
        %v736 = vld [vmem:[%s732 + $0x18] sm:$0xff]
        %v737 = vld [vmem:[%s732 + $0x20] sm:$0xff]
        %v738 = vld [vmem:[%s732 + $0x28] sm:$0xff]
        %v739 = vld [vmem:[%s732 + $0x30] sm:$0xff]
        %v740 = vld [vmem:[%s732 + $0x38] sm:$0xff]
        %v741 = vld [vmem:[%s732 + $0x40] sm:$0xff]
        %v742 = vld [vmem:[%s732 + $0x48] sm:$0xff]
        %v743 = vld [vmem:[%s732 + $0x50] sm:$0xff]
        %v744 = vld [vmem:[%s732 + $0x58] sm:$0xff]
        %v745 = vld [vmem:[%s732 + $0x60] sm:$0xff]
        %v746 = vld [vmem:[%s732 + $0x68] sm:$0xff]
        %v747 = vld [vmem:[%s732 + $0x70] sm:$0xff]
        %v748 = vld [vmem:[%s732 + $0x78] sm:$0xff]
        %749 = vmatprep.subr.mxu0 0.0
        %750 = vmatpush1.msra.mxu0 %v733
        %751 = vmatprep.subr.mxu0 0.0
        %752 = vmatpush1.msra.mxu0 %v734
        %753 = vmatprep.subr.mxu0 0.0
        %754 = vmatpush1.msra.mxu0 %v735
        %755 = vmatprep.subr.mxu0 0.0
        %756 = vmatpush1.msra.mxu0 %v736
        %757 = vmatprep.subr.mxu0 0.0
        %758 = vmatpush1.msra.mxu0 %v737
        %759 = vmatprep.subr.mxu0 0.0
        %760 = vmatpush1.msra.mxu0 %v738
        %761 = vmatprep.subr.mxu0 0.0
        %762 = vmatpush1.msra.mxu0 %v739
        %763 = vmatprep.subr.mxu0 0.0
        %764 = vmatpush1.msra.mxu0 %v740
        %765 = vmatprep.subr.mxu0 0.0
        %766 = vmatpush1.msra.mxu0 %v741
        %767 = vmatprep.subr.mxu0 0.0
        %768 = vmatpush1.msra.mxu0 %v742
        %769 = vmatprep.subr.mxu0 0.0
        %770 = vmatpush1.msra.mxu0 %v743
        %771 = vmatprep.subr.mxu0 0.0
        %772 = vmatpush1.msra.mxu0 %v744
        %773 = vmatprep.subr.mxu0 0.0
        %774 = vmatpush1.msra.mxu0 %v745
        %775 = vmatprep.subr.mxu0 0.0
        %776 = vmatpush1.msra.mxu0 %v746
        %777 = vmatprep.subr.mxu0 0.0
        %778 = vmatpush1.msra.mxu0 %v747
        %779 = vmatprep.subr.mxu0 0.0
        %780 = vmatpush1.msra.mxu0 %v748
        %781 = vmatprep.subr.mxu0 0.0
        %782 = vmatpush1.msra.mxu0 0.0
        %783 = vmatprep.subr.mxu0 0.0
        %784 = vmatpush1.msra.mxu0 0.0
        %785 = vmatprep.subr.mxu0 0.0
        %786 = vmatpush1.msra.mxu0 0.0
        %787 = vmatprep.subr.mxu0 0.0
        %788 = vmatpush1.msra.mxu0 0.0
        %789 = vmatprep.subr.mxu0 0.0
        %790 = vmatpush1.msra.mxu0 0.0
        %791 = vmatprep.subr.mxu0 0.0
        %792 = vmatpush1.msra.mxu0 0.0
        %793 = vmatprep.subr.mxu0 0.0
        %794 = vmatpush1.msra.mxu0 0.0
        %795 = vmatprep.subr.mxu0 0.0
        %796 = vmatpush1.msra.mxu0 0.0
        %797 = vmatprep.subr.mxu0 0.0
        %798 = vmatpush1.msra.mxu0 0.0
        %799 = vmatprep.subr.mxu0 0.0
        %800 = vmatpush1.msra.mxu0 0.0
        %801 = vmatprep.subr.mxu0 0.0
        %802 = vmatpush1.msra.mxu0 0.0
        %803 = vmatprep.subr.mxu0 0.0
        %804 = vmatpush1.msra.mxu0 0.0
        %805 = vmatprep.subr.mxu0 0.0
        %806 = vmatpush1.msra.mxu0 0.0
        %807 = vmatprep.subr.mxu0 0.0
        %808 = vmatpush1.msra.mxu0 0.0
        %809 = vmatprep.subr.mxu0 0.0
        %810 = vmatpush1.msra.mxu0 0.0
        %811 = vmatprep.subr.mxu0 0.0
        %812 = vmatpush1.msra.mxu0 0.0
        %813 = vmatprep.mubr.f32.mxu0 0.0
        %814 = vmatmul.mubr.f32.gmra.mrb[0].mxu0 %v341
        %v815 = vpop.f32.mrb[0].mxu0
        %v816 = vadd.f32 0.0, %v815
        %v817 = vpop.f32.mrb[0].mxu0
        %818 = vmatprep.mubr.f32.mxu0 0.0
        %819 = vmatmul.mubr.f32.gmra.mrb[0].mxu0 %v342
        %v820 = vpop.f32.mrb[0].mxu0
        %v821 = vadd.f32 0.0, %v820
        %v822 = vpop.f32.mrb[0].mxu0
        %823 = vdwg.mxu0
        %824 = vmatprep.subr.mxu0 0.0
        %825 = vmatpush1.msra.mxu0 %v716
        %826 = vmatprep.subr.mxu0 0.0
        %827 = vmatpush1.msra.mxu0 %v717
        %828 = vmatprep.subr.mxu0 0.0
        %829 = vmatpush1.msra.mxu0 %v718
        %830 = vmatprep.subr.mxu0 0.0
        %831 = vmatpush1.msra.mxu0 %v719
        %832 = vmatprep.subr.mxu0 0.0
        %833 = vmatpush1.msra.mxu0 %v720
        %834 = vmatprep.subr.mxu0 0.0
        %835 = vmatpush1.msra.mxu0 %v721
        %836 = vmatprep.subr.mxu0 0.0
        %837 = vmatpush1.msra.mxu0 %v722
        %838 = vmatprep.subr.mxu0 0.0
        %839 = vmatpush1.msra.mxu0 %v723
        %840 = vmatprep.subr.mxu0 0.0
        %841 = vmatpush1.msra.mxu0 %v724
        %842 = vmatprep.subr.mxu0 0.0
        %843 = vmatpush1.msra.mxu0 %v725
        %844 = vmatprep.subr.mxu0 0.0
        %845 = vmatpush1.msra.mxu0 %v726
        %846 = vmatprep.subr.mxu0 0.0
        %847 = vmatpush1.msra.mxu0 %v727
        %848 = vmatprep.subr.mxu0 0.0
        %849 = vmatpush1.msra.mxu0 %v728
        %850 = vmatprep.subr.mxu0 0.0
        %851 = vmatpush1.msra.mxu0 %v729
        %852 = vmatprep.subr.mxu0 0.0
        %853 = vmatpush1.msra.mxu0 %v730
        %854 = vmatprep.subr.mxu0 0.0
        %855 = vmatpush1.msra.mxu0 %v731
        %856 = vmatprep.subr.mxu0 0.0
        %857 = vmatpush1.msra.mxu0 0.0
        %858 = vmatprep.subr.mxu0 0.0
        %859 = vmatpush1.msra.mxu0 0.0
        %860 = vmatprep.subr.mxu0 0.0
        %861 = vmatpush1.msra.mxu0 0.0
        %862 = vmatprep.subr.mxu0 0.0
        %863 = vmatpush1.msra.mxu0 0.0
        %864 = vmatprep.subr.mxu0 0.0
        %865 = vmatpush1.msra.mxu0 0.0
        %866 = vmatprep.subr.mxu0 0.0
        %867 = vmatpush1.msra.mxu0 0.0
        %868 = vmatprep.subr.mxu0 0.0
        %869 = vmatpush1.msra.mxu0 0.0
        %870 = vmatprep.subr.mxu0 0.0
        %871 = vmatpush1.msra.mxu0 0.0
        %872 = vmatprep.subr.mxu0 0.0
        %873 = vmatpush1.msra.mxu0 0.0
        %874 = vmatprep.subr.mxu0 0.0
        %875 = vmatpush1.msra.mxu0 0.0
        %876 = vmatprep.subr.mxu0 0.0
        %877 = vmatpush1.msra.mxu0 0.0
        %878 = vmatprep.subr.mxu0 0.0
        %879 = vmatpush1.msra.mxu0 0.0
        %880 = vmatprep.subr.mxu0 0.0
        %881 = vmatpush1.msra.mxu0 0.0
        %882 = vmatprep.subr.mxu0 0.0
        %883 = vmatpush1.msra.mxu0 0.0
        %884 = vmatprep.subr.mxu0 0.0
        %885 = vmatpush1.msra.mxu0 0.0
        %886 = vmatprep.subr.mxu0 0.0
        %887 = vmatpush1.msra.mxu0 0.0
        %888 = vmatprep.mubr.f32.mxu0 0.0
        %889 = vmatmul.mubr.f32.gmra.mrb[0].mxu0 %v715
        %v890 = vpop.f32.mrb[0].mxu0
        %v891 = vadd.f32 %v816, %v890
        %v892 = vpop.f32.mrb[0].mxu0
        %893 = vmatprep.mubr.f32.mxu0 0.0
        %894 = vmatmul.mubr.f32.gmra.mrb[0].mxu0 %v712
        %v895 = vpop.f32.mrb[0].mxu0
        %v896 = vadd.f32 %v821, %v895
        %v897 = vpop.f32.mrb[0].mxu0
        %898 = vdwg.mxu0
        %v899 = vrot.slane %v341, 1
        %v900 = vrot.slane %v342, 1
        %v901 = vsel %vm420, %v899, %v900
        %v904 = vsel %vm420, %v900, 0.0
        %s905 = scalar_lea.vmem %s244, 256 [#allocation7]
        %v906 = vld [vmem:[%s905] sm:$0xff]
        %v907 = vld [vmem:[%s905 + $0x8] sm:$0xff]
        %v908 = vld [vmem:[%s905 + $0x10] sm:$0xff]
        %v909 = vld [vmem:[%s905 + $0x18] sm:$0xff]
        %v910 = vld [vmem:[%s905 + $0x20] sm:$0xff]
        %v911 = vld [vmem:[%s905 + $0x28] sm:$0xff]
        %v912 = vld [vmem:[%s905 + $0x30] sm:$0xff]
        %v913 = vld [vmem:[%s905 + $0x38] sm:$0xff]
        %v914 = vld [vmem:[%s905 + $0x40] sm:$0xff]
        %v915 = vld [vmem:[%s905 + $0x48] sm:$0xff]
        %v916 = vld [vmem:[%s905 + $0x50] sm:$0xff]
        %v917 = vld [vmem:[%s905 + $0x58] sm:$0xff]
        %v918 = vld [vmem:[%s905 + $0x60] sm:$0xff]
        %v919 = vld [vmem:[%s905 + $0x68] sm:$0xff]
        %v920 = vld [vmem:[%s905 + $0x70] sm:$0xff]
        %v921 = vld [vmem:[%s905 + $0x78] sm:$0xff]
        %922 = vmatprep.subr.mxu0 0.0
        %923 = vmatpush1.msra.mxu0 %v906
        %924 = vmatprep.subr.mxu0 0.0
        %925 = vmatpush1.msra.mxu0 %v907
        %926 = vmatprep.subr.mxu0 0.0
        %927 = vmatpush1.msra.mxu0 %v908
        %928 = vmatprep.subr.mxu0 0.0
        %929 = vmatpush1.msra.mxu0 %v909
        %930 = vmatprep.subr.mxu0 0.0
        %931 = vmatpush1.msra.mxu0 %v910
        %932 = vmatprep.subr.mxu0 0.0
        %933 = vmatpush1.msra.mxu0 %v911
        %934 = vmatprep.subr.mxu0 0.0
        %935 = vmatpush1.msra.mxu0 %v912
        %936 = vmatprep.subr.mxu0 0.0
        %937 = vmatpush1.msra.mxu0 %v913
        %938 = vmatprep.subr.mxu0 0.0
        %939 = vmatpush1.msra.mxu0 %v914
        %940 = vmatprep.subr.mxu0 0.0
        %941 = vmatpush1.msra.mxu0 %v915
        %942 = vmatprep.subr.mxu0 0.0
        %943 = vmatpush1.msra.mxu0 %v916
        %944 = vmatprep.subr.mxu0 0.0
        %945 = vmatpush1.msra.mxu0 %v917
        %946 = vmatprep.subr.mxu0 0.0
        %947 = vmatpush1.msra.mxu0 %v918
        %948 = vmatprep.subr.mxu0 0.0
        %949 = vmatpush1.msra.mxu0 %v919
        %950 = vmatprep.subr.mxu0 0.0
        %951 = vmatpush1.msra.mxu0 %v920
        %952 = vmatprep.subr.mxu0 0.0
        %953 = vmatpush1.msra.mxu0 %v921
        %954 = vmatprep.subr.mxu0 0.0
        %955 = vmatpush1.msra.mxu0 0.0
        %956 = vmatprep.subr.mxu0 0.0
        %957 = vmatpush1.msra.mxu0 0.0
        %958 = vmatprep.subr.mxu0 0.0
        %959 = vmatpush1.msra.mxu0 0.0
        %960 = vmatprep.subr.mxu0 0.0
        %961 = vmatpush1.msra.mxu0 0.0
        %962 = vmatprep.subr.mxu0 0.0
        %963 = vmatpush1.msra.mxu0 0.0
        %964 = vmatprep.subr.mxu0 0.0
        %965 = vmatpush1.msra.mxu0 0.0
        %966 = vmatprep.subr.mxu0 0.0
        %967 = vmatpush1.msra.mxu0 0.0
        %968 = vmatprep.subr.mxu0 0.0
        %969 = vmatpush1.msra.mxu0 0.0
        %970 = vmatprep.subr.mxu0 0.0
        %971 = vmatpush1.msra.mxu0 0.0
        %972 = vmatprep.subr.mxu0 0.0
        %973 = vmatpush1.msra.mxu0 0.0
        %974 = vmatprep.subr.mxu0 0.0
        %975 = vmatpush1.msra.mxu0 0.0
        %976 = vmatprep.subr.mxu0 0.0
        %977 = vmatpush1.msra.mxu0 0.0
        %978 = vmatprep.subr.mxu0 0.0
        %979 = vmatpush1.msra.mxu0 0.0
        %980 = vmatprep.subr.mxu0 0.0
        %981 = vmatpush1.msra.mxu0 0.0
        %982 = vmatprep.subr.mxu0 0.0
        %983 = vmatpush1.msra.mxu0 0.0
        %984 = vmatprep.subr.mxu0 0.0
        %985 = vmatpush1.msra.mxu0 0.0
        %986 = vmatprep.mubr.f32.mxu0 0.0
        %987 = vmatmul.mubr.f32.gmra.mrb[0].mxu0 %v901
        %v988 = vpop.f32.mrb[0].mxu0
        %v989 = vadd.f32 0.0, %v988
        %v990 = vpop.f32.mrb[0].mxu0
        %991 = vmatprep.mubr.f32.mxu0 0.0
        %992 = vmatmul.mubr.f32.gmra.mrb[0].mxu0 %v904
        %v993 = vpop.f32.mrb[0].mxu0
        %v994 = vadd.f32 0.0, %v993
        %v995 = vpop.f32.mrb[0].mxu0
        %996 = vdwg.mxu0
        %v997 = vadd.f32 %v891, %v989
        %v998 = vadd.f32 %v896, %v994
        %v999 = vadd.f32 %v997, %v998
        %v1000 = vrot.slane %v999, 4
        %v1001 = vadd.f32 %v999, %v1000
        %v1002 = vrot.slane %v1001, 2
        %v1003 = vadd.f32 %v1001, %v1002
        %v1004 = vrot.slane %v1003, 1
        %v1005 = vadd.f32 %v1003, %v1004
        %v1006 = vmul.f32 %v997, %v997
        %v1007 = vmul.f32 %v998, %v998
        %v1008 = vadd.f32 %v1006, %v1007
        %v1009 = vrot.slane %v1008, 4
        %v1010 = vadd.f32 %v1008, %v1009
        %v1011 = vrot.slane %v1010, 2
        %v1012 = vadd.f32 %v1010, %v1011
        %v1013 = vrot.slane %v1012, 1
        %v1014 = vadd.f32 %v1012, %v1013
        %v1015 = vsel %vm352, %v1005, %v1014
        %1016 = vmatprep.subr.mxu0 0.0
        %1017 = vmatpush1.msra.mxu0 %v478
        %1018 = vmatprep.subr.mxu0 0.0
        %1019 = vmatpush1.msra.mxu0 %v479
        %1020 = vmatprep.subr.mxu0 0.0
        %1021 = vmatpush1.msra.mxu0 %v480
        %1022 = vmatprep.subr.mxu0 0.0
        %1023 = vmatpush1.msra.mxu0 %v481
        %1024 = vmatprep.subr.mxu0 0.0
        %1025 = vmatpush1.msra.mxu0 %v482
        %1026 = vmatprep.subr.mxu0 0.0
        %1027 = vmatpush1.msra.mxu0 %v483
        %1028 = vmatprep.subr.mxu0 0.0
        %1029 = vmatpush1.msra.mxu0 %v484
        %1030 = vmatprep.subr.mxu0 0.0
        %1031 = vmatpush1.msra.mxu0 %v485
        %1032 = vmatprep.subr.mxu0 0.0
        %1033 = vmatpush1.msra.mxu0 %v486
        %1034 = vmatprep.subr.mxu0 0.0
        %1035 = vmatpush1.msra.mxu0 %v487
        %1036 = vmatprep.subr.mxu0 0.0
        %1037 = vmatpush1.msra.mxu0 %v488
        %1038 = vmatprep.subr.mxu0 0.0
        %1039 = vmatpush1.msra.mxu0 %v489
        %1040 = vmatprep.subr.mxu0 0.0
        %1041 = vmatpush1.msra.mxu0 %v490
        %1042 = vmatprep.subr.mxu0 0.0
        %1043 = vmatpush1.msra.mxu0 %v491
        %1044 = vmatprep.subr.mxu0 0.0
        %1045 = vmatpush1.msra.mxu0 %v492
        %1046 = vmatprep.subr.mxu0 0.0
        %1047 = vmatpush1.msra.mxu0 %v493
        %1048 = vmatprep.subr.mxu0 0.0
        %1049 = vmatpush1.msra.mxu0 0.0
        %1050 = vmatprep.subr.mxu0 0.0
        %1051 = vmatpush1.msra.mxu0 0.0
        %1052 = vmatprep.subr.mxu0 0.0
        %1053 = vmatpush1.msra.mxu0 0.0
        %1054 = vmatprep.subr.mxu0 0.0
        %1055 = vmatpush1.msra.mxu0 0.0
        %1056 = vmatprep.subr.mxu0 0.0
        %1057 = vmatpush1.msra.mxu0 0.0
        %1058 = vmatprep.subr.mxu0 0.0
        %1059 = vmatpush1.msra.mxu0 0.0
        %1060 = vmatprep.subr.mxu0 0.0
        %1061 = vmatpush1.msra.mxu0 0.0
        %1062 = vmatprep.subr.mxu0 0.0
        %1063 = vmatpush1.msra.mxu0 0.0
        %1064 = vmatprep.subr.mxu0 0.0
        %1065 = vmatpush1.msra.mxu0 0.0
        %1066 = vmatprep.subr.mxu0 0.0
        %1067 = vmatpush1.msra.mxu0 0.0
        %1068 = vmatprep.subr.mxu0 0.0
        %1069 = vmatpush1.msra.mxu0 0.0
        %1070 = vmatprep.subr.mxu0 0.0
        %1071 = vmatpush1.msra.mxu0 0.0
        %1072 = vmatprep.subr.mxu0 0.0
        %1073 = vmatpush1.msra.mxu0 0.0
        %1074 = vmatprep.subr.mxu0 0.0
        %1075 = vmatpush1.msra.mxu0 0.0
        %1076 = vmatprep.subr.mxu0 0.0
        %1077 = vmatpush1.msra.mxu0 0.0
        %1078 = vmatprep.subr.mxu0 0.0
        %1079 = vmatpush1.msra.mxu0 0.0
        %1080 = vmatprep.mubr.f32.mxu0 0.0
        %1081 = vmatmul.mubr.f32.gmra.mrb[0].mxu0 %v1015
        %v1082 = vpop.f32.mrb[0].mxu0
        %v1083 = vadd.f32 0.0, %v1082
        %v1084 = vpop.f32.mrb[0].mxu0
        %1085 = vdwg.mxu0
        %v1086 = vmul.f32 %v1083, %v1083
        %v1088 = vrot.slane %v1086, 7
        %v1090 = vsub.f32 %v1083, %v1088
        %v1091 = vmax.f32 %v1090, 0.0
        %v1092 = vlaneseq
        %v1093 = vshrl.u32 %v1092, 7
        %v1094 = vsub.s32 0, %v1093
        %v1095 = vrot.slane %v1083, %v1094
        %v1096 = vsub.f32 %v997, %v1095
        %v1097 = vsub.f32 %v998, %v1095
        %v1098 = vadd.f32 %v1091, 1e-05
        %v1099 = vrsqrt.pop %v1098
        %v1100 = vlaneseq
        %v1101 = vshrl.u32 %v1100, 7
        %v1102 = vsub.s32 1, %v1101
        %v1103 = vrot.slane %v1099, %v1102
        %v1104 = vmul.f32 %v1096, %v1103
        %v1105 = vmul.f32 %v1097, %v1103
        %v1106 = vmax.f32 %v1104, 0.0
        %v1107 = vmax.f32 %v1105, 0.0
        %v1110 = vrot.slane %v1106, 7
        %v1111 = vrot.slane %v1107, 7
        %v1112 = vsel %vm352, %v1110, %v1111
        %v1115 = vsel %vm352, 0.0, %v1110
        %s1116 = scalar_lea.vmem %s244, 384 [#allocation7]
        %v1117 = vld [vmem:[%s1116] sm:$0xff]
        %v1118 = vld [vmem:[%s1116 + $0x8] sm:$0xff]
        %v1119 = vld [vmem:[%s1116 + $0x10] sm:$0xff]
        %v1120 = vld [vmem:[%s1116 + $0x18] sm:$0xff]
        %v1121 = vld [vmem:[%s1116 + $0x20] sm:$0xff]
        %v1122 = vld [vmem:[%s1116 + $0x28] sm:$0xff]
        %v1123 = vld [vmem:[%s1116 + $0x30] sm:$0xff]
        %v1124 = vld [vmem:[%s1116 + $0x38] sm:$0xff]
        %v1125 = vld [vmem:[%s1116 + $0x40] sm:$0xff]
        %v1126 = vld [vmem:[%s1116 + $0x48] sm:$0xff]
        %v1127 = vld [vmem:[%s1116 + $0x50] sm:$0xff]
        %v1128 = vld [vmem:[%s1116 + $0x58] sm:$0xff]
        %v1129 = vld [vmem:[%s1116 + $0x60] sm:$0xff]
        %v1130 = vld [vmem:[%s1116 + $0x68] sm:$0xff]
        %v1131 = vld [vmem:[%s1116 + $0x70] sm:$0xff]
        %v1132 = vld [vmem:[%s1116 + $0x78] sm:$0xff]
        %s1133 = scalar_lea.vmem %s244, 512 [#allocation7]
        %v1134 = vld [vmem:[%s1133] sm:$0xff]
        %v1135 = vld [vmem:[%s1133 + $0x8] sm:$0xff]
        %v1136 = vld [vmem:[%s1133 + $0x10] sm:$0xff]
        %v1137 = vld [vmem:[%s1133 + $0x18] sm:$0xff]
        %v1138 = vld [vmem:[%s1133 + $0x20] sm:$0xff]
        %v1139 = vld [vmem:[%s1133 + $0x28] sm:$0xff]
        %v1140 = vld [vmem:[%s1133 + $0x30] sm:$0xff]
        %v1141 = vld [vmem:[%s1133 + $0x38] sm:$0xff]
        %v1142 = vld [vmem:[%s1133 + $0x40] sm:$0xff]
        %v1143 = vld [vmem:[%s1133 + $0x48] sm:$0xff]
        %v1144 = vld [vmem:[%s1133 + $0x50] sm:$0xff]
        %v1145 = vld [vmem:[%s1133 + $0x58] sm:$0xff]
        %v1146 = vld [vmem:[%s1133 + $0x60] sm:$0xff]
        %v1147 = vld [vmem:[%s1133 + $0x68] sm:$0xff]
        %v1148 = vld [vmem:[%s1133 + $0x70] sm:$0xff]
        %v1149 = vld [vmem:[%s1133 + $0x78] sm:$0xff]
        %1150 = vmatprep.subr.mxu0 0.0
        %1151 = vmatpush1.msra.mxu0 %v1134
        %1152 = vmatprep.subr.mxu0 0.0
        %1153 = vmatpush1.msra.mxu0 %v1135
        %1154 = vmatprep.subr.mxu0 0.0
        %1155 = vmatpush1.msra.mxu0 %v1136
        %1156 = vmatprep.subr.mxu0 0.0
        %1157 = vmatpush1.msra.mxu0 %v1137
        %1158 = vmatprep.subr.mxu0 0.0
        %1159 = vmatpush1.msra.mxu0 %v1138
        %1160 = vmatprep.subr.mxu0 0.0
        %1161 = vmatpush1.msra.mxu0 %v1139
        %1162 = vmatprep.subr.mxu0 0.0
        %1163 = vmatpush1.msra.mxu0 %v1140
        %1164 = vmatprep.subr.mxu0 0.0
        %1165 = vmatpush1.msra.mxu0 %v1141
        %1166 = vmatprep.subr.mxu0 0.0
        %1167 = vmatpush1.msra.mxu0 %v1142
        %1168 = vmatprep.subr.mxu0 0.0
        %1169 = vmatpush1.msra.mxu0 %v1143
        %1170 = vmatprep.subr.mxu0 0.0
        %1171 = vmatpush1.msra.mxu0 %v1144
        %1172 = vmatprep.subr.mxu0 0.0
        %1173 = vmatpush1.msra.mxu0 %v1145
        %1174 = vmatprep.subr.mxu0 0.0
        %1175 = vmatpush1.msra.mxu0 %v1146
        %1176 = vmatprep.subr.mxu0 0.0
        %1177 = vmatpush1.msra.mxu0 %v1147
        %1178 = vmatprep.subr.mxu0 0.0
        %1179 = vmatpush1.msra.mxu0 %v1148
        %1180 = vmatprep.subr.mxu0 0.0
        %1181 = vmatpush1.msra.mxu0 %v1149
        %1182 = vmatprep.subr.mxu0 0.0
        %1183 = vmatpush1.msra.mxu0 0.0
        %1184 = vmatprep.subr.mxu0 0.0
        %1185 = vmatpush1.msra.mxu0 0.0
        %1186 = vmatprep.subr.mxu0 0.0
        %1187 = vmatpush1.msra.mxu0 0.0
        %1188 = vmatprep.subr.mxu0 0.0
        %1189 = vmatpush1.msra.mxu0 0.0
        %1190 = vmatprep.subr.mxu0 0.0
        %1191 = vmatpush1.msra.mxu0 0.0
        %1192 = vmatprep.subr.mxu0 0.0
        %1193 = vmatpush1.msra.mxu0 0.0
        %1194 = vmatprep.subr.mxu0 0.0
        %1195 = vmatpush1.msra.mxu0 0.0
        %1196 = vmatprep.subr.mxu0 0.0
        %1197 = vmatpush1.msra.mxu0 0.0
        %1198 = vmatprep.subr.mxu0 0.0
        %1199 = vmatpush1.msra.mxu0 0.0
        %1200 = vmatprep.subr.mxu0 0.0
        %1201 = vmatpush1.msra.mxu0 0.0
        %1202 = vmatprep.subr.mxu0 0.0
        %1203 = vmatpush1.msra.mxu0 0.0
        %1204 = vmatprep.subr.mxu0 0.0
        %1205 = vmatpush1.msra.mxu0 0.0
        %1206 = vmatprep.subr.mxu0 0.0
        %1207 = vmatpush1.msra.mxu0 0.0
        %1208 = vmatprep.subr.mxu0 0.0
        %1209 = vmatpush1.msra.mxu0 0.0
        %1210 = vmatprep.subr.mxu0 0.0
        %1211 = vmatpush1.msra.mxu0 0.0
        %1212 = vmatprep.subr.mxu0 0.0
        %1213 = vmatpush1.msra.mxu0 0.0
        %1214 = vmatprep.mubr.f32.mxu0 0.0
        %1215 = vmatmul.mubr.f32.gmra.mrb[0].mxu0 %v1106
        %v1216 = vpop.f32.mrb[0].mxu0
        %v1217 = vadd.f32 0.0, %v1216
        %v1218 = vpop.f32.mrb[0].mxu0
        %1219 = vmatprep.mubr.f32.mxu0 0.0
        %1220 = vmatmul.mubr.f32.gmra.mrb[0].mxu0 %v1107
        %v1221 = vpop.f32.mrb[0].mxu0
        %v1222 = vadd.f32 0.0, %v1221
        %v1223 = vpop.f32.mrb[0].mxu0
        %1224 = vdwg.mxu0
        %1225 = vmatprep.subr.mxu0 0.0
        %1226 = vmatpush1.msra.mxu0 %v1117
        %1227 = vmatprep.subr.mxu0 0.0
        %1228 = vmatpush1.msra.mxu0 %v1118
        %1229 = vmatprep.subr.mxu0 0.0
        %1230 = vmatpush1.msra.mxu0 %v1119
        %1231 = vmatprep.subr.mxu0 0.0
        %1232 = vmatpush1.msra.mxu0 %v1120
        %1233 = vmatprep.subr.mxu0 0.0
        %1234 = vmatpush1.msra.mxu0 %v1121
        %1235 = vmatprep.subr.mxu0 0.0
        %1236 = vmatpush1.msra.mxu0 %v1122
        %1237 = vmatprep.subr.mxu0 0.0
        %1238 = vmatpush1.msra.mxu0 %v1123
        %1239 = vmatprep.subr.mxu0 0.0
        %1240 = vmatpush1.msra.mxu0 %v1124
        %1241 = vmatprep.subr.mxu0 0.0
        %1242 = vmatpush1.msra.mxu0 %v1125
        %1243 = vmatprep.subr.mxu0 0.0
        %1244 = vmatpush1.msra.mxu0 %v1126
        %1245 = vmatprep.subr.mxu0 0.0
        %1246 = vmatpush1.msra.mxu0 %v1127
        %1247 = vmatprep.subr.mxu0 0.0
        %1248 = vmatpush1.msra.mxu0 %v1128
        %1249 = vmatprep.subr.mxu0 0.0
        %1250 = vmatpush1.msra.mxu0 %v1129
        %1251 = vmatprep.subr.mxu0 0.0
        %1252 = vmatpush1.msra.mxu0 %v1130
        %1253 = vmatprep.subr.mxu0 0.0
        %1254 = vmatpush1.msra.mxu0 %v1131
        %1255 = vmatprep.subr.mxu0 0.0
        %1256 = vmatpush1.msra.mxu0 %v1132
        %1257 = vmatprep.subr.mxu0 0.0
        %1258 = vmatpush1.msra.mxu0 0.0
        %1259 = vmatprep.subr.mxu0 0.0
        %1260 = vmatpush1.msra.mxu0 0.0
        %1261 = vmatprep.subr.mxu0 0.0
        %1262 = vmatpush1.msra.mxu0 0.0
        %1263 = vmatprep.subr.mxu0 0.0
        %1264 = vmatpush1.msra.mxu0 0.0
        %1265 = vmatprep.subr.mxu0 0.0
        %1266 = vmatpush1.msra.mxu0 0.0
        %1267 = vmatprep.subr.mxu0 0.0
        %1268 = vmatpush1.msra.mxu0 0.0
        %1269 = vmatprep.subr.mxu0 0.0
        %1270 = vmatpush1.msra.mxu0 0.0
        %1271 = vmatprep.subr.mxu0 0.0
        %1272 = vmatpush1.msra.mxu0 0.0
        %1273 = vmatprep.subr.mxu0 0.0
        %1274 = vmatpush1.msra.mxu0 0.0
        %1275 = vmatprep.subr.mxu0 0.0
        %1276 = vmatpush1.msra.mxu0 0.0
        %1277 = vmatprep.subr.mxu0 0.0
        %1278 = vmatpush1.msra.mxu0 0.0
        %1279 = vmatprep.subr.mxu0 0.0
        %1280 = vmatpush1.msra.mxu0 0.0
        %1281 = vmatprep.subr.mxu0 0.0
        %1282 = vmatpush1.msra.mxu0 0.0
        %1283 = vmatprep.subr.mxu0 0.0
        %1284 = vmatpush1.msra.mxu0 0.0
        %1285 = vmatprep.subr.mxu0 0.0
        %1286 = vmatpush1.msra.mxu0 0.0
        %1287 = vmatprep.subr.mxu0 0.0
        %1288 = vmatpush1.msra.mxu0 0.0
        %1289 = vmatprep.mubr.f32.mxu0 0.0
        %1290 = vmatmul.mubr.f32.gmra.mrb[0].mxu0 %v1115
        %v1291 = vpop.f32.mrb[0].mxu0
        %v1292 = vadd.f32 %v1217, %v1291
        %v1293 = vpop.f32.mrb[0].mxu0
        %1294 = vmatprep.mubr.f32.mxu0 0.0
        %1295 = vmatmul.mubr.f32.gmra.mrb[0].mxu0 %v1112
        %v1296 = vpop.f32.mrb[0].mxu0
        %v1297 = vadd.f32 %v1222, %v1296
        %v1298 = vpop.f32.mrb[0].mxu0
        %1299 = vdwg.mxu0
        %v1300 = vrot.slane %v1106, 1
        %v1301 = vrot.slane %v1107, 1
        %v1302 = vsel %vm420, %v1300, %v1301
        %v1305 = vsel %vm420, %v1301, 0.0
        %s1306 = scalar_lea.vmem %s244, 640 [#allocation7]
        %v1307 = vld [vmem:[%s1306] sm:$0xff]
        %v1308 = vld [vmem:[%s1306 + $0x8] sm:$0xff]
        %v1309 = vld [vmem:[%s1306 + $0x10] sm:$0xff]
        %v1310 = vld [vmem:[%s1306 + $0x18] sm:$0xff]
        %v1311 = vld [vmem:[%s1306 + $0x20] sm:$0xff]
        %v1312 = vld [vmem:[%s1306 + $0x28] sm:$0xff]
        %v1313 = vld [vmem:[%s1306 + $0x30] sm:$0xff]
        %v1314 = vld [vmem:[%s1306 + $0x38] sm:$0xff]
        %v1315 = vld [vmem:[%s1306 + $0x40] sm:$0xff]
        %v1316 = vld [vmem:[%s1306 + $0x48] sm:$0xff]
        %v1317 = vld [vmem:[%s1306 + $0x50] sm:$0xff]
        %v1318 = vld [vmem:[%s1306 + $0x58] sm:$0xff]
        %v1319 = vld [vmem:[%s1306 + $0x60] sm:$0xff]
        %v1320 = vld [vmem:[%s1306 + $0x68] sm:$0xff]
        %v1321 = vld [vmem:[%s1306 + $0x70] sm:$0xff]
        %v1322 = vld [vmem:[%s1306 + $0x78] sm:$0xff]
        %1323 = vmatprep.subr.mxu0 0.0
        %1324 = vmatpush1.msra.mxu0 %v1307
        %1325 = vmatprep.subr.mxu0 0.0
        %1326 = vmatpush1.msra.mxu0 %v1308
        %1327 = vmatprep.subr.mxu0 0.0
        %1328 = vmatpush1.msra.mxu0 %v1309
        %1329 = vmatprep.subr.mxu0 0.0
        %1330 = vmatpush1.msra.mxu0 %v1310
        %1331 = vmatprep.subr.mxu0 0.0
        %1332 = vmatpush1.msra.mxu0 %v1311
        %1333 = vmatprep.subr.mxu0 0.0
        %1334 = vmatpush1.msra.mxu0 %v1312
        %1335 = vmatprep.subr.mxu0 0.0
        %1336 = vmatpush1.msra.mxu0 %v1313
        %1337 = vmatprep.subr.mxu0 0.0
        %1338 = vmatpush1.msra.mxu0 %v1314
        %1339 = vmatprep.subr.mxu0 0.0
        %1340 = vmatpush1.msra.mxu0 %v1315
        %1341 = vmatprep.subr.mxu0 0.0
        %1342 = vmatpush1.msra.mxu0 %v1316
        %1343 = vmatprep.subr.mxu0 0.0
        %1344 = vmatpush1.msra.mxu0 %v1317
        %1345 = vmatprep.subr.mxu0 0.0
        %1346 = vmatpush1.msra.mxu0 %v1318
        %1347 = vmatprep.subr.mxu0 0.0
        %1348 = vmatpush1.msra.mxu0 %v1319
        %1349 = vmatprep.subr.mxu0 0.0
        %1350 = vmatpush1.msra.mxu0 %v1320
        %1351 = vmatprep.subr.mxu0 0.0
        %1352 = vmatpush1.msra.mxu0 %v1321
        %1353 = vmatprep.subr.mxu0 0.0
        %1354 = vmatpush1.msra.mxu0 %v1322
        %1355 = vmatprep.subr.mxu0 0.0
        %1356 = vmatpush1.msra.mxu0 0.0
        %1357 = vmatprep.subr.mxu0 0.0
        %1358 = vmatpush1.msra.mxu0 0.0
        %1359 = vmatprep.subr.mxu0 0.0
        %1360 = vmatpush1.msra.mxu0 0.0
        %1361 = vmatprep.subr.mxu0 0.0
        %1362 = vmatpush1.msra.mxu0 0.0
        %1363 = vmatprep.subr.mxu0 0.0
        %1364 = vmatpush1.msra.mxu0 0.0
        %1365 = vmatprep.subr.mxu0 0.0
        %1366 = vmatpush1.msra.mxu0 0.0
        %1367 = vmatprep.subr.mxu0 0.0
        %1368 = vmatpush1.msra.mxu0 0.0
        %1369 = vmatprep.subr.mxu0 0.0
        %1370 = vmatpush1.msra.mxu0 0.0
        %1371 = vmatprep.subr.mxu0 0.0
        %1372 = vmatpush1.msra.mxu0 0.0
        %1373 = vmatprep.subr.mxu0 0.0
        %1374 = vmatpush1.msra.mxu0 0.0
        %1375 = vmatprep.subr.mxu0 0.0
        %1376 = vmatpush1.msra.mxu0 0.0
        %1377 = vmatprep.subr.mxu0 0.0
        %1378 = vmatpush1.msra.mxu0 0.0
        %1379 = vmatprep.subr.mxu0 0.0
        %1380 = vmatpush1.msra.mxu0 0.0
        %1381 = vmatprep.subr.mxu0 0.0
        %1382 = vmatpush1.msra.mxu0 0.0
        %1383 = vmatprep.subr.mxu0 0.0
        %1384 = vmatpush1.msra.mxu0 0.0
        %1385 = vmatprep.subr.mxu0 0.0
        %1386 = vmatpush1.msra.mxu0 0.0
        %1387 = vmatprep.mubr.f32.mxu0 0.0
        %1388 = vmatmul.mubr.f32.gmra.mrb[0].mxu0 %v1302
        %v1389 = vpop.f32.mrb[0].mxu0
        %v1390 = vadd.f32 0.0, %v1389
        %v1391 = vpop.f32.mrb[0].mxu0
        %1392 = vmatprep.mubr.f32.mxu0 0.0
        %1393 = vmatmul.mubr.f32.gmra.mrb[0].mxu0 %v1305
        %v1394 = vpop.f32.mrb[0].mxu0
        %v1395 = vadd.f32 0.0, %v1394
        %v1396 = vpop.f32.mrb[0].mxu0
        %1397 = vdwg.mxu0
        %v1398 = vadd.f32 %v1292, %v1390
        %v1399 = vadd.f32 %v1297, %v1395
        %v1400 = vld [vmem:[%s273 + $0x4] sm:$0x1]
        %v1401 = vadd.f32 %v1398, %v1399
        %v1402 = vrot.slane %v1401, 4
        %v1403 = vadd.f32 %v1401, %v1402
        %v1404 = vrot.slane %v1403, 2
        %v1405 = vadd.f32 %v1403, %v1404
        %v1406 = vrot.slane %v1405, 1
        %v1407 = vadd.f32 %v1405, %v1406
        %v1408 = vmul.f32 %v1398, %v1398
        %v1409 = vmul.f32 %v1399, %v1399
        %v1410 = vadd.f32 %v1408, %v1409
        %v1411 = vrot.slane %v1410, 4
        %v1412 = vadd.f32 %v1410, %v1411
        %v1413 = vrot.slane %v1412, 2
        %v1414 = vadd.f32 %v1412, %v1413
        %v1415 = vrot.slane %v1414, 1
        %v1416 = vadd.f32 %v1414, %v1415
        %v1417 = vsel %vm352, %v1407, %v1416
        %1418 = vmatprep.subr.mxu0 0.0
        %1419 = vmatpush1.msra.mxu0 %v478
        %1420 = vmatprep.subr.mxu0 0.0
        %1421 = vmatpush1.msra.mxu0 %v479
        %1422 = vmatprep.subr.mxu0 0.0
        %1423 = vmatpush1.msra.mxu0 %v480
        %1424 = vmatprep.subr.mxu0 0.0
        %1425 = vmatpush1.msra.mxu0 %v481
        %1426 = vmatprep.subr.mxu0 0.0
        %1427 = vmatpush1.msra.mxu0 %v482
        %1428 = vmatprep.subr.mxu0 0.0
        %1429 = vmatpush1.msra.mxu0 %v483
        %1430 = vmatprep.subr.mxu0 0.0
        %1431 = vmatpush1.msra.mxu0 %v484
        %1432 = vmatprep.subr.mxu0 0.0
        %1433 = vmatpush1.msra.mxu0 %v485
        %1434 = vmatprep.subr.mxu0 0.0
        %1435 = vmatpush1.msra.mxu0 %v486
        %1436 = vmatprep.subr.mxu0 0.0
        %1437 = vmatpush1.msra.mxu0 %v487
        %1438 = vmatprep.subr.mxu0 0.0
        %1439 = vmatpush1.msra.mxu0 %v488
        %1440 = vmatprep.subr.mxu0 0.0
        %1441 = vmatpush1.msra.mxu0 %v489
        %1442 = vmatprep.subr.mxu0 0.0
        %1443 = vmatpush1.msra.mxu0 %v490
        %1444 = vmatprep.subr.mxu0 0.0
        %1445 = vmatpush1.msra.mxu0 %v491
        %1446 = vmatprep.subr.mxu0 0.0
        %1447 = vmatpush1.msra.mxu0 %v492
        %1448 = vmatprep.subr.mxu0 0.0
        %1449 = vmatpush1.msra.mxu0 %v493
        %1450 = vmatprep.subr.mxu0 0.0
        %1451 = vmatpush1.msra.mxu0 0.0
        %1452 = vmatprep.subr.mxu0 0.0
        %1453 = vmatpush1.msra.mxu0 0.0
        %1454 = vmatprep.subr.mxu0 0.0
        %1455 = vmatpush1.msra.mxu0 0.0
        %1456 = vmatprep.subr.mxu0 0.0
        %1457 = vmatpush1.msra.mxu0 0.0
        %1458 = vmatprep.subr.mxu0 0.0
        %1459 = vmatpush1.msra.mxu0 0.0
        %1460 = vmatprep.subr.mxu0 0.0
        %1461 = vmatpush1.msra.mxu0 0.0
        %1462 = vmatprep.subr.mxu0 0.0
        %1463 = vmatpush1.msra.mxu0 0.0
        %1464 = vmatprep.subr.mxu0 0.0
        %1465 = vmatpush1.msra.mxu0 0.0
        %1466 = vmatprep.subr.mxu0 0.0
        %1467 = vmatpush1.msra.mxu0 0.0
        %1468 = vmatprep.subr.mxu0 0.0
        %1469 = vmatpush1.msra.mxu0 0.0
        %1470 = vmatprep.subr.mxu0 0.0
        %1471 = vmatpush1.msra.mxu0 0.0
        %1472 = vmatprep.subr.mxu0 0.0
        %1473 = vmatpush1.msra.mxu0 0.0
        %1474 = vmatprep.subr.mxu0 0.0
        %1475 = vmatpush1.msra.mxu0 0.0
        %1476 = vmatprep.subr.mxu0 0.0
        %1477 = vmatpush1.msra.mxu0 0.0
        %1478 = vmatprep.subr.mxu0 0.0
        %1479 = vmatpush1.msra.mxu0 0.0
        %1480 = vmatprep.subr.mxu0 0.0
        %1481 = vmatpush1.msra.mxu0 0.0
        %1482 = vmatprep.mubr.f32.mxu0 0.0
        %1483 = vmatmul.mubr.f32.gmra.mrb[0].mxu0 %v1417
        %v1484 = vpop.f32.mrb[0].mxu0
        %v1485 = vadd.f32 0.0, %v1484
        %v1486 = vpop.f32.mrb[0].mxu0
        %1487 = vdwg.mxu0
        %v1488 = vmul.f32 %v1485, %v1485
        %v1490 = vrot.slane %v1488, 7
        %v1492 = vsub.f32 %v1485, %v1490
        %v1493 = vmax.f32 %v1492, 0.0
        %v1494 = vlaneseq
        %v1495 = vshrl.u32 %v1494, 7
        %v1496 = vsub.s32 0, %v1495
        %v1497 = vrot.slane %v1485, %v1496
        %v1498 = vsub.f32 %v1398, %v1497
        %v1499 = vsub.f32 %v1399, %v1497
        %v1500 = vadd.f32 %v1493, 1e-05
        %v1501 = vrsqrt.pop %v1500
        %v1503 = vrot.slane %v1400, 7
        %v1505 = vmul.f32 %v1501, %v1503
        %v1506 = vlaneseq
        %v1507 = vshrl.u32 %v1506, 7
        %v1508 = vsub.s32 1, %v1507
        %v1509 = vrot.slane %v1505, %v1508
        %v1510 = vmul.f32 %v1498, %v1509
        %v1511 = vmul.f32 %v1499, %v1509
        %v1512 = vadd.f32 %v706, %v1510
        %v1513 = vadd.f32 %v707, %v1511
        %vm1514 = vcmask 1041408
        %v1515 = vrot.slane %v341, 6
        %v1516 = vrot.slane %v342, 6
        %v1517 = vsel %vm1514, %v1515, %v1516
        %v1520 = vsel %vm1514, 0.0, %v1515
        %s1521 = scalar_lea.vmem %s244, 768 [#allocation7]
        %v1522 = vld [vmem:[%s1521] sm:$0xff]
        %v1523 = vld [vmem:[%s1521 + $0x8] sm:$0xff]
        %v1524 = vld [vmem:[%s1521 + $0x10] sm:$0xff]
        %v1525 = vld [vmem:[%s1521 + $0x18] sm:$0xff]
        %v1526 = vld [vmem:[%s1521 + $0x20] sm:$0xff]
        %v1527 = vld [vmem:[%s1521 + $0x28] sm:$0xff]
        %v1528 = vld [vmem:[%s1521 + $0x30] sm:$0xff]
        %v1529 = vld [vmem:[%s1521 + $0x38] sm:$0xff]
        %v1530 = vld [vmem:[%s1521 + $0x40] sm:$0xff]
        %v1531 = vld [vmem:[%s1521 + $0x48] sm:$0xff]
        %v1532 = vld [vmem:[%s1521 + $0x50] sm:$0xff]
        %v1533 = vld [vmem:[%s1521 + $0x58] sm:$0xff]
        %v1534 = vld [vmem:[%s1521 + $0x60] sm:$0xff]
        %v1535 = vld [vmem:[%s1521 + $0x68] sm:$0xff]
        %v1536 = vld [vmem:[%s1521 + $0x70] sm:$0xff]
        %v1537 = vld [vmem:[%s1521 + $0x78] sm:$0xff]
        %s1538 = scalar_lea.vmem %s244, 896 [#allocation7]
        %v1539 = vld [vmem:[%s1538] sm:$0xff]
        %v1540 = vld [vmem:[%s1538 + $0x8] sm:$0xff]
        %v1541 = vld [vmem:[%s1538 + $0x10] sm:$0xff]
        %v1542 = vld [vmem:[%s1538 + $0x18] sm:$0xff]
        %v1543 = vld [vmem:[%s1538 + $0x20] sm:$0xff]
        %v1544 = vld [vmem:[%s1538 + $0x28] sm:$0xff]
        %v1545 = vld [vmem:[%s1538 + $0x30] sm:$0xff]
        %v1546 = vld [vmem:[%s1538 + $0x38] sm:$0xff]
        %v1547 = vld [vmem:[%s1538 + $0x40] sm:$0xff]
        %v1548 = vld [vmem:[%s1538 + $0x48] sm:$0xff]
        %v1549 = vld [vmem:[%s1538 + $0x50] sm:$0xff]
        %v1550 = vld [vmem:[%s1538 + $0x58] sm:$0xff]
        %v1551 = vld [vmem:[%s1538 + $0x60] sm:$0xff]
        %v1552 = vld [vmem:[%s1538 + $0x68] sm:$0xff]
        %v1553 = vld [vmem:[%s1538 + $0x70] sm:$0xff]
        %v1554 = vld [vmem:[%s1538 + $0x78] sm:$0xff]
        %1555 = vmatprep.subr.mxu0 0.0
        %1556 = vmatpush1.msra.mxu0 %v1539
        %1557 = vmatprep.subr.mxu0 0.0
        %1558 = vmatpush1.msra.mxu0 %v1540
        %1559 = vmatprep.subr.mxu0 0.0
        %1560 = vmatpush1.msra.mxu0 %v1541
        %1561 = vmatprep.subr.mxu0 0.0
        %1562 = vmatpush1.msra.mxu0 %v1542
        %1563 = vmatprep.subr.mxu0 0.0
        %1564 = vmatpush1.msra.mxu0 %v1543
        %1565 = vmatprep.subr.mxu0 0.0
        %1566 = vmatpush1.msra.mxu0 %v1544
        %1567 = vmatprep.subr.mxu0 0.0
        %1568 = vmatpush1.msra.mxu0 %v1545
        %1569 = vmatprep.subr.mxu0 0.0
        %1570 = vmatpush1.msra.mxu0 %v1546
        %1571 = vmatprep.subr.mxu0 0.0
        %1572 = vmatpush1.msra.mxu0 %v1547
        %1573 = vmatprep.subr.mxu0 0.0
        %1574 = vmatpush1.msra.mxu0 %v1548
        %1575 = vmatprep.subr.mxu0 0.0
        %1576 = vmatpush1.msra.mxu0 %v1549
        %1577 = vmatprep.subr.mxu0 0.0
        %1578 = vmatpush1.msra.mxu0 %v1550
        %1579 = vmatprep.subr.mxu0 0.0
        %1580 = vmatpush1.msra.mxu0 %v1551
        %1581 = vmatprep.subr.mxu0 0.0
        %1582 = vmatpush1.msra.mxu0 %v1552
        %1583 = vmatprep.subr.mxu0 0.0
        %1584 = vmatpush1.msra.mxu0 %v1553
        %1585 = vmatprep.subr.mxu0 0.0
        %1586 = vmatpush1.msra.mxu0 %v1554
        %1587 = vmatprep.subr.mxu0 0.0
        %1588 = vmatpush1.msra.mxu0 0.0
        %1589 = vmatprep.subr.mxu0 0.0
        %1590 = vmatpush1.msra.mxu0 0.0
        %1591 = vmatprep.subr.mxu0 0.0
        %1592 = vmatpush1.msra.mxu0 0.0
        %1593 = vmatprep.subr.mxu0 0.0
        %1594 = vmatpush1.msra.mxu0 0.0
        %1595 = vmatprep.subr.mxu0 0.0
        %1596 = vmatpush1.msra.mxu0 0.0
        %1597 = vmatprep.subr.mxu0 0.0
        %1598 = vmatpush1.msra.mxu0 0.0
        %1599 = vmatprep.subr.mxu0 0.0
        %1600 = vmatpush1.msra.mxu0 0.0
        %1601 = vmatprep.subr.mxu0 0.0
        %1602 = vmatpush1.msra.mxu0 0.0
        %1603 = vmatprep.subr.mxu0 0.0
        %1604 = vmatpush1.msra.mxu0 0.0
        %1605 = vmatprep.subr.mxu0 0.0
        %1606 = vmatpush1.msra.mxu0 0.0
        %1607 = vmatprep.subr.mxu0 0.0
        %1608 = vmatpush1.msra.mxu0 0.0
        %1609 = vmatprep.subr.mxu0 0.0
        %1610 = vmatpush1.msra.mxu0 0.0
        %1611 = vmatprep.subr.mxu0 0.0
        %1612 = vmatpush1.msra.mxu0 0.0
        %1613 = vmatprep.subr.mxu0 0.0
        %1614 = vmatpush1.msra.mxu0 0.0
        %1615 = vmatprep.subr.mxu0 0.0
        %1616 = vmatpush1.msra.mxu0 0.0
        %1617 = vmatprep.subr.mxu0 0.0
        %1618 = vmatpush1.msra.mxu0 0.0
        %1619 = vmatprep.mubr.f32.mxu0 0.0
        %1620 = vmatmul.mubr.f32.gmra.mrb[0].mxu0 %v715
        %v1621 = vpop.f32.mrb[0].mxu0
        %v1622 = vadd.f32 0.0, %v1621
        %v1623 = vpop.f32.mrb[0].mxu0
        %1624 = vmatprep.mubr.f32.mxu0 0.0
        %1625 = vmatmul.mubr.f32.gmra.mrb[0].mxu0 %v712
        %v1626 = vpop.f32.mrb[0].mxu0
        %v1627 = vadd.f32 0.0, %v1626
        %v1628 = vpop.f32.mrb[0].mxu0
        %1629 = vdwg.mxu0
        %1630 = vmatprep.subr.mxu0 0.0
        %1631 = vmatpush1.msra.mxu0 %v1522
        %1632 = vmatprep.subr.mxu0 0.0
        %1633 = vmatpush1.msra.mxu0 %v1523
        %1634 = vmatprep.subr.mxu0 0.0
        %1635 = vmatpush1.msra.mxu0 %v1524
        %1636 = vmatprep.subr.mxu0 0.0
        %1637 = vmatpush1.msra.mxu0 %v1525
        %1638 = vmatprep.subr.mxu0 0.0
        %1639 = vmatpush1.msra.mxu0 %v1526
        %1640 = vmatprep.subr.mxu0 0.0
        %1641 = vmatpush1.msra.mxu0 %v1527
        %1642 = vmatprep.subr.mxu0 0.0
        %1643 = vmatpush1.msra.mxu0 %v1528
        %1644 = vmatprep.subr.mxu0 0.0
        %1645 = vmatpush1.msra.mxu0 %v1529
        %1646 = vmatprep.subr.mxu0 0.0
        %1647 = vmatpush1.msra.mxu0 %v1530
        %1648 = vmatprep.subr.mxu0 0.0
        %1649 = vmatpush1.msra.mxu0 %v1531
        %1650 = vmatprep.subr.mxu0 0.0
        %1651 = vmatpush1.msra.mxu0 %v1532
        %1652 = vmatprep.subr.mxu0 0.0
        %1653 = vmatpush1.msra.mxu0 %v1533
        %1654 = vmatprep.subr.mxu0 0.0
        %1655 = vmatpush1.msra.mxu0 %v1534
        %1656 = vmatprep.subr.mxu0 0.0
        %1657 = vmatpush1.msra.mxu0 %v1535
        %1658 = vmatprep.subr.mxu0 0.0
        %1659 = vmatpush1.msra.mxu0 %v1536
        %1660 = vmatprep.subr.mxu0 0.0
        %1661 = vmatpush1.msra.mxu0 %v1537
        %1662 = vmatprep.subr.mxu0 0.0
        %1663 = vmatpush1.msra.mxu0 0.0
        %1664 = vmatprep.subr.mxu0 0.0
        %1665 = vmatpush1.msra.mxu0 0.0
        %1666 = vmatprep.subr.mxu0 0.0
        %1667 = vmatpush1.msra.mxu0 0.0
        %1668 = vmatprep.subr.mxu0 0.0
        %1669 = vmatpush1.msra.mxu0 0.0
        %1670 = vmatprep.subr.mxu0 0.0
        %1671 = vmatpush1.msra.mxu0 0.0
        %1672 = vmatprep.subr.mxu0 0.0
        %1673 = vmatpush1.msra.mxu0 0.0
        %1674 = vmatprep.subr.mxu0 0.0
        %1675 = vmatpush1.msra.mxu0 0.0
        %1676 = vmatprep.subr.mxu0 0.0
        %1677 = vmatpush1.msra.mxu0 0.0
        %1678 = vmatprep.subr.mxu0 0.0
        %1679 = vmatpush1.msra.mxu0 0.0
        %1680 = vmatprep.subr.mxu0 0.0
        %1681 = vmatpush1.msra.mxu0 0.0
        %1682 = vmatprep.subr.mxu0 0.0
        %1683 = vmatpush1.msra.mxu0 0.0
        %1684 = vmatprep.subr.mxu0 0.0
        %1685 = vmatpush1.msra.mxu0 0.0
        %1686 = vmatprep.subr.mxu0 0.0
        %1687 = vmatpush1.msra.mxu0 0.0
        %1688 = vmatprep.subr.mxu0 0.0
        %1689 = vmatpush1.msra.mxu0 0.0
        %1690 = vmatprep.subr.mxu0 0.0
        %1691 = vmatpush1.msra.mxu0 0.0
        %1692 = vmatprep.subr.mxu0 0.0
        %1693 = vmatpush1.msra.mxu0 0.0
        %1694 = vmatprep.mubr.f32.mxu0 0.0
        %1695 = vmatmul.mubr.f32.gmra.mrb[0].mxu0 %v1520
        %v1696 = vpop.f32.mrb[0].mxu0
        %v1697 = vadd.f32 %v1622, %v1696
        %v1698 = vpop.f32.mrb[0].mxu0
        %1699 = vmatprep.mubr.f32.mxu0 0.0
        %1700 = vmatmul.mubr.f32.gmra.mrb[0].mxu0 %v1517
        %v1701 = vpop.f32.mrb[0].mxu0
        %v1702 = vadd.f32 %v1627, %v1701
        %v1703 = vpop.f32.mrb[0].mxu0
        %1704 = vdwg.mxu0
        %s1705 = scalar_lea.vmem %s244, 1024 [#allocation7]
        %v1706 = vld [vmem:[%s1705] sm:$0xff]
        %v1707 = vld [vmem:[%s1705 + $0x8] sm:$0xff]
        %v1708 = vld [vmem:[%s1705 + $0x10] sm:$0xff]
        %v1709 = vld [vmem:[%s1705 + $0x18] sm:$0xff]
        %v1710 = vld [vmem:[%s1705 + $0x20] sm:$0xff]
        %v1711 = vld [vmem:[%s1705 + $0x28] sm:$0xff]
        %v1712 = vld [vmem:[%s1705 + $0x30] sm:$0xff]
        %v1713 = vld [vmem:[%s1705 + $0x38] sm:$0xff]
        %v1714 = vld [vmem:[%s1705 + $0x40] sm:$0xff]
        %v1715 = vld [vmem:[%s1705 + $0x48] sm:$0xff]
        %v1716 = vld [vmem:[%s1705 + $0x50] sm:$0xff]
        %v1717 = vld [vmem:[%s1705 + $0x58] sm:$0xff]
        %v1718 = vld [vmem:[%s1705 + $0x60] sm:$0xff]
        %v1719 = vld [vmem:[%s1705 + $0x68] sm:$0xff]
        %v1720 = vld [vmem:[%s1705 + $0x70] sm:$0xff]
        %v1721 = vld [vmem:[%s1705 + $0x78] sm:$0xff]
        %1722 = vmatprep.subr.mxu0 0.0
        %1723 = vmatpush1.msra.mxu0 %v1706
        %1724 = vmatprep.subr.mxu0 0.0
        %1725 = vmatpush1.msra.mxu0 %v1707
        %1726 = vmatprep.subr.mxu0 0.0
        %1727 = vmatpush1.msra.mxu0 %v1708
        %1728 = vmatprep.subr.mxu0 0.0
        %1729 = vmatpush1.msra.mxu0 %v1709
        %1730 = vmatprep.subr.mxu0 0.0
        %1731 = vmatpush1.msra.mxu0 %v1710
        %1732 = vmatprep.subr.mxu0 0.0
        %1733 = vmatpush1.msra.mxu0 %v1711
        %1734 = vmatprep.subr.mxu0 0.0
        %1735 = vmatpush1.msra.mxu0 %v1712
        %1736 = vmatprep.subr.mxu0 0.0
        %1737 = vmatpush1.msra.mxu0 %v1713
        %1738 = vmatprep.subr.mxu0 0.0
        %1739 = vmatpush1.msra.mxu0 %v1714
        %1740 = vmatprep.subr.mxu0 0.0
        %1741 = vmatpush1.msra.mxu0 %v1715
        %1742 = vmatprep.subr.mxu0 0.0
        %1743 = vmatpush1.msra.mxu0 %v1716
        %1744 = vmatprep.subr.mxu0 0.0
        %1745 = vmatpush1.msra.mxu0 %v1717
        %1746 = vmatprep.subr.mxu0 0.0
        %1747 = vmatpush1.msra.mxu0 %v1718
        %1748 = vmatprep.subr.mxu0 0.0
        %1749 = vmatpush1.msra.mxu0 %v1719
        %1750 = vmatprep.subr.mxu0 0.0
        %1751 = vmatpush1.msra.mxu0 %v1720
        %1752 = vmatprep.subr.mxu0 0.0
        %1753 = vmatpush1.msra.mxu0 %v1721
        %1754 = vmatprep.subr.mxu0 0.0
        %1755 = vmatpush1.msra.mxu0 0.0
        %1756 = vmatprep.subr.mxu0 0.0
        %1757 = vmatpush1.msra.mxu0 0.0
        %1758 = vmatprep.subr.mxu0 0.0
        %1759 = vmatpush1.msra.mxu0 0.0
        %1760 = vmatprep.subr.mxu0 0.0
        %1761 = vmatpush1.msra.mxu0 0.0
        %1762 = vmatprep.subr.mxu0 0.0
        %1763 = vmatpush1.msra.mxu0 0.0
        %1764 = vmatprep.subr.mxu0 0.0
        %1765 = vmatpush1.msra.mxu0 0.0
        %1766 = vmatprep.subr.mxu0 0.0
        %1767 = vmatpush1.msra.mxu0 0.0
        %1768 = vmatprep.subr.mxu0 0.0
        %1769 = vmatpush1.msra.mxu0 0.0
        %1770 = vmatprep.subr.mxu0 0.0
        %1771 = vmatpush1.msra.mxu0 0.0
        %1772 = vmatprep.subr.mxu0 0.0
        %1773 = vmatpush1.msra.mxu0 0.0
        %1774 = vmatprep.subr.mxu0 0.0
        %1775 = vmatpush1.msra.mxu0 0.0
        %1776 = vmatprep.subr.mxu0 0.0
        %1777 = vmatpush1.msra.mxu0 0.0
        %1778 = vmatprep.subr.mxu0 0.0
        %1779 = vmatpush1.msra.mxu0 0.0
        %1780 = vmatprep.subr.mxu0 0.0
        %1781 = vmatpush1.msra.mxu0 0.0
        %1782 = vmatprep.subr.mxu0 0.0
        %1783 = vmatpush1.msra.mxu0 0.0
        %1784 = vmatprep.subr.mxu0 0.0
        %1785 = vmatpush1.msra.mxu0 0.0
        %1786 = vmatprep.mubr.f32.mxu0 0.0
        %1787 = vmatmul.mubr.f32.gmra.mrb[0].mxu0 %v341
        %v1788 = vpop.f32.mrb[0].mxu0
        %v1789 = vadd.f32 0.0, %v1788
        %v1790 = vpop.f32.mrb[0].mxu0
        %1791 = vmatprep.mubr.f32.mxu0 0.0
        %1792 = vmatmul.mubr.f32.gmra.mrb[0].mxu0 %v342
        %v1793 = vpop.f32.mrb[0].mxu0
        %v1794 = vadd.f32 0.0, %v1793
        %v1795 = vpop.f32.mrb[0].mxu0
        %1796 = vdwg.mxu0
        %v1797 = vadd.f32 %v1697, %v1789
        %v1798 = vadd.f32 %v1702, %v1794
        %s1799 = scalar_lea.vmem %s244, 1152 [#allocation7]
        %v1800 = vld [vmem:[%s1799] sm:$0xff]
        %v1801 = vld [vmem:[%s1799 + $0x8] sm:$0xff]
        %v1802 = vld [vmem:[%s1799 + $0x10] sm:$0xff]
        %v1803 = vld [vmem:[%s1799 + $0x18] sm:$0xff]
        %v1804 = vld [vmem:[%s1799 + $0x20] sm:$0xff]
        %v1805 = vld [vmem:[%s1799 + $0x28] sm:$0xff]
        %v1806 = vld [vmem:[%s1799 + $0x30] sm:$0xff]
        %v1807 = vld [vmem:[%s1799 + $0x38] sm:$0xff]
        %v1808 = vld [vmem:[%s1799 + $0x40] sm:$0xff]
        %v1809 = vld [vmem:[%s1799 + $0x48] sm:$0xff]
        %v1810 = vld [vmem:[%s1799 + $0x50] sm:$0xff]
        %v1811 = vld [vmem:[%s1799 + $0x58] sm:$0xff]
        %v1812 = vld [vmem:[%s1799 + $0x60] sm:$0xff]
        %v1813 = vld [vmem:[%s1799 + $0x68] sm:$0xff]
        %v1814 = vld [vmem:[%s1799 + $0x70] sm:$0xff]
        %v1815 = vld [vmem:[%s1799 + $0x78] sm:$0xff]
        %1816 = vmatprep.subr.mxu0 0.0
        %1817 = vmatpush1.msra.mxu0 %v1800
        %1818 = vmatprep.subr.mxu0 0.0
        %1819 = vmatpush1.msra.mxu0 %v1801
        %1820 = vmatprep.subr.mxu0 0.0
        %1821 = vmatpush1.msra.mxu0 %v1802
        %1822 = vmatprep.subr.mxu0 0.0
        %1823 = vmatpush1.msra.mxu0 %v1803
        %1824 = vmatprep.subr.mxu0 0.0
        %1825 = vmatpush1.msra.mxu0 %v1804
        %1826 = vmatprep.subr.mxu0 0.0
        %1827 = vmatpush1.msra.mxu0 %v1805
        %1828 = vmatprep.subr.mxu0 0.0
        %1829 = vmatpush1.msra.mxu0 %v1806
        %1830 = vmatprep.subr.mxu0 0.0
        %1831 = vmatpush1.msra.mxu0 %v1807
        %1832 = vmatprep.subr.mxu0 0.0
        %1833 = vmatpush1.msra.mxu0 %v1808
        %1834 = vmatprep.subr.mxu0 0.0
        %1835 = vmatpush1.msra.mxu0 %v1809
        %1836 = vmatprep.subr.mxu0 0.0
        %1837 = vmatpush1.msra.mxu0 %v1810
        %1838 = vmatprep.subr.mxu0 0.0
        %1839 = vmatpush1.msra.mxu0 %v1811
        %1840 = vmatprep.subr.mxu0 0.0
        %1841 = vmatpush1.msra.mxu0 %v1812
        %1842 = vmatprep.subr.mxu0 0.0
        %1843 = vmatpush1.msra.mxu0 %v1813
        %1844 = vmatprep.subr.mxu0 0.0
        %1845 = vmatpush1.msra.mxu0 %v1814
        %1846 = vmatprep.subr.mxu0 0.0
        %1847 = vmatpush1.msra.mxu0 %v1815
        %1848 = vmatprep.subr.mxu0 0.0
        %1849 = vmatpush1.msra.mxu0 0.0
        %1850 = vmatprep.subr.mxu0 0.0
        %1851 = vmatpush1.msra.mxu0 0.0
        %1852 = vmatprep.subr.mxu0 0.0
        %1853 = vmatpush1.msra.mxu0 0.0
        %1854 = vmatprep.subr.mxu0 0.0
        %1855 = vmatpush1.msra.mxu0 0.0
        %1856 = vmatprep.subr.mxu0 0.0
        %1857 = vmatpush1.msra.mxu0 0.0
        %1858 = vmatprep.subr.mxu0 0.0
        %1859 = vmatpush1.msra.mxu0 0.0
        %1860 = vmatprep.subr.mxu0 0.0
        %1861 = vmatpush1.msra.mxu0 0.0
        %1862 = vmatprep.subr.mxu0 0.0
        %1863 = vmatpush1.msra.mxu0 0.0
        %1864 = vmatprep.subr.mxu0 0.0
        %1865 = vmatpush1.msra.mxu0 0.0
        %1866 = vmatprep.subr.mxu0 0.0
        %1867 = vmatpush1.msra.mxu0 0.0
        %1868 = vmatprep.subr.mxu0 0.0
        %1869 = vmatpush1.msra.mxu0 0.0
        %1870 = vmatprep.subr.mxu0 0.0
        %1871 = vmatpush1.msra.mxu0 0.0
        %1872 = vmatprep.subr.mxu0 0.0
        %1873 = vmatpush1.msra.mxu0 0.0
        %1874 = vmatprep.subr.mxu0 0.0
        %1875 = vmatpush1.msra.mxu0 0.0
        %1876 = vmatprep.subr.mxu0 0.0
        %1877 = vmatpush1.msra.mxu0 0.0
        %1878 = vmatprep.subr.mxu0 0.0
        %1879 = vmatpush1.msra.mxu0 0.0
        %1880 = vmatprep.mubr.f32.mxu0 0.0
        %1881 = vmatmul.mubr.f32.gmra.mrb[0].mxu0 %v901
        %v1882 = vpop.f32.mrb[0].mxu0
        %v1883 = vadd.f32 0.0, %v1882
        %v1884 = vpop.f32.mrb[0].mxu0
        %1885 = vmatprep.mubr.f32.mxu0 0.0
        %1886 = vmatmul.mubr.f32.gmra.mrb[0].mxu0 %v904
        %v1887 = vpop.f32.mrb[0].mxu0
        %v1888 = vadd.f32 0.0, %v1887
        %v1889 = vpop.f32.mrb[0].mxu0
        %1890 = vdwg.mxu0
        %v1891 = vadd.f32 %v1797, %v1883
        %v1892 = vadd.f32 %v1798, %v1888
        %vm1893 = vcmask 1045504
        %v1894 = vrot.slane %v341, 2
        %v1895 = vrot.slane %v342, 2
        %v1896 = vsel %vm1893, %v1894, %v1895
        %v1899 = vsel %vm1893, %v1895, 0.0
        %s1900 = scalar_lea.vmem %s244, 1280 [#allocation7]
        %v1901 = vld [vmem:[%s1900] sm:$0xff]
        %v1902 = vld [vmem:[%s1900 + $0x8] sm:$0xff]
        %v1903 = vld [vmem:[%s1900 + $0x10] sm:$0xff]
        %v1904 = vld [vmem:[%s1900 + $0x18] sm:$0xff]
        %v1905 = vld [vmem:[%s1900 + $0x20] sm:$0xff]
        %v1906 = vld [vmem:[%s1900 + $0x28] sm:$0xff]
        %v1907 = vld [vmem:[%s1900 + $0x30] sm:$0xff]
        %v1908 = vld [vmem:[%s1900 + $0x38] sm:$0xff]
        %v1909 = vld [vmem:[%s1900 + $0x40] sm:$0xff]
        %v1910 = vld [vmem:[%s1900 + $0x48] sm:$0xff]
        %v1911 = vld [vmem:[%s1900 + $0x50] sm:$0xff]
        %v1912 = vld [vmem:[%s1900 + $0x58] sm:$0xff]
        %v1913 = vld [vmem:[%s1900 + $0x60] sm:$0xff]
        %v1914 = vld [vmem:[%s1900 + $0x68] sm:$0xff]
        %v1915 = vld [vmem:[%s1900 + $0x70] sm:$0xff]
        %v1916 = vld [vmem:[%s1900 + $0x78] sm:$0xff]
        %1917 = vmatprep.subr.mxu0 0.0
        %1918 = vmatpush1.msra.mxu0 %v1901
        %1919 = vmatprep.subr.mxu0 0.0
        %1920 = vmatpush1.msra.mxu0 %v1902
        %1921 = vmatprep.subr.mxu0 0.0
        %1922 = vmatpush1.msra.mxu0 %v1903
        %1923 = vmatprep.subr.mxu0 0.0
        %1924 = vmatpush1.msra.mxu0 %v1904
        %1925 = vmatprep.subr.mxu0 0.0
        %1926 = vmatpush1.msra.mxu0 %v1905
        %1927 = vmatprep.subr.mxu0 0.0
        %1928 = vmatpush1.msra.mxu0 %v1906
        %1929 = vmatprep.subr.mxu0 0.0
        %1930 = vmatpush1.msra.mxu0 %v1907
        %1931 = vmatprep.subr.mxu0 0.0
        %1932 = vmatpush1.msra.mxu0 %v1908
        %1933 = vmatprep.subr.mxu0 0.0
        %1934 = vmatpush1.msra.mxu0 %v1909
        %1935 = vmatprep.subr.mxu0 0.0
        %1936 = vmatpush1.msra.mxu0 %v1910
        %1937 = vmatprep.subr.mxu0 0.0
        %1938 = vmatpush1.msra.mxu0 %v1911
        %1939 = vmatprep.subr.mxu0 0.0
        %1940 = vmatpush1.msra.mxu0 %v1912
        %1941 = vmatprep.subr.mxu0 0.0
        %1942 = vmatpush1.msra.mxu0 %v1913
        %1943 = vmatprep.subr.mxu0 0.0
        %1944 = vmatpush1.msra.mxu0 %v1914
        %1945 = vmatprep.subr.mxu0 0.0
        %1946 = vmatpush1.msra.mxu0 %v1915
        %1947 = vmatprep.subr.mxu0 0.0
        %1948 = vmatpush1.msra.mxu0 %v1916
        %1949 = vmatprep.subr.mxu0 0.0
        %1950 = vmatpush1.msra.mxu0 0.0
        %1951 = vmatprep.subr.mxu0 0.0
        %1952 = vmatpush1.msra.mxu0 0.0
        %1953 = vmatprep.subr.mxu0 0.0
        %1954 = vmatpush1.msra.mxu0 0.0
        %1955 = vmatprep.subr.mxu0 0.0
        %1956 = vmatpush1.msra.mxu0 0.0
        %1957 = vmatprep.subr.mxu0 0.0
        %1958 = vmatpush1.msra.mxu0 0.0
        %1959 = vmatprep.subr.mxu0 0.0
        %1960 = vmatpush1.msra.mxu0 0.0
        %1961 = vmatprep.subr.mxu0 0.0
        %1962 = vmatpush1.msra.mxu0 0.0
        %1963 = vmatprep.subr.mxu0 0.0
        %1964 = vmatpush1.msra.mxu0 0.0
        %1965 = vmatprep.subr.mxu0 0.0
        %1966 = vmatpush1.msra.mxu0 0.0
        %1967 = vmatprep.subr.mxu0 0.0
        %1968 = vmatpush1.msra.mxu0 0.0
        %1969 = vmatprep.subr.mxu0 0.0
        %1970 = vmatpush1.msra.mxu0 0.0
        %1971 = vmatprep.subr.mxu0 0.0
        %1972 = vmatpush1.msra.mxu0 0.0
        %1973 = vmatprep.subr.mxu0 0.0
        %1974 = vmatpush1.msra.mxu0 0.0
        %1975 = vmatprep.subr.mxu0 0.0
        %1976 = vmatpush1.msra.mxu0 0.0
        %1977 = vmatprep.subr.mxu0 0.0
        %1978 = vmatpush1.msra.mxu0 0.0
        %1979 = vmatprep.subr.mxu0 0.0
        %1980 = vmatpush1.msra.mxu0 0.0
        %1981 = vmatprep.mubr.f32.mxu0 0.0
        %1982 = vmatmul.mubr.f32.gmra.mrb[0].mxu0 %v1896
        %v1983 = vpop.f32.mrb[0].mxu0
        %v1984 = vadd.f32 0.0, %v1983
        %v1985 = vpop.f32.mrb[0].mxu0
        %1986 = vmatprep.mubr.f32.mxu0 0.0
        %1987 = vmatmul.mubr.f32.gmra.mrb[0].mxu0 %v1899
        %v1988 = vpop.f32.mrb[0].mxu0
        %v1989 = vadd.f32 0.0, %v1988
        %v1990 = vpop.f32.mrb[0].mxu0
        %1991 = vdwg.mxu0
        %v1992 = vadd.f32 %v1891, %v1984
        %v1993 = vadd.f32 %v1892, %v1989
        %v1994 = vadd.f32 %v1992, %v1993
        %v1995 = vrot.slane %v1994, 4
        %v1996 = vadd.f32 %v1994, %v1995
        %v1997 = vrot.slane %v1996, 2
        %v1998 = vadd.f32 %v1996, %v1997
        %v1999 = vrot.slane %v1998, 1
        %v2000 = vadd.f32 %v1998, %v1999
        %v2001 = vmul.f32 %v1992, %v1992
        %v2002 = vmul.f32 %v1993, %v1993
        %v2003 = vadd.f32 %v2001, %v2002
        %v2004 = vrot.slane %v2003, 4
        %v2005 = vadd.f32 %v2003, %v2004
        %v2006 = vrot.slane %v2005, 2
        %v2007 = vadd.f32 %v2005, %v2006
        %v2008 = vrot.slane %v2007, 1
        %v2009 = vadd.f32 %v2007, %v2008
        %v2010 = vsel %vm352, %v2000, %v2009
        %2011 = vmatprep.subr.mxu0 0.0
        %2012 = vmatpush1.msra.mxu0 %v478
        %2013 = vmatprep.subr.mxu0 0.0
        %2014 = vmatpush1.msra.mxu0 %v479
        %2015 = vmatprep.subr.mxu0 0.0
        %2016 = vmatpush1.msra.mxu0 %v480
        %2017 = vmatprep.subr.mxu0 0.0
        %2018 = vmatpush1.msra.mxu0 %v481
        %2019 = vmatprep.subr.mxu0 0.0
        %2020 = vmatpush1.msra.mxu0 %v482
        %2021 = vmatprep.subr.mxu0 0.0
        %2022 = vmatpush1.msra.mxu0 %v483
        %2023 = vmatprep.subr.mxu0 0.0
        %2024 = vmatpush1.msra.mxu0 %v484
        %2025 = vmatprep.subr.mxu0 0.0
        %2026 = vmatpush1.msra.mxu0 %v485
        %2027 = vmatprep.subr.mxu0 0.0
        %2028 = vmatpush1.msra.mxu0 %v486
        %2029 = vmatprep.subr.mxu0 0.0
        %2030 = vmatpush1.msra.mxu0 %v487
        %2031 = vmatprep.subr.mxu0 0.0
        %2032 = vmatpush1.msra.mxu0 %v488
        %2033 = vmatprep.subr.mxu0 0.0
        %2034 = vmatpush1.msra.mxu0 %v489
        %2035 = vmatprep.subr.mxu0 0.0
        %2036 = vmatpush1.msra.mxu0 %v490
        %2037 = vmatprep.subr.mxu0 0.0
        %2038 = vmatpush1.msra.mxu0 %v491
        %2039 = vmatprep.subr.mxu0 0.0
        %2040 = vmatpush1.msra.mxu0 %v492
        %2041 = vmatprep.subr.mxu0 0.0
        %2042 = vmatpush1.msra.mxu0 %v493
        %2043 = vmatprep.subr.mxu0 0.0
        %2044 = vmatpush1.msra.mxu0 0.0
        %2045 = vmatprep.subr.mxu0 0.0
        %2046 = vmatpush1.msra.mxu0 0.0
        %2047 = vmatprep.subr.mxu0 0.0
        %2048 = vmatpush1.msra.mxu0 0.0
        %2049 = vmatprep.subr.mxu0 0.0
        %2050 = vmatpush1.msra.mxu0 0.0
        %2051 = vmatprep.subr.mxu0 0.0
        %2052 = vmatpush1.msra.mxu0 0.0
        %2053 = vmatprep.subr.mxu0 0.0
        %2054 = vmatpush1.msra.mxu0 0.0
        %2055 = vmatprep.subr.mxu0 0.0
        %2056 = vmatpush1.msra.mxu0 0.0
        %2057 = vmatprep.subr.mxu0 0.0
        %2058 = vmatpush1.msra.mxu0 0.0
        %2059 = vmatprep.subr.mxu0 0.0
        %2060 = vmatpush1.msra.mxu0 0.0
        %2061 = vmatprep.subr.mxu0 0.0
        %2062 = vmatpush1.msra.mxu0 0.0
        %2063 = vmatprep.subr.mxu0 0.0
        %2064 = vmatpush1.msra.mxu0 0.0
        %2065 = vmatprep.subr.mxu0 0.0
        %2066 = vmatpush1.msra.mxu0 0.0
        %2067 = vmatprep.subr.mxu0 0.0
        %2068 = vmatpush1.msra.mxu0 0.0
        %2069 = vmatprep.subr.mxu0 0.0
        %2070 = vmatpush1.msra.mxu0 0.0
        %2071 = vmatprep.subr.mxu0 0.0
        %2072 = vmatpush1.msra.mxu0 0.0
        %2073 = vmatprep.subr.mxu0 0.0
        %2074 = vmatpush1.msra.mxu0 0.0
        %2075 = vmatprep.mubr.f32.mxu0 0.0
        %2076 = vmatmul.mubr.f32.gmra.mrb[0].mxu0 %v2010
        %v2077 = vpop.f32.mrb[0].mxu0
        %v2078 = vadd.f32 0.0, %v2077
        %v2079 = vpop.f32.mrb[0].mxu0
        %2080 = vdwg.mxu0
        %v2081 = vmul.f32 %v2078, %v2078
        %v2083 = vrot.slane %v2081, 7
        %v2085 = vsub.f32 %v2078, %v2083
        %v2086 = vmax.f32 %v2085, 0.0
        %v2087 = vlaneseq
        %v2088 = vshrl.u32 %v2087, 7
        %v2089 = vsub.s32 0, %v2088
        %v2090 = vrot.slane %v2078, %v2089
        %v2091 = vsub.f32 %v1992, %v2090
        %v2092 = vsub.f32 %v1993, %v2090
        %v2093 = vadd.f32 %v2086, 1e-05
        %v2094 = vrsqrt.pop %v2093
        %v2095 = vlaneseq
        %v2096 = vshrl.u32 %v2095, 7
        %v2097 = vsub.s32 1, %v2096
        %v2098 = vrot.slane %v2094, %v2097
        %v2099 = vmul.f32 %v2091, %v2098
        %v2100 = vmul.f32 %v2092, %v2098
        %v2101 = vmax.f32 %v2099, 0.0
        %v2102 = vmax.f32 %v2100, 0.0
        %v2105 = vrot.slane %v2101, 6
        %v2106 = vrot.slane %v2102, 6
        %v2107 = vsel %vm1514, %v2105, %v2106
        %v2110 = vsel %vm1514, 0.0, %v2105
        %s2111 = scalar_lea.vmem %s244, 1408 [#allocation7]
        %v2112 = vld [vmem:[%s2111] sm:$0xff]
        %v2113 = vld [vmem:[%s2111 + $0x8] sm:$0xff]
        %v2114 = vld [vmem:[%s2111 + $0x10] sm:$0xff]
        %v2115 = vld [vmem:[%s2111 + $0x18] sm:$0xff]
        %v2116 = vld [vmem:[%s2111 + $0x20] sm:$0xff]
        %v2117 = vld [vmem:[%s2111 + $0x28] sm:$0xff]
        %v2118 = vld [vmem:[%s2111 + $0x30] sm:$0xff]
        %v2119 = vld [vmem:[%s2111 + $0x38] sm:$0xff]
        %v2120 = vld [vmem:[%s2111 + $0x40] sm:$0xff]
        %v2121 = vld [vmem:[%s2111 + $0x48] sm:$0xff]
        %v2122 = vld [vmem:[%s2111 + $0x50] sm:$0xff]
        %v2123 = vld [vmem:[%s2111 + $0x58] sm:$0xff]
        %v2124 = vld [vmem:[%s2111 + $0x60] sm:$0xff]
        %v2125 = vld [vmem:[%s2111 + $0x68] sm:$0xff]
        %v2126 = vld [vmem:[%s2111 + $0x70] sm:$0xff]
        %v2127 = vld [vmem:[%s2111 + $0x78] sm:$0xff]
        %v2128 = vrot.slane %v2101, 7
        %v2129 = vrot.slane %v2102, 7
        %v2130 = vsel %vm352, %v2128, %v2129
        %v2133 = vsel %vm352, 0.0, %v2128
        %s2134 = scalar_lea.vmem %s244, 1536 [#allocation7]
        %v2135 = vld [vmem:[%s2134] sm:$0xff]
        %v2136 = vld [vmem:[%s2134 + $0x8] sm:$0xff]
        %v2137 = vld [vmem:[%s2134 + $0x10] sm:$0xff]
        %v2138 = vld [vmem:[%s2134 + $0x18] sm:$0xff]
        %v2139 = vld [vmem:[%s2134 + $0x20] sm:$0xff]
        %v2140 = vld [vmem:[%s2134 + $0x28] sm:$0xff]
        %v2141 = vld [vmem:[%s2134 + $0x30] sm:$0xff]
        %v2142 = vld [vmem:[%s2134 + $0x38] sm:$0xff]
        %v2143 = vld [vmem:[%s2134 + $0x40] sm:$0xff]
        %v2144 = vld [vmem:[%s2134 + $0x48] sm:$0xff]
        %v2145 = vld [vmem:[%s2134 + $0x50] sm:$0xff]
        %v2146 = vld [vmem:[%s2134 + $0x58] sm:$0xff]
        %v2147 = vld [vmem:[%s2134 + $0x60] sm:$0xff]
        %v2148 = vld [vmem:[%s2134 + $0x68] sm:$0xff]
        %v2149 = vld [vmem:[%s2134 + $0x70] sm:$0xff]
        %v2150 = vld [vmem:[%s2134 + $0x78] sm:$0xff]
        %2151 = vmatprep.subr.mxu0 0.0
        %2152 = vmatpush1.msra.mxu0 %v2135
        %2153 = vmatprep.subr.mxu0 0.0
        %2154 = vmatpush1.msra.mxu0 %v2136
        %2155 = vmatprep.subr.mxu0 0.0
        %2156 = vmatpush1.msra.mxu0 %v2137
        %2157 = vmatprep.subr.mxu0 0.0
        %2158 = vmatpush1.msra.mxu0 %v2138
        %2159 = vmatprep.subr.mxu0 0.0
        %2160 = vmatpush1.msra.mxu0 %v2139
        %2161 = vmatprep.subr.mxu0 0.0
        %2162 = vmatpush1.msra.mxu0 %v2140
        %2163 = vmatprep.subr.mxu0 0.0
        %2164 = vmatpush1.msra.mxu0 %v2141
        %2165 = vmatprep.subr.mxu0 0.0
        %2166 = vmatpush1.msra.mxu0 %v2142
        %2167 = vmatprep.subr.mxu0 0.0
        %2168 = vmatpush1.msra.mxu0 %v2143
        %2169 = vmatprep.subr.mxu0 0.0
        %2170 = vmatpush1.msra.mxu0 %v2144
        %2171 = vmatprep.subr.mxu0 0.0
        %2172 = vmatpush1.msra.mxu0 %v2145
        %2173 = vmatprep.subr.mxu0 0.0
        %2174 = vmatpush1.msra.mxu0 %v2146
        %2175 = vmatprep.subr.mxu0 0.0
        %2176 = vmatpush1.msra.mxu0 %v2147
        %2177 = vmatprep.subr.mxu0 0.0
        %2178 = vmatpush1.msra.mxu0 %v2148
        %2179 = vmatprep.subr.mxu0 0.0
        %2180 = vmatpush1.msra.mxu0 %v2149
        %2181 = vmatprep.subr.mxu0 0.0
        %2182 = vmatpush1.msra.mxu0 %v2150
        %2183 = vmatprep.subr.mxu0 0.0
        %2184 = vmatpush1.msra.mxu0 0.0
        %2185 = vmatprep.subr.mxu0 0.0
        %2186 = vmatpush1.msra.mxu0 0.0
        %2187 = vmatprep.subr.mxu0 0.0
        %2188 = vmatpush1.msra.mxu0 0.0
        %2189 = vmatprep.subr.mxu0 0.0
        %2190 = vmatpush1.msra.mxu0 0.0
        %2191 = vmatprep.subr.mxu0 0.0
        %2192 = vmatpush1.msra.mxu0 0.0
        %2193 = vmatprep.subr.mxu0 0.0
        %2194 = vmatpush1.msra.mxu0 0.0
        %2195 = vmatprep.subr.mxu0 0.0
        %2196 = vmatpush1.msra.mxu0 0.0
        %2197 = vmatprep.subr.mxu0 0.0
        %2198 = vmatpush1.msra.mxu0 0.0
        %2199 = vmatprep.subr.mxu0 0.0
        %2200 = vmatpush1.msra.mxu0 0.0
        %2201 = vmatprep.subr.mxu0 0.0
        %2202 = vmatpush1.msra.mxu0 0.0
        %2203 = vmatprep.subr.mxu0 0.0
        %2204 = vmatpush1.msra.mxu0 0.0
        %2205 = vmatprep.subr.mxu0 0.0
        %2206 = vmatpush1.msra.mxu0 0.0
        %2207 = vmatprep.subr.mxu0 0.0
        %2208 = vmatpush1.msra.mxu0 0.0
        %2209 = vmatprep.subr.mxu0 0.0
        %2210 = vmatpush1.msra.mxu0 0.0
        %2211 = vmatprep.subr.mxu0 0.0
        %2212 = vmatpush1.msra.mxu0 0.0
        %2213 = vmatprep.subr.mxu0 0.0
        %2214 = vmatpush1.msra.mxu0 0.0
        %2215 = vmatprep.mubr.f32.mxu0 0.0
        %2216 = vmatmul.mubr.f32.gmra.mrb[0].mxu0 %v2133
        %v2217 = vpop.f32.mrb[0].mxu0
        %v2218 = vadd.f32 0.0, %v2217
        %v2219 = vpop.f32.mrb[0].mxu0
        %2220 = vmatprep.mubr.f32.mxu0 0.0
        %2221 = vmatmul.mubr.f32.gmra.mrb[0].mxu0 %v2130
        %v2222 = vpop.f32.mrb[0].mxu0
        %v2223 = vadd.f32 0.0, %v2222
        %v2224 = vpop.f32.mrb[0].mxu0
        %2225 = vdwg.mxu0
        %2226 = vmatprep.subr.mxu0 0.0
        %2227 = vmatpush1.msra.mxu0 %v2112
        %2228 = vmatprep.subr.mxu0 0.0
        %2229 = vmatpush1.msra.mxu0 %v2113
        %2230 = vmatprep.subr.mxu0 0.0
        %2231 = vmatpush1.msra.mxu0 %v2114
        %2232 = vmatprep.subr.mxu0 0.0
        %2233 = vmatpush1.msra.mxu0 %v2115
        %2234 = vmatprep.subr.mxu0 0.0
        %2235 = vmatpush1.msra.mxu0 %v2116
        %2236 = vmatprep.subr.mxu0 0.0
        %2237 = vmatpush1.msra.mxu0 %v2117
        %2238 = vmatprep.subr.mxu0 0.0
        %2239 = vmatpush1.msra.mxu0 %v2118
        %2240 = vmatprep.subr.mxu0 0.0
        %2241 = vmatpush1.msra.mxu0 %v2119
        %2242 = vmatprep.subr.mxu0 0.0
        %2243 = vmatpush1.msra.mxu0 %v2120
        %2244 = vmatprep.subr.mxu0 0.0
        %2245 = vmatpush1.msra.mxu0 %v2121
        %2246 = vmatprep.subr.mxu0 0.0
        %2247 = vmatpush1.msra.mxu0 %v2122
        %2248 = vmatprep.subr.mxu0 0.0
        %2249 = vmatpush1.msra.mxu0 %v2123
        %2250 = vmatprep.subr.mxu0 0.0
        %2251 = vmatpush1.msra.mxu0 %v2124
        %2252 = vmatprep.subr.mxu0 0.0
        %2253 = vmatpush1.msra.mxu0 %v2125
        %2254 = vmatprep.subr.mxu0 0.0
        %2255 = vmatpush1.msra.mxu0 %v2126
        %2256 = vmatprep.subr.mxu0 0.0
        %2257 = vmatpush1.msra.mxu0 %v2127
        %2258 = vmatprep.subr.mxu0 0.0
        %2259 = vmatpush1.msra.mxu0 0.0
        %2260 = vmatprep.subr.mxu0 0.0
        %2261 = vmatpush1.msra.mxu0 0.0
        %2262 = vmatprep.subr.mxu0 0.0
        %2263 = vmatpush1.msra.mxu0 0.0
        %2264 = vmatprep.subr.mxu0 0.0
        %2265 = vmatpush1.msra.mxu0 0.0
        %2266 = vmatprep.subr.mxu0 0.0
        %2267 = vmatpush1.msra.mxu0 0.0
        %2268 = vmatprep.subr.mxu0 0.0
        %2269 = vmatpush1.msra.mxu0 0.0
        %2270 = vmatprep.subr.mxu0 0.0
        %2271 = vmatpush1.msra.mxu0 0.0
        %2272 = vmatprep.subr.mxu0 0.0
        %2273 = vmatpush1.msra.mxu0 0.0
        %2274 = vmatprep.subr.mxu0 0.0
        %2275 = vmatpush1.msra.mxu0 0.0
        %2276 = vmatprep.subr.mxu0 0.0
        %2277 = vmatpush1.msra.mxu0 0.0
        %2278 = vmatprep.subr.mxu0 0.0
        %2279 = vmatpush1.msra.mxu0 0.0
        %2280 = vmatprep.subr.mxu0 0.0
        %2281 = vmatpush1.msra.mxu0 0.0
        %2282 = vmatprep.subr.mxu0 0.0
        %2283 = vmatpush1.msra.mxu0 0.0
        %2284 = vmatprep.subr.mxu0 0.0
        %2285 = vmatpush1.msra.mxu0 0.0
        %2286 = vmatprep.subr.mxu0 0.0
        %2287 = vmatpush1.msra.mxu0 0.0
        %2288 = vmatprep.subr.mxu0 0.0
        %2289 = vmatpush1.msra.mxu0 0.0
        %2290 = vmatprep.mubr.f32.mxu0 0.0
        %2291 = vmatmul.mubr.f32.gmra.mrb[0].mxu0 %v2110
        %v2292 = vpop.f32.mrb[0].mxu0
        %v2293 = vadd.f32 %v2218, %v2292
        %v2294 = vpop.f32.mrb[0].mxu0
        %2295 = vmatprep.mubr.f32.mxu0 0.0
        %2296 = vmatmul.mubr.f32.gmra.mrb[0].mxu0 %v2107
        %v2297 = vpop.f32.mrb[0].mxu0
        %v2298 = vadd.f32 %v2223, %v2297
        %v2299 = vpop.f32.mrb[0].mxu0
        %2300 = vdwg.mxu0
        %s2301 = scalar_lea.vmem %s244, 1664 [#allocation7]
        %v2302 = vld [vmem:[%s2301] sm:$0xff]
        %v2303 = vld [vmem:[%s2301 + $0x8] sm:$0xff]
        %v2304 = vld [vmem:[%s2301 + $0x10] sm:$0xff]
        %v2305 = vld [vmem:[%s2301 + $0x18] sm:$0xff]
        %v2306 = vld [vmem:[%s2301 + $0x20] sm:$0xff]
        %v2307 = vld [vmem:[%s2301 + $0x28] sm:$0xff]
        %v2308 = vld [vmem:[%s2301 + $0x30] sm:$0xff]
        %v2309 = vld [vmem:[%s2301 + $0x38] sm:$0xff]
        %v2310 = vld [vmem:[%s2301 + $0x40] sm:$0xff]
        %v2311 = vld [vmem:[%s2301 + $0x48] sm:$0xff]
        %v2312 = vld [vmem:[%s2301 + $0x50] sm:$0xff]
        %v2313 = vld [vmem:[%s2301 + $0x58] sm:$0xff]
        %v2314 = vld [vmem:[%s2301 + $0x60] sm:$0xff]
        %v2315 = vld [vmem:[%s2301 + $0x68] sm:$0xff]
        %v2316 = vld [vmem:[%s2301 + $0x70] sm:$0xff]
        %v2317 = vld [vmem:[%s2301 + $0x78] sm:$0xff]
        %2318 = vmatprep.subr.mxu0 0.0
        %2319 = vmatpush1.msra.mxu0 %v2302
        %2320 = vmatprep.subr.mxu0 0.0
        %2321 = vmatpush1.msra.mxu0 %v2303
        %2322 = vmatprep.subr.mxu0 0.0
        %2323 = vmatpush1.msra.mxu0 %v2304
        %2324 = vmatprep.subr.mxu0 0.0
        %2325 = vmatpush1.msra.mxu0 %v2305
        %2326 = vmatprep.subr.mxu0 0.0
        %2327 = vmatpush1.msra.mxu0 %v2306
        %2328 = vmatprep.subr.mxu0 0.0
        %2329 = vmatpush1.msra.mxu0 %v2307
        %2330 = vmatprep.subr.mxu0 0.0
        %2331 = vmatpush1.msra.mxu0 %v2308
        %2332 = vmatprep.subr.mxu0 0.0
        %2333 = vmatpush1.msra.mxu0 %v2309
        %2334 = vmatprep.subr.mxu0 0.0
        %2335 = vmatpush1.msra.mxu0 %v2310
        %2336 = vmatprep.subr.mxu0 0.0
        %2337 = vmatpush1.msra.mxu0 %v2311
        %2338 = vmatprep.subr.mxu0 0.0
        %2339 = vmatpush1.msra.mxu0 %v2312
        %2340 = vmatprep.subr.mxu0 0.0
        %2341 = vmatpush1.msra.mxu0 %v2313
        %2342 = vmatprep.subr.mxu0 0.0
        %2343 = vmatpush1.msra.mxu0 %v2314
        %2344 = vmatprep.subr.mxu0 0.0
        %2345 = vmatpush1.msra.mxu0 %v2315
        %2346 = vmatprep.subr.mxu0 0.0
        %2347 = vmatpush1.msra.mxu0 %v2316
        %2348 = vmatprep.subr.mxu0 0.0
        %2349 = vmatpush1.msra.mxu0 %v2317
        %2350 = vmatprep.subr.mxu0 0.0
        %2351 = vmatpush1.msra.mxu0 0.0
        %2352 = vmatprep.subr.mxu0 0.0
        %2353 = vmatpush1.msra.mxu0 0.0
        %2354 = vmatprep.subr.mxu0 0.0
        %2355 = vmatpush1.msra.mxu0 0.0
        %2356 = vmatprep.subr.mxu0 0.0
        %2357 = vmatpush1.msra.mxu0 0.0
        %2358 = vmatprep.subr.mxu0 0.0
        %2359 = vmatpush1.msra.mxu0 0.0
        %2360 = vmatprep.subr.mxu0 0.0
        %2361 = vmatpush1.msra.mxu0 0.0
        %2362 = vmatprep.subr.mxu0 0.0
        %2363 = vmatpush1.msra.mxu0 0.0
        %2364 = vmatprep.subr.mxu0 0.0
        %2365 = vmatpush1.msra.mxu0 0.0
        %2366 = vmatprep.subr.mxu0 0.0
        %2367 = vmatpush1.msra.mxu0 0.0
        %2368 = vmatprep.subr.mxu0 0.0
        %2369 = vmatpush1.msra.mxu0 0.0
        %2370 = vmatprep.subr.mxu0 0.0
        %2371 = vmatpush1.msra.mxu0 0.0
        %2372 = vmatprep.subr.mxu0 0.0
        %2373 = vmatpush1.msra.mxu0 0.0
        %2374 = vmatprep.subr.mxu0 0.0
        %2375 = vmatpush1.msra.mxu0 0.0
        %2376 = vmatprep.subr.mxu0 0.0
        %2377 = vmatpush1.msra.mxu0 0.0
        %2378 = vmatprep.subr.mxu0 0.0
        %2379 = vmatpush1.msra.mxu0 0.0
        %2380 = vmatprep.subr.mxu0 0.0
        %2381 = vmatpush1.msra.mxu0 0.0
        %2382 = vmatprep.mubr.f32.mxu0 0.0
        %2383 = vmatmul.mubr.f32.gmra.mrb[0].mxu0 %v2101
        %v2384 = vpop.f32.mrb[0].mxu0
        %v2385 = vadd.f32 0.0, %v2384
        %v2386 = vpop.f32.mrb[0].mxu0
        %2387 = vmatprep.mubr.f32.mxu0 0.0
        %2388 = vmatmul.mubr.f32.gmra.mrb[0].mxu0 %v2102
        %v2389 = vpop.f32.mrb[0].mxu0
        %v2390 = vadd.f32 0.0, %v2389
        %v2391 = vpop.f32.mrb[0].mxu0
        %2392 = vdwg.mxu0
        %v2393 = vadd.f32 %v2293, %v2385
        %v2394 = vadd.f32 %v2298, %v2390
        %v2395 = vrot.slane %v2101, 1
        %v2396 = vrot.slane %v2102, 1
        %v2397 = vsel %vm420, %v2395, %v2396
        %v2400 = vsel %vm420, %v2396, 0.0
        %s2401 = scalar_lea.vmem %s244, 1792 [#allocation7]
        %v2402 = vld [vmem:[%s2401] sm:$0xff]
        %v2403 = vld [vmem:[%s2401 + $0x8] sm:$0xff]
        %v2404 = vld [vmem:[%s2401 + $0x10] sm:$0xff]
        %v2405 = vld [vmem:[%s2401 + $0x18] sm:$0xff]
        %v2406 = vld [vmem:[%s2401 + $0x20] sm:$0xff]
        %v2407 = vld [vmem:[%s2401 + $0x28] sm:$0xff]
        %v2408 = vld [vmem:[%s2401 + $0x30] sm:$0xff]
        %v2409 = vld [vmem:[%s2401 + $0x38] sm:$0xff]
        %v2410 = vld [vmem:[%s2401 + $0x40] sm:$0xff]
        %v2411 = vld [vmem:[%s2401 + $0x48] sm:$0xff]
        %v2412 = vld [vmem:[%s2401 + $0x50] sm:$0xff]
        %v2413 = vld [vmem:[%s2401 + $0x58] sm:$0xff]
        %v2414 = vld [vmem:[%s2401 + $0x60] sm:$0xff]
        %v2415 = vld [vmem:[%s2401 + $0x68] sm:$0xff]
        %v2416 = vld [vmem:[%s2401 + $0x70] sm:$0xff]
        %v2417 = vld [vmem:[%s2401 + $0x78] sm:$0xff]
        %2418 = vmatprep.subr.mxu0 0.0
        %2419 = vmatpush1.msra.mxu0 %v2402
        %2420 = vmatprep.subr.mxu0 0.0
        %2421 = vmatpush1.msra.mxu0 %v2403
        %2422 = vmatprep.subr.mxu0 0.0
        %2423 = vmatpush1.msra.mxu0 %v2404
        %2424 = vmatprep.subr.mxu0 0.0
        %2425 = vmatpush1.msra.mxu0 %v2405
        %2426 = vmatprep.subr.mxu0 0.0
        %2427 = vmatpush1.msra.mxu0 %v2406
        %2428 = vmatprep.subr.mxu0 0.0
        %2429 = vmatpush1.msra.mxu0 %v2407
        %2430 = vmatprep.subr.mxu0 0.0
        %2431 = vmatpush1.msra.mxu0 %v2408
        %2432 = vmatprep.subr.mxu0 0.0
        %2433 = vmatpush1.msra.mxu0 %v2409
        %2434 = vmatprep.subr.mxu0 0.0
        %2435 = vmatpush1.msra.mxu0 %v2410
        %2436 = vmatprep.subr.mxu0 0.0
        %2437 = vmatpush1.msra.mxu0 %v2411
        %2438 = vmatprep.subr.mxu0 0.0
        %2439 = vmatpush1.msra.mxu0 %v2412
        %2440 = vmatprep.subr.mxu0 0.0
        %2441 = vmatpush1.msra.mxu0 %v2413
        %2442 = vmatprep.subr.mxu0 0.0
        %2443 = vmatpush1.msra.mxu0 %v2414
        %2444 = vmatprep.subr.mxu0 0.0
        %2445 = vmatpush1.msra.mxu0 %v2415
        %2446 = vmatprep.subr.mxu0 0.0
        %2447 = vmatpush1.msra.mxu0 %v2416
        %2448 = vmatprep.subr.mxu0 0.0
        %2449 = vmatpush1.msra.mxu0 %v2417
        %2450 = vmatprep.subr.mxu0 0.0
        %2451 = vmatpush1.msra.mxu0 0.0
        %2452 = vmatprep.subr.mxu0 0.0
        %2453 = vmatpush1.msra.mxu0 0.0
        %2454 = vmatprep.subr.mxu0 0.0
        %2455 = vmatpush1.msra.mxu0 0.0
        %2456 = vmatprep.subr.mxu0 0.0
        %2457 = vmatpush1.msra.mxu0 0.0
        %2458 = vmatprep.subr.mxu0 0.0
        %2459 = vmatpush1.msra.mxu0 0.0
        %2460 = vmatprep.subr.mxu0 0.0
        %2461 = vmatpush1.msra.mxu0 0.0
        %2462 = vmatprep.subr.mxu0 0.0
        %2463 = vmatpush1.msra.mxu0 0.0
        %2464 = vmatprep.subr.mxu0 0.0
        %2465 = vmatpush1.msra.mxu0 0.0
        %2466 = vmatprep.subr.mxu0 0.0
        %2467 = vmatpush1.msra.mxu0 0.0
        %2468 = vmatprep.subr.mxu0 0.0
        %2469 = vmatpush1.msra.mxu0 0.0
        %2470 = vmatprep.subr.mxu0 0.0
        %2471 = vmatpush1.msra.mxu0 0.0
        %2472 = vmatprep.subr.mxu0 0.0
        %2473 = vmatpush1.msra.mxu0 0.0
        %2474 = vmatprep.subr.mxu0 0.0
        %2475 = vmatpush1.msra.mxu0 0.0
        %2476 = vmatprep.subr.mxu0 0.0
        %2477 = vmatpush1.msra.mxu0 0.0
        %2478 = vmatprep.subr.mxu0 0.0
        %2479 = vmatpush1.msra.mxu0 0.0
        %2480 = vmatprep.subr.mxu0 0.0
        %2481 = vmatpush1.msra.mxu0 0.0
        %2482 = vmatprep.mubr.f32.mxu0 0.0
        %2483 = vmatmul.mubr.f32.gmra.mrb[0].mxu0 %v2397
        %v2484 = vpop.f32.mrb[0].mxu0
        %v2485 = vadd.f32 0.0, %v2484
        %v2486 = vpop.f32.mrb[0].mxu0
        %2487 = vmatprep.mubr.f32.mxu0 0.0
        %2488 = vmatmul.mubr.f32.gmra.mrb[0].mxu0 %v2400
        %v2489 = vpop.f32.mrb[0].mxu0
        %v2490 = vadd.f32 0.0, %v2489
        %v2491 = vpop.f32.mrb[0].mxu0
        %2492 = vdwg.mxu0
        %v2493 = vadd.f32 %v2393, %v2485
        %v2494 = vadd.f32 %v2394, %v2490
        %v2495 = vrot.slane %v2101, 2
        %v2496 = vrot.slane %v2102, 2
        %v2497 = vsel %vm1893, %v2495, %v2496
        %v2500 = vsel %vm1893, %v2496, 0.0
        %s2501 = scalar_lea.vmem %s244, 1920 [#allocation7]
        %v2502 = vld [vmem:[%s2501] sm:$0xff]
        %v2503 = vld [vmem:[%s2501 + $0x8] sm:$0xff]
        %v2504 = vld [vmem:[%s2501 + $0x10] sm:$0xff]
        %v2505 = vld [vmem:[%s2501 + $0x18] sm:$0xff]
        %v2506 = vld [vmem:[%s2501 + $0x20] sm:$0xff]
        %v2507 = vld [vmem:[%s2501 + $0x28] sm:$0xff]
        %v2508 = vld [vmem:[%s2501 + $0x30] sm:$0xff]
        %v2509 = vld [vmem:[%s2501 + $0x38] sm:$0xff]
        %v2510 = vld [vmem:[%s2501 + $0x40] sm:$0xff]
        %v2511 = vld [vmem:[%s2501 + $0x48] sm:$0xff]
        %v2512 = vld [vmem:[%s2501 + $0x50] sm:$0xff]
        %v2513 = vld [vmem:[%s2501 + $0x58] sm:$0xff]
        %v2514 = vld [vmem:[%s2501 + $0x60] sm:$0xff]
        %v2515 = vld [vmem:[%s2501 + $0x68] sm:$0xff]
        %v2516 = vld [vmem:[%s2501 + $0x70] sm:$0xff]
        %v2517 = vld [vmem:[%s2501 + $0x78] sm:$0xff]
        %2518 = vmatprep.subr.mxu0 0.0
        %2519 = vmatpush1.msra.mxu0 %v2502
        %2520 = vmatprep.subr.mxu0 0.0
        %2521 = vmatpush1.msra.mxu0 %v2503
        %2522 = vmatprep.subr.mxu0 0.0
        %2523 = vmatpush1.msra.mxu0 %v2504
        %2524 = vmatprep.subr.mxu0 0.0
        %2525 = vmatpush1.msra.mxu0 %v2505
        %2526 = vmatprep.subr.mxu0 0.0
        %2527 = vmatpush1.msra.mxu0 %v2506
        %2528 = vmatprep.subr.mxu0 0.0
        %2529 = vmatpush1.msra.mxu0 %v2507
        %2530 = vmatprep.subr.mxu0 0.0
        %2531 = vmatpush1.msra.mxu0 %v2508
        %2532 = vmatprep.subr.mxu0 0.0
        %2533 = vmatpush1.msra.mxu0 %v2509
        %2534 = vmatprep.subr.mxu0 0.0
        %2535 = vmatpush1.msra.mxu0 %v2510
        %2536 = vmatprep.subr.mxu0 0.0
        %2537 = vmatpush1.msra.mxu0 %v2511
        %2538 = vmatprep.subr.mxu0 0.0
        %2539 = vmatpush1.msra.mxu0 %v2512
        %2540 = vmatprep.subr.mxu0 0.0
        %2541 = vmatpush1.msra.mxu0 %v2513
        %2542 = vmatprep.subr.mxu0 0.0
        %2543 = vmatpush1.msra.mxu0 %v2514
        %2544 = vmatprep.subr.mxu0 0.0
        %2545 = vmatpush1.msra.mxu0 %v2515
        %2546 = vmatprep.subr.mxu0 0.0
        %2547 = vmatpush1.msra.mxu0 %v2516
        %2548 = vmatprep.subr.mxu0 0.0
        %2549 = vmatpush1.msra.mxu0 %v2517
        %2550 = vmatprep.subr.mxu0 0.0
        %2551 = vmatpush1.msra.mxu0 0.0
        %2552 = vmatprep.subr.mxu0 0.0
        %2553 = vmatpush1.msra.mxu0 0.0
        %2554 = vmatprep.subr.mxu0 0.0
        %2555 = vmatpush1.msra.mxu0 0.0
        %2556 = vmatprep.subr.mxu0 0.0
        %2557 = vmatpush1.msra.mxu0 0.0
        %2558 = vmatprep.subr.mxu0 0.0
        %2559 = vmatpush1.msra.mxu0 0.0
        %2560 = vmatprep.subr.mxu0 0.0
        %2561 = vmatpush1.msra.mxu0 0.0
        %2562 = vmatprep.subr.mxu0 0.0
        %2563 = vmatpush1.msra.mxu0 0.0
        %2564 = vmatprep.subr.mxu0 0.0
        %2565 = vmatpush1.msra.mxu0 0.0
        %2566 = vmatprep.subr.mxu0 0.0
        %2567 = vmatpush1.msra.mxu0 0.0
        %2568 = vmatprep.subr.mxu0 0.0
        %2569 = vmatpush1.msra.mxu0 0.0
        %2570 = vmatprep.subr.mxu0 0.0
        %2571 = vmatpush1.msra.mxu0 0.0
        %2572 = vmatprep.subr.mxu0 0.0
        %2573 = vmatpush1.msra.mxu0 0.0
        %2574 = vmatprep.subr.mxu0 0.0
        %2575 = vmatpush1.msra.mxu0 0.0
        %2576 = vmatprep.subr.mxu0 0.0
        %2577 = vmatpush1.msra.mxu0 0.0
        %2578 = vmatprep.subr.mxu0 0.0
        %2579 = vmatpush1.msra.mxu0 0.0
        %2580 = vmatprep.subr.mxu0 0.0
        %2581 = vmatpush1.msra.mxu0 0.0
        %2582 = vmatprep.mubr.f32.mxu0 0.0
        %2583 = vmatmul.mubr.f32.gmra.mrb[0].mxu0 %v2497
        %v2584 = vpop.f32.mrb[0].mxu0
        %v2585 = vadd.f32 0.0, %v2584
        %v2586 = vpop.f32.mrb[0].mxu0
        %2587 = vmatprep.mubr.f32.mxu0 0.0
        %2588 = vmatmul.mubr.f32.gmra.mrb[0].mxu0 %v2500
        %v2589 = vpop.f32.mrb[0].mxu0
        %v2590 = vadd.f32 0.0, %v2589
        %v2591 = vpop.f32.mrb[0].mxu0
        %2592 = vdwg.mxu0
        %v2593 = vadd.f32 %v2493, %v2585
        %v2594 = vadd.f32 %v2494, %v2590
        %v2595 = vld [vmem:[%s273 + $0x5] sm:$0x1]
        %v2596 = vadd.f32 %v2593, %v2594
        %v2597 = vrot.slane %v2596, 4
        %v2598 = vadd.f32 %v2596, %v2597
        %v2599 = vrot.slane %v2598, 2
        %v2600 = vadd.f32 %v2598, %v2599
        %v2601 = vrot.slane %v2600, 1
        %v2602 = vadd.f32 %v2600, %v2601
        %v2603 = vmul.f32 %v2593, %v2593
        %v2604 = vmul.f32 %v2594, %v2594
        %v2605 = vadd.f32 %v2603, %v2604
        %v2606 = vrot.slane %v2605, 4
        %v2607 = vadd.f32 %v2605, %v2606
        %v2608 = vrot.slane %v2607, 2
        %v2609 = vadd.f32 %v2607, %v2608
        %v2610 = vrot.slane %v2609, 1
        %v2611 = vadd.f32 %v2609, %v2610
        %v2612 = vsel %vm352, %v2602, %v2611
        %2613 = vmatprep.subr.mxu0 0.0
        %2614 = vmatpush1.msra.mxu0 %v478
        %2615 = vmatprep.subr.mxu0 0.0
        %2616 = vmatpush1.msra.mxu0 %v479
        %2617 = vmatprep.subr.mxu0 0.0
        %2618 = vmatpush1.msra.mxu0 %v480
        %2619 = vmatprep.subr.mxu0 0.0
        %2620 = vmatpush1.msra.mxu0 %v481
        %2621 = vmatprep.subr.mxu0 0.0
        %2622 = vmatpush1.msra.mxu0 %v482
        %2623 = vmatprep.subr.mxu0 0.0
        %2624 = vmatpush1.msra.mxu0 %v483
        %2625 = vmatprep.subr.mxu0 0.0
        %2626 = vmatpush1.msra.mxu0 %v484
        %2627 = vmatprep.subr.mxu0 0.0
        %2628 = vmatpush1.msra.mxu0 %v485
        %2629 = vmatprep.subr.mxu0 0.0
        %2630 = vmatpush1.msra.mxu0 %v486
        %2631 = vmatprep.subr.mxu0 0.0
        %2632 = vmatpush1.msra.mxu0 %v487
        %2633 = vmatprep.subr.mxu0 0.0
        %2634 = vmatpush1.msra.mxu0 %v488
        %2635 = vmatprep.subr.mxu0 0.0
        %2636 = vmatpush1.msra.mxu0 %v489
        %2637 = vmatprep.subr.mxu0 0.0
        %2638 = vmatpush1.msra.mxu0 %v490
        %2639 = vmatprep.subr.mxu0 0.0
        %2640 = vmatpush1.msra.mxu0 %v491
        %2641 = vmatprep.subr.mxu0 0.0
        %2642 = vmatpush1.msra.mxu0 %v492
        %2643 = vmatprep.subr.mxu0 0.0
        %2644 = vmatpush1.msra.mxu0 %v493
        %2645 = vmatprep.subr.mxu0 0.0
        %2646 = vmatpush1.msra.mxu0 0.0
        %2647 = vmatprep.subr.mxu0 0.0
        %2648 = vmatpush1.msra.mxu0 0.0
        %2649 = vmatprep.subr.mxu0 0.0
        %2650 = vmatpush1.msra.mxu0 0.0
        %2651 = vmatprep.subr.mxu0 0.0
        %2652 = vmatpush1.msra.mxu0 0.0
        %2653 = vmatprep.subr.mxu0 0.0
        %2654 = vmatpush1.msra.mxu0 0.0
        %2655 = vmatprep.subr.mxu0 0.0
        %2656 = vmatpush1.msra.mxu0 0.0
        %2657 = vmatprep.subr.mxu0 0.0
        %2658 = vmatpush1.msra.mxu0 0.0
        %2659 = vmatprep.subr.mxu0 0.0
        %2660 = vmatpush1.msra.mxu0 0.0
        %2661 = vmatprep.subr.mxu0 0.0
        %2662 = vmatpush1.msra.mxu0 0.0
        %2663 = vmatprep.subr.mxu0 0.0
        %2664 = vmatpush1.msra.mxu0 0.0
        %2665 = vmatprep.subr.mxu0 0.0
        %2666 = vmatpush1.msra.mxu0 0.0
        %2667 = vmatprep.subr.mxu0 0.0
        %2668 = vmatpush1.msra.mxu0 0.0
        %2669 = vmatprep.subr.mxu0 0.0
        %2670 = vmatpush1.msra.mxu0 0.0
        %2671 = vmatprep.subr.mxu0 0.0
        %2672 = vmatpush1.msra.mxu0 0.0
        %2673 = vmatprep.subr.mxu0 0.0
        %2674 = vmatpush1.msra.mxu0 0.0
        %2675 = vmatprep.subr.mxu0 0.0
        %2676 = vmatpush1.msra.mxu0 0.0
        %2677 = vmatprep.mubr.f32.mxu0 0.0
        %2678 = vmatmul.mubr.f32.gmra.mrb[0].mxu0 %v2612
        %v2679 = vpop.f32.mrb[0].mxu0
        %v2680 = vadd.f32 0.0, %v2679
        %v2681 = vpop.f32.mrb[0].mxu0
        %2682 = vdwg.mxu0
        %v2683 = vmul.f32 %v2680, %v2680
        %v2685 = vrot.slane %v2683, 7
        %v2687 = vsub.f32 %v2680, %v2685
        %v2688 = vmax.f32 %v2687, 0.0
        %v2689 = vlaneseq
        %v2690 = vshrl.u32 %v2689, 7
        %v2691 = vsub.s32 0, %v2690
        %v2692 = vrot.slane %v2680, %v2691
        %v2693 = vsub.f32 %v2593, %v2692
        %v2694 = vsub.f32 %v2594, %v2692
        %v2695 = vadd.f32 %v2688, 1e-05
        %v2696 = vrsqrt.pop %v2695
        %v2698 = vrot.slane %v2595, 7
        %v2700 = vmul.f32 %v2696, %v2698
        %v2701 = vlaneseq
        %v2702 = vshrl.u32 %v2701, 7
        %v2703 = vsub.s32 1, %v2702
        %v2704 = vrot.slane %v2700, %v2703
        %v2705 = vmul.f32 %v2693, %v2704
        %v2706 = vmul.f32 %v2694, %v2704
        %v2707 = vadd.f32 %v1512, %v2705
        %v2708 = vadd.f32 %v1513, %v2706
        %s2709 = scalar_lea.vmem %s244, 2048 [#allocation7]
        %v2710 = vld [vmem:[%s2709] sm:$0xff]
        %v2711 = vld [vmem:[%s2709 + $0x8] sm:$0xff]
        %v2712 = vld [vmem:[%s2709 + $0x10] sm:$0xff]
        %v2713 = vld [vmem:[%s2709 + $0x18] sm:$0xff]
        %v2714 = vld [vmem:[%s2709 + $0x20] sm:$0xff]
        %v2715 = vld [vmem:[%s2709 + $0x28] sm:$0xff]
        %v2716 = vld [vmem:[%s2709 + $0x30] sm:$0xff]
        %v2717 = vld [vmem:[%s2709 + $0x38] sm:$0xff]
        %v2718 = vld [vmem:[%s2709 + $0x40] sm:$0xff]
        %v2719 = vld [vmem:[%s2709 + $0x48] sm:$0xff]
        %v2720 = vld [vmem:[%s2709 + $0x50] sm:$0xff]
        %v2721 = vld [vmem:[%s2709 + $0x58] sm:$0xff]
        %v2722 = vld [vmem:[%s2709 + $0x60] sm:$0xff]
        %v2723 = vld [vmem:[%s2709 + $0x68] sm:$0xff]
        %v2724 = vld [vmem:[%s2709 + $0x70] sm:$0xff]
        %v2725 = vld [vmem:[%s2709 + $0x78] sm:$0xff]
        %s2726 = scalar_lea.vmem %s244, 2176 [#allocation7]
        %v2727 = vld [vmem:[%s2726] sm:$0xff]
        %v2728 = vld [vmem:[%s2726 + $0x8] sm:$0xff]
        %v2729 = vld [vmem:[%s2726 + $0x10] sm:$0xff]
        %v2730 = vld [vmem:[%s2726 + $0x18] sm:$0xff]
        %v2731 = vld [vmem:[%s2726 + $0x20] sm:$0xff]
        %v2732 = vld [vmem:[%s2726 + $0x28] sm:$0xff]
        %v2733 = vld [vmem:[%s2726 + $0x30] sm:$0xff]
        %v2734 = vld [vmem:[%s2726 + $0x38] sm:$0xff]
        %v2735 = vld [vmem:[%s2726 + $0x40] sm:$0xff]
        %v2736 = vld [vmem:[%s2726 + $0x48] sm:$0xff]
        %v2737 = vld [vmem:[%s2726 + $0x50] sm:$0xff]
        %v2738 = vld [vmem:[%s2726 + $0x58] sm:$0xff]
        %v2739 = vld [vmem:[%s2726 + $0x60] sm:$0xff]
        %v2740 = vld [vmem:[%s2726 + $0x68] sm:$0xff]
        %v2741 = vld [vmem:[%s2726 + $0x70] sm:$0xff]
        %v2742 = vld [vmem:[%s2726 + $0x78] sm:$0xff]
        %2743 = vmatprep.subr.mxu0 0.0
        %2744 = vmatpush1.msra.mxu0 %v2727
        %2745 = vmatprep.subr.mxu0 0.0
        %2746 = vmatpush1.msra.mxu0 %v2728
        %2747 = vmatprep.subr.mxu0 0.0
        %2748 = vmatpush1.msra.mxu0 %v2729
        %2749 = vmatprep.subr.mxu0 0.0
        %2750 = vmatpush1.msra.mxu0 %v2730
        %2751 = vmatprep.subr.mxu0 0.0
        %2752 = vmatpush1.msra.mxu0 %v2731
        %2753 = vmatprep.subr.mxu0 0.0
        %2754 = vmatpush1.msra.mxu0 %v2732
        %2755 = vmatprep.subr.mxu0 0.0
        %2756 = vmatpush1.msra.mxu0 %v2733
        %2757 = vmatprep.subr.mxu0 0.0
        %2758 = vmatpush1.msra.mxu0 %v2734
        %2759 = vmatprep.subr.mxu0 0.0
        %2760 = vmatpush1.msra.mxu0 %v2735
        %2761 = vmatprep.subr.mxu0 0.0
        %2762 = vmatpush1.msra.mxu0 %v2736
        %2763 = vmatprep.subr.mxu0 0.0
        %2764 = vmatpush1.msra.mxu0 %v2737
        %2765 = vmatprep.subr.mxu0 0.0
        %2766 = vmatpush1.msra.mxu0 %v2738
        %2767 = vmatprep.subr.mxu0 0.0
        %2768 = vmatpush1.msra.mxu0 %v2739
        %2769 = vmatprep.subr.mxu0 0.0
        %2770 = vmatpush1.msra.mxu0 %v2740
        %2771 = vmatprep.subr.mxu0 0.0
        %2772 = vmatpush1.msra.mxu0 %v2741
        %2773 = vmatprep.subr.mxu0 0.0
        %2774 = vmatpush1.msra.mxu0 %v2742
        %2775 = vmatprep.subr.mxu0 0.0
        %2776 = vmatpush1.msra.mxu0 0.0
        %2777 = vmatprep.subr.mxu0 0.0
        %2778 = vmatpush1.msra.mxu0 0.0
        %2779 = vmatprep.subr.mxu0 0.0
        %2780 = vmatpush1.msra.mxu0 0.0
        %2781 = vmatprep.subr.mxu0 0.0
        %2782 = vmatpush1.msra.mxu0 0.0
        %2783 = vmatprep.subr.mxu0 0.0
        %2784 = vmatpush1.msra.mxu0 0.0
        %2785 = vmatprep.subr.mxu0 0.0
        %2786 = vmatpush1.msra.mxu0 0.0
        %2787 = vmatprep.subr.mxu0 0.0
        %2788 = vmatpush1.msra.mxu0 0.0
        %2789 = vmatprep.subr.mxu0 0.0
        %2790 = vmatpush1.msra.mxu0 0.0
        %2791 = vmatprep.subr.mxu0 0.0
        %2792 = vmatpush1.msra.mxu0 0.0
        %2793 = vmatprep.subr.mxu0 0.0
        %2794 = vmatpush1.msra.mxu0 0.0
        %2795 = vmatprep.subr.mxu0 0.0
        %2796 = vmatpush1.msra.mxu0 0.0
        %2797 = vmatprep.subr.mxu0 0.0
        %2798 = vmatpush1.msra.mxu0 0.0
        %2799 = vmatprep.subr.mxu0 0.0
        %2800 = vmatpush1.msra.mxu0 0.0
        %2801 = vmatprep.subr.mxu0 0.0
        %2802 = vmatpush1.msra.mxu0 0.0
        %2803 = vmatprep.subr.mxu0 0.0
        %2804 = vmatpush1.msra.mxu0 0.0
        %2805 = vmatprep.subr.mxu0 0.0
        %2806 = vmatpush1.msra.mxu0 0.0
        %2807 = vmatprep.mubr.f32.mxu0 0.0
        %2808 = vmatmul.mubr.f32.gmra.mrb[0].mxu0 %v341
        %v2809 = vpop.f32.mrb[0].mxu0
        %v2810 = vadd.f32 0.0, %v2809
        %v2811 = vpop.f32.mrb[0].mxu0
        %2812 = vmatprep.mubr.f32.mxu0 0.0
        %2813 = vmatmul.mubr.f32.gmra.mrb[0].mxu0 %v342
        %v2814 = vpop.f32.mrb[0].mxu0
        %v2815 = vadd.f32 0.0, %v2814
        %v2816 = vpop.f32.mrb[0].mxu0
        %2817 = vdwg.mxu0
        %2818 = vmatprep.subr.mxu0 0.0
        %2819 = vmatpush1.msra.mxu0 %v2710
        %2820 = vmatprep.subr.mxu0 0.0
        %2821 = vmatpush1.msra.mxu0 %v2711
        %2822 = vmatprep.subr.mxu0 0.0
        %2823 = vmatpush1.msra.mxu0 %v2712
        %2824 = vmatprep.subr.mxu0 0.0
        %2825 = vmatpush1.msra.mxu0 %v2713
        %2826 = vmatprep.subr.mxu0 0.0
        %2827 = vmatpush1.msra.mxu0 %v2714
        %2828 = vmatprep.subr.mxu0 0.0
        %2829 = vmatpush1.msra.mxu0 %v2715
        %2830 = vmatprep.subr.mxu0 0.0
        %2831 = vmatpush1.msra.mxu0 %v2716
        %2832 = vmatprep.subr.mxu0 0.0
        %2833 = vmatpush1.msra.mxu0 %v2717
        %2834 = vmatprep.subr.mxu0 0.0
        %2835 = vmatpush1.msra.mxu0 %v2718
        %2836 = vmatprep.subr.mxu0 0.0
        %2837 = vmatpush1.msra.mxu0 %v2719
        %2838 = vmatprep.subr.mxu0 0.0
        %2839 = vmatpush1.msra.mxu0 %v2720
        %2840 = vmatprep.subr.mxu0 0.0
        %2841 = vmatpush1.msra.mxu0 %v2721
        %2842 = vmatprep.subr.mxu0 0.0
        %2843 = vmatpush1.msra.mxu0 %v2722
        %2844 = vmatprep.subr.mxu0 0.0
        %2845 = vmatpush1.msra.mxu0 %v2723
        %2846 = vmatprep.subr.mxu0 0.0
        %2847 = vmatpush1.msra.mxu0 %v2724
        %2848 = vmatprep.subr.mxu0 0.0
        %2849 = vmatpush1.msra.mxu0 %v2725
        %2850 = vmatprep.subr.mxu0 0.0
        %2851 = vmatpush1.msra.mxu0 0.0
        %2852 = vmatprep.subr.mxu0 0.0
        %2853 = vmatpush1.msra.mxu0 0.0
        %2854 = vmatprep.subr.mxu0 0.0
        %2855 = vmatpush1.msra.mxu0 0.0
        %2856 = vmatprep.subr.mxu0 0.0
        %2857 = vmatpush1.msra.mxu0 0.0
        %2858 = vmatprep.subr.mxu0 0.0
        %2859 = vmatpush1.msra.mxu0 0.0
        %2860 = vmatprep.subr.mxu0 0.0
        %2861 = vmatpush1.msra.mxu0 0.0
        %2862 = vmatprep.subr.mxu0 0.0
        %2863 = vmatpush1.msra.mxu0 0.0
        %2864 = vmatprep.subr.mxu0 0.0
        %2865 = vmatpush1.msra.mxu0 0.0
        %2866 = vmatprep.subr.mxu0 0.0
        %2867 = vmatpush1.msra.mxu0 0.0
        %2868 = vmatprep.subr.mxu0 0.0
        %2869 = vmatpush1.msra.mxu0 0.0
        %2870 = vmatprep.subr.mxu0 0.0
        %2871 = vmatpush1.msra.mxu0 0.0
        %2872 = vmatprep.subr.mxu0 0.0
        %2873 = vmatpush1.msra.mxu0 0.0
        %2874 = vmatprep.subr.mxu0 0.0
        %2875 = vmatpush1.msra.mxu0 0.0
        %2876 = vmatprep.subr.mxu0 0.0
        %2877 = vmatpush1.msra.mxu0 0.0
        %2878 = vmatprep.subr.mxu0 0.0
        %2879 = vmatpush1.msra.mxu0 0.0
        %2880 = vmatprep.subr.mxu0 0.0
        %2881 = vmatpush1.msra.mxu0 0.0
        %2882 = vmatprep.mubr.f32.mxu0 0.0
        %2883 = vmatmul.mubr.f32.gmra.mrb[0].mxu0 %v1520
        %v2884 = vpop.f32.mrb[0].mxu0
        %v2885 = vadd.f32 %v2810, %v2884
        %v2886 = vpop.f32.mrb[0].mxu0
        %2887 = vmatprep.mubr.f32.mxu0 0.0
        %2888 = vmatmul.mubr.f32.gmra.mrb[0].mxu0 %v1517
        %v2889 = vpop.f32.mrb[0].mxu0
        %v2890 = vadd.f32 %v2815, %v2889
        %v2891 = vpop.f32.mrb[0].mxu0
        %2892 = vdwg.mxu0
        %s2893 = scalar_lea.vmem %s244, 2304 [#allocation7]
        %v2894 = vld [vmem:[%s2893] sm:$0xff]
        %v2895 = vld [vmem:[%s2893 + $0x8] sm:$0xff]
        %v2896 = vld [vmem:[%s2893 + $0x10] sm:$0xff]
        %v2897 = vld [vmem:[%s2893 + $0x18] sm:$0xff]
        %v2898 = vld [vmem:[%s2893 + $0x20] sm:$0xff]
        %v2899 = vld [vmem:[%s2893 + $0x28] sm:$0xff]
        %v2900 = vld [vmem:[%s2893 + $0x30] sm:$0xff]
        %v2901 = vld [vmem:[%s2893 + $0x38] sm:$0xff]
        %v2902 = vld [vmem:[%s2893 + $0x40] sm:$0xff]
        %v2903 = vld [vmem:[%s2893 + $0x48] sm:$0xff]
        %v2904 = vld [vmem:[%s2893 + $0x50] sm:$0xff]
        %v2905 = vld [vmem:[%s2893 + $0x58] sm:$0xff]
        %v2906 = vld [vmem:[%s2893 + $0x60] sm:$0xff]
        %v2907 = vld [vmem:[%s2893 + $0x68] sm:$0xff]
        %v2908 = vld [vmem:[%s2893 + $0x70] sm:$0xff]
        %v2909 = vld [vmem:[%s2893 + $0x78] sm:$0xff]
        %2910 = vmatprep.subr.mxu0 0.0
        %2911 = vmatpush1.msra.mxu0 %v2894
        %2912 = vmatprep.subr.mxu0 0.0
        %2913 = vmatpush1.msra.mxu0 %v2895
        %2914 = vmatprep.subr.mxu0 0.0
        %2915 = vmatpush1.msra.mxu0 %v2896
        %2916 = vmatprep.subr.mxu0 0.0
        %2917 = vmatpush1.msra.mxu0 %v2897
        %2918 = vmatprep.subr.mxu0 0.0
        %2919 = vmatpush1.msra.mxu0 %v2898
        %2920 = vmatprep.subr.mxu0 0.0
        %2921 = vmatpush1.msra.mxu0 %v2899
        %2922 = vmatprep.subr.mxu0 0.0
        %2923 = vmatpush1.msra.mxu0 %v2900
        %2924 = vmatprep.subr.mxu0 0.0
        %2925 = vmatpush1.msra.mxu0 %v2901
        %2926 = vmatprep.subr.mxu0 0.0
        %2927 = vmatpush1.msra.mxu0 %v2902
        %2928 = vmatprep.subr.mxu0 0.0
        %2929 = vmatpush1.msra.mxu0 %v2903
        %2930 = vmatprep.subr.mxu0 0.0
        %2931 = vmatpush1.msra.mxu0 %v2904
        %2932 = vmatprep.subr.mxu0 0.0
        %2933 = vmatpush1.msra.mxu0 %v2905
        %2934 = vmatprep.subr.mxu0 0.0
        %2935 = vmatpush1.msra.mxu0 %v2906
        %2936 = vmatprep.subr.mxu0 0.0
        %2937 = vmatpush1.msra.mxu0 %v2907
        %2938 = vmatprep.subr.mxu0 0.0
        %2939 = vmatpush1.msra.mxu0 %v2908
        %2940 = vmatprep.subr.mxu0 0.0
        %2941 = vmatpush1.msra.mxu0 %v2909
        %2942 = vmatprep.subr.mxu0 0.0
        %2943 = vmatpush1.msra.mxu0 0.0
        %2944 = vmatprep.subr.mxu0 0.0
        %2945 = vmatpush1.msra.mxu0 0.0
        %2946 = vmatprep.subr.mxu0 0.0
        %2947 = vmatpush1.msra.mxu0 0.0
        %2948 = vmatprep.subr.mxu0 0.0
        %2949 = vmatpush1.msra.mxu0 0.0
        %2950 = vmatprep.subr.mxu0 0.0
        %2951 = vmatpush1.msra.mxu0 0.0
        %2952 = vmatprep.subr.mxu0 0.0
        %2953 = vmatpush1.msra.mxu0 0.0
        %2954 = vmatprep.subr.mxu0 0.0
        %2955 = vmatpush1.msra.mxu0 0.0
        %2956 = vmatprep.subr.mxu0 0.0
        %2957 = vmatpush1.msra.mxu0 0.0
        %2958 = vmatprep.subr.mxu0 0.0
        %2959 = vmatpush1.msra.mxu0 0.0
        %2960 = vmatprep.subr.mxu0 0.0
        %2961 = vmatpush1.msra.mxu0 0.0
        %2962 = vmatprep.subr.mxu0 0.0
        %2963 = vmatpush1.msra.mxu0 0.0
        %2964 = vmatprep.subr.mxu0 0.0
        %2965 = vmatpush1.msra.mxu0 0.0
        %2966 = vmatprep.subr.mxu0 0.0
        %2967 = vmatpush1.msra.mxu0 0.0
        %2968 = vmatprep.subr.mxu0 0.0
        %2969 = vmatpush1.msra.mxu0 0.0
        %2970 = vmatprep.subr.mxu0 0.0
        %2971 = vmatpush1.msra.mxu0 0.0
        %2972 = vmatprep.subr.mxu0 0.0
        %2973 = vmatpush1.msra.mxu0 0.0
        %2974 = vmatprep.mubr.f32.mxu0 0.0
        %2975 = vmatmul.mubr.f32.gmra.mrb[0].mxu0 %v1896
        %v2976 = vpop.f32.mrb[0].mxu0
        %v2977 = vadd.f32 0.0, %v2976
        %v2978 = vpop.f32.mrb[0].mxu0
        %2979 = vmatprep.mubr.f32.mxu0 0.0
        %2980 = vmatmul.mubr.f32.gmra.mrb[0].mxu0 %v1899
        %v2981 = vpop.f32.mrb[0].mxu0
        %v2982 = vadd.f32 0.0, %v2981
        %v2983 = vpop.f32.mrb[0].mxu0
        %2984 = vdwg.mxu0
        %v2985 = vadd.f32 %v2885, %v2977
        %v2986 = vadd.f32 %v2890, %v2982
        %v2987 = vld [vmem:[%s273 + $0x6] sm:$0x1]
        %v2988 = vadd.f32 %v2985, %v2986
        %v2989 = vrot.slane %v2988, 4
        %v2990 = vadd.f32 %v2988, %v2989
        %v2991 = vrot.slane %v2990, 2
        %v2992 = vadd.f32 %v2990, %v2991
        %v2993 = vrot.slane %v2992, 1
        %v2994 = vadd.f32 %v2992, %v2993
        %v2995 = vmul.f32 %v2985, %v2985
        %v2996 = vmul.f32 %v2986, %v2986
        %v2997 = vadd.f32 %v2995, %v2996
        %v2998 = vrot.slane %v2997, 4
        %v2999 = vadd.f32 %v2997, %v2998
        %v3000 = vrot.slane %v2999, 2
        %v3001 = vadd.f32 %v2999, %v3000
        %v3002 = vrot.slane %v3001, 1
        %v3003 = vadd.f32 %v3001, %v3002
        %v3004 = vsel %vm352, %v2994, %v3003
        %3005 = vmatprep.subr.mxu0 0.0
        %3006 = vmatpush1.msra.mxu0 %v478
        %3007 = vmatprep.subr.mxu0 0.0
        %3008 = vmatpush1.msra.mxu0 %v479
        %3009 = vmatprep.subr.mxu0 0.0
        %3010 = vmatpush1.msra.mxu0 %v480
        %3011 = vmatprep.subr.mxu0 0.0
        %3012 = vmatpush1.msra.mxu0 %v481
        %3013 = vmatprep.subr.mxu0 0.0
        %3014 = vmatpush1.msra.mxu0 %v482
        %3015 = vmatprep.subr.mxu0 0.0
        %3016 = vmatpush1.msra.mxu0 %v483
        %3017 = vmatprep.subr.mxu0 0.0
        %3018 = vmatpush1.msra.mxu0 %v484
        %3019 = vmatprep.subr.mxu0 0.0
        %3020 = vmatpush1.msra.mxu0 %v485
        %3021 = vmatprep.subr.mxu0 0.0
        %3022 = vmatpush1.msra.mxu0 %v486
        %3023 = vmatprep.subr.mxu0 0.0
        %3024 = vmatpush1.msra.mxu0 %v487
        %3025 = vmatprep.subr.mxu0 0.0
        %3026 = vmatpush1.msra.mxu0 %v488
        %3027 = vmatprep.subr.mxu0 0.0
        %3028 = vmatpush1.msra.mxu0 %v489
        %3029 = vmatprep.subr.mxu0 0.0
        %3030 = vmatpush1.msra.mxu0 %v490
        %3031 = vmatprep.subr.mxu0 0.0
        %3032 = vmatpush1.msra.mxu0 %v491
        %3033 = vmatprep.subr.mxu0 0.0
        %3034 = vmatpush1.msra.mxu0 %v492
        %3035 = vmatprep.subr.mxu0 0.0
        %3036 = vmatpush1.msra.mxu0 %v493
        %3037 = vmatprep.subr.mxu0 0.0
        %3038 = vmatpush1.msra.mxu0 0.0
        %3039 = vmatprep.subr.mxu0 0.0
        %3040 = vmatpush1.msra.mxu0 0.0
        %3041 = vmatprep.subr.mxu0 0.0
        %3042 = vmatpush1.msra.mxu0 0.0
        %3043 = vmatprep.subr.mxu0 0.0
        %3044 = vmatpush1.msra.mxu0 0.0
        %3045 = vmatprep.subr.mxu0 0.0
        %3046 = vmatpush1.msra.mxu0 0.0
        %3047 = vmatprep.subr.mxu0 0.0
        %3048 = vmatpush1.msra.mxu0 0.0
        %3049 = vmatprep.subr.mxu0 0.0
        %3050 = vmatpush1.msra.mxu0 0.0
        %3051 = vmatprep.subr.mxu0 0.0
        %3052 = vmatpush1.msra.mxu0 0.0
        %3053 = vmatprep.subr.mxu0 0.0
        %3054 = vmatpush1.msra.mxu0 0.0
        %3055 = vmatprep.subr.mxu0 0.0
        %3056 = vmatpush1.msra.mxu0 0.0
        %3057 = vmatprep.subr.mxu0 0.0
        %3058 = vmatpush1.msra.mxu0 0.0
        %3059 = vmatprep.subr.mxu0 0.0
        %3060 = vmatpush1.msra.mxu0 0.0
        %3061 = vmatprep.subr.mxu0 0.0
        %3062 = vmatpush1.msra.mxu0 0.0
        %3063 = vmatprep.subr.mxu0 0.0
        %3064 = vmatpush1.msra.mxu0 0.0
        %3065 = vmatprep.subr.mxu0 0.0
        %3066 = vmatpush1.msra.mxu0 0.0
        %3067 = vmatprep.subr.mxu0 0.0
        %3068 = vmatpush1.msra.mxu0 0.0
        %3069 = vmatprep.mubr.f32.mxu0 0.0
        %3070 = vmatmul.mubr.f32.gmra.mrb[0].mxu0 %v3004
        %v3071 = vpop.f32.mrb[0].mxu0
        %v3072 = vadd.f32 0.0, %v3071
        %v3073 = vpop.f32.mrb[0].mxu0
        %3074 = vdwg.mxu0
        %v3075 = vmul.f32 %v3072, %v3072
        %v3077 = vrot.slane %v3075, 7
        %v3079 = vsub.f32 %v3072, %v3077
        %v3080 = vmax.f32 %v3079, 0.0
        %v3081 = vlaneseq
        %v3082 = vshrl.u32 %v3081, 7
        %v3083 = vsub.s32 0, %v3082
        %v3084 = vrot.slane %v3072, %v3083
        %v3085 = vsub.f32 %v2985, %v3084
        %v3086 = vsub.f32 %v2986, %v3084
        %v3087 = vadd.f32 %v3080, 1e-05
        %v3088 = vrsqrt.pop %v3087
        %v3090 = vrot.slane %v2987, 7
        %v3092 = vmul.f32 %v3088, %v3090
        %v3093 = vlaneseq
        %v3094 = vshrl.u32 %v3093, 7
        %v3095 = vsub.s32 1, %v3094
        %v3096 = vrot.slane %v3092, %v3095
        %v3097 = vmul.f32 %v3085, %v3096
        %v3098 = vmul.f32 %v3086, %v3096
        %v3099 = vadd.f32 %v2707, %v3097
        %v3100 = vadd.f32 %v2708, %v3098
        %vm3101 = vcmask 1043456
        %v3102 = vrot.slane %v341, 4
        %v3103 = vrot.slane %v342, 4
        %v3104 = vsel %vm3101, %v3102, %v3103
        %v3107 = vsel %vm3101, 0.0, %v3102
        %s3108 = scalar_lea.vmem %s244, 2432 [#allocation7]
        %v3109 = vld [vmem:[%s3108] sm:$0xff]
        %v3110 = vld [vmem:[%s3108 + $0x8] sm:$0xff]
        %v3111 = vld [vmem:[%s3108 + $0x10] sm:$0xff]
        %v3112 = vld [vmem:[%s3108 + $0x18] sm:$0xff]
        %v3113 = vld [vmem:[%s3108 + $0x20] sm:$0xff]
        %v3114 = vld [vmem:[%s3108 + $0x28] sm:$0xff]
        %v3115 = vld [vmem:[%s3108 + $0x30] sm:$0xff]
        %v3116 = vld [vmem:[%s3108 + $0x38] sm:$0xff]
        %v3117 = vld [vmem:[%s3108 + $0x40] sm:$0xff]
        %v3118 = vld [vmem:[%s3108 + $0x48] sm:$0xff]
        %v3119 = vld [vmem:[%s3108 + $0x50] sm:$0xff]
        %v3120 = vld [vmem:[%s3108 + $0x58] sm:$0xff]
        %v3121 = vld [vmem:[%s3108 + $0x60] sm:$0xff]
        %v3122 = vld [vmem:[%s3108 + $0x68] sm:$0xff]
        %v3123 = vld [vmem:[%s3108 + $0x70] sm:$0xff]
        %v3124 = vld [vmem:[%s3108 + $0x78] sm:$0xff]
        %s3125 = scalar_lea.vmem %s244, 2560 [#allocation7]
        %v3126 = vld [vmem:[%s3125] sm:$0xff]
        %v3127 = vld [vmem:[%s3125 + $0x8] sm:$0xff]
        %v3128 = vld [vmem:[%s3125 + $0x10] sm:$0xff]
        %v3129 = vld [vmem:[%s3125 + $0x18] sm:$0xff]
        %v3130 = vld [vmem:[%s3125 + $0x20] sm:$0xff]
        %v3131 = vld [vmem:[%s3125 + $0x28] sm:$0xff]
        %v3132 = vld [vmem:[%s3125 + $0x30] sm:$0xff]
        %v3133 = vld [vmem:[%s3125 + $0x38] sm:$0xff]
        %v3134 = vld [vmem:[%s3125 + $0x40] sm:$0xff]
        %v3135 = vld [vmem:[%s3125 + $0x48] sm:$0xff]
        %v3136 = vld [vmem:[%s3125 + $0x50] sm:$0xff]
        %v3137 = vld [vmem:[%s3125 + $0x58] sm:$0xff]
        %v3138 = vld [vmem:[%s3125 + $0x60] sm:$0xff]
        %v3139 = vld [vmem:[%s3125 + $0x68] sm:$0xff]
        %v3140 = vld [vmem:[%s3125 + $0x70] sm:$0xff]
        %v3141 = vld [vmem:[%s3125 + $0x78] sm:$0xff]
        %3142 = vmatprep.subr.mxu0 0.0
        %3143 = vmatpush1.msra.mxu0 %v3126
        %3144 = vmatprep.subr.mxu0 0.0
        %3145 = vmatpush1.msra.mxu0 %v3127
        %3146 = vmatprep.subr.mxu0 0.0
        %3147 = vmatpush1.msra.mxu0 %v3128
        %3148 = vmatprep.subr.mxu0 0.0
        %3149 = vmatpush1.msra.mxu0 %v3129
        %3150 = vmatprep.subr.mxu0 0.0
        %3151 = vmatpush1.msra.mxu0 %v3130
        %3152 = vmatprep.subr.mxu0 0.0
        %3153 = vmatpush1.msra.mxu0 %v3131
        %3154 = vmatprep.subr.mxu0 0.0
        %3155 = vmatpush1.msra.mxu0 %v3132
        %3156 = vmatprep.subr.mxu0 0.0
        %3157 = vmatpush1.msra.mxu0 %v3133
        %3158 = vmatprep.subr.mxu0 0.0
        %3159 = vmatpush1.msra.mxu0 %v3134
        %3160 = vmatprep.subr.mxu0 0.0
        %3161 = vmatpush1.msra.mxu0 %v3135
        %3162 = vmatprep.subr.mxu0 0.0
        %3163 = vmatpush1.msra.mxu0 %v3136
        %3164 = vmatprep.subr.mxu0 0.0
        %3165 = vmatpush1.msra.mxu0 %v3137
        %3166 = vmatprep.subr.mxu0 0.0
        %3167 = vmatpush1.msra.mxu0 %v3138
        %3168 = vmatprep.subr.mxu0 0.0
        %3169 = vmatpush1.msra.mxu0 %v3139
        %3170 = vmatprep.subr.mxu0 0.0
        %3171 = vmatpush1.msra.mxu0 %v3140
        %3172 = vmatprep.subr.mxu0 0.0
        %3173 = vmatpush1.msra.mxu0 %v3141
        %3174 = vmatprep.subr.mxu0 0.0
        %3175 = vmatpush1.msra.mxu0 0.0
        %3176 = vmatprep.subr.mxu0 0.0
        %3177 = vmatpush1.msra.mxu0 0.0
        %3178 = vmatprep.subr.mxu0 0.0
        %3179 = vmatpush1.msra.mxu0 0.0
        %3180 = vmatprep.subr.mxu0 0.0
        %3181 = vmatpush1.msra.mxu0 0.0
        %3182 = vmatprep.subr.mxu0 0.0
        %3183 = vmatpush1.msra.mxu0 0.0
        %3184 = vmatprep.subr.mxu0 0.0
        %3185 = vmatpush1.msra.mxu0 0.0
        %3186 = vmatprep.subr.mxu0 0.0
        %3187 = vmatpush1.msra.mxu0 0.0
        %3188 = vmatprep.subr.mxu0 0.0
        %3189 = vmatpush1.msra.mxu0 0.0
        %3190 = vmatprep.subr.mxu0 0.0
        %3191 = vmatpush1.msra.mxu0 0.0
        %3192 = vmatprep.subr.mxu0 0.0
        %3193 = vmatpush1.msra.mxu0 0.0
        %3194 = vmatprep.subr.mxu0 0.0
        %3195 = vmatpush1.msra.mxu0 0.0
        %3196 = vmatprep.subr.mxu0 0.0
        %3197 = vmatpush1.msra.mxu0 0.0
        %3198 = vmatprep.subr.mxu0 0.0
        %3199 = vmatpush1.msra.mxu0 0.0
        %3200 = vmatprep.subr.mxu0 0.0
        %3201 = vmatpush1.msra.mxu0 0.0
        %3202 = vmatprep.subr.mxu0 0.0
        %3203 = vmatpush1.msra.mxu0 0.0
        %3204 = vmatprep.subr.mxu0 0.0
        %3205 = vmatpush1.msra.mxu0 0.0
        %3206 = vmatprep.mubr.f32.mxu0 0.0
        %3207 = vmatmul.mubr.f32.gmra.mrb[0].mxu0 %v1520
        %v3208 = vpop.f32.mrb[0].mxu0
        %v3209 = vadd.f32 0.0, %v3208
        %v3210 = vpop.f32.mrb[0].mxu0
        %3211 = vmatprep.mubr.f32.mxu0 0.0
        %3212 = vmatmul.mubr.f32.gmra.mrb[0].mxu0 %v1517
        %v3213 = vpop.f32.mrb[0].mxu0
        %v3214 = vadd.f32 0.0, %v3213
        %v3215 = vpop.f32.mrb[0].mxu0
        %3216 = vdwg.mxu0
        %3217 = vmatprep.subr.mxu0 0.0
        %3218 = vmatpush1.msra.mxu0 %v3109
        %3219 = vmatprep.subr.mxu0 0.0
        %3220 = vmatpush1.msra.mxu0 %v3110
        %3221 = vmatprep.subr.mxu0 0.0
        %3222 = vmatpush1.msra.mxu0 %v3111
        %3223 = vmatprep.subr.mxu0 0.0
        %3224 = vmatpush1.msra.mxu0 %v3112
        %3225 = vmatprep.subr.mxu0 0.0
        %3226 = vmatpush1.msra.mxu0 %v3113
        %3227 = vmatprep.subr.mxu0 0.0
        %3228 = vmatpush1.msra.mxu0 %v3114
        %3229 = vmatprep.subr.mxu0 0.0
        %3230 = vmatpush1.msra.mxu0 %v3115
        %3231 = vmatprep.subr.mxu0 0.0
        %3232 = vmatpush1.msra.mxu0 %v3116
        %3233 = vmatprep.subr.mxu0 0.0
        %3234 = vmatpush1.msra.mxu0 %v3117
        %3235 = vmatprep.subr.mxu0 0.0
        %3236 = vmatpush1.msra.mxu0 %v3118
        %3237 = vmatprep.subr.mxu0 0.0
        %3238 = vmatpush1.msra.mxu0 %v3119
        %3239 = vmatprep.subr.mxu0 0.0
        %3240 = vmatpush1.msra.mxu0 %v3120
        %3241 = vmatprep.subr.mxu0 0.0
        %3242 = vmatpush1.msra.mxu0 %v3121
        %3243 = vmatprep.subr.mxu0 0.0
        %3244 = vmatpush1.msra.mxu0 %v3122
        %3245 = vmatprep.subr.mxu0 0.0
        %3246 = vmatpush1.msra.mxu0 %v3123
        %3247 = vmatprep.subr.mxu0 0.0
        %3248 = vmatpush1.msra.mxu0 %v3124
        %3249 = vmatprep.subr.mxu0 0.0
        %3250 = vmatpush1.msra.mxu0 0.0
        %3251 = vmatprep.subr.mxu0 0.0
        %3252 = vmatpush1.msra.mxu0 0.0
        %3253 = vmatprep.subr.mxu0 0.0
        %3254 = vmatpush1.msra.mxu0 0.0
        %3255 = vmatprep.subr.mxu0 0.0
        %3256 = vmatpush1.msra.mxu0 0.0
        %3257 = vmatprep.subr.mxu0 0.0
        %3258 = vmatpush1.msra.mxu0 0.0
        %3259 = vmatprep.subr.mxu0 0.0
        %3260 = vmatpush1.msra.mxu0 0.0
        %3261 = vmatprep.subr.mxu0 0.0
        %3262 = vmatpush1.msra.mxu0 0.0
        %3263 = vmatprep.subr.mxu0 0.0
        %3264 = vmatpush1.msra.mxu0 0.0
        %3265 = vmatprep.subr.mxu0 0.0
        %3266 = vmatpush1.msra.mxu0 0.0
        %3267 = vmatprep.subr.mxu0 0.0
        %3268 = vmatpush1.msra.mxu0 0.0
        %3269 = vmatprep.subr.mxu0 0.0
        %3270 = vmatpush1.msra.mxu0 0.0
        %3271 = vmatprep.subr.mxu0 0.0
        %3272 = vmatpush1.msra.mxu0 0.0
        %3273 = vmatprep.subr.mxu0 0.0
        %3274 = vmatpush1.msra.mxu0 0.0
        %3275 = vmatprep.subr.mxu0 0.0
        %3276 = vmatpush1.msra.mxu0 0.0
        %3277 = vmatprep.subr.mxu0 0.0
        %3278 = vmatpush1.msra.mxu0 0.0
        %3279 = vmatprep.subr.mxu0 0.0
        %3280 = vmatpush1.msra.mxu0 0.0
        %3281 = vmatprep.mubr.f32.mxu0 0.0
        %3282 = vmatmul.mubr.f32.gmra.mrb[0].mxu0 %v3107
        %v3283 = vpop.f32.mrb[0].mxu0
        %v3284 = vadd.f32 %v3209, %v3283
        %v3285 = vpop.f32.mrb[0].mxu0
        %3286 = vmatprep.mubr.f32.mxu0 0.0
        %3287 = vmatmul.mubr.f32.gmra.mrb[0].mxu0 %v3104
        %v3288 = vpop.f32.mrb[0].mxu0
        %v3289 = vadd.f32 %v3214, %v3288
        %v3290 = vpop.f32.mrb[0].mxu0
        %3291 = vdwg.mxu0
        %s3292 = scalar_lea.vmem %s244, 2688 [#allocation7]
        %v3293 = vld [vmem:[%s3292] sm:$0xff]
        %v3294 = vld [vmem:[%s3292 + $0x8] sm:$0xff]
        %v3295 = vld [vmem:[%s3292 + $0x10] sm:$0xff]
        %v3296 = vld [vmem:[%s3292 + $0x18] sm:$0xff]
        %v3297 = vld [vmem:[%s3292 + $0x20] sm:$0xff]
        %v3298 = vld [vmem:[%s3292 + $0x28] sm:$0xff]
        %v3299 = vld [vmem:[%s3292 + $0x30] sm:$0xff]
        %v3300 = vld [vmem:[%s3292 + $0x38] sm:$0xff]
        %v3301 = vld [vmem:[%s3292 + $0x40] sm:$0xff]
        %v3302 = vld [vmem:[%s3292 + $0x48] sm:$0xff]
        %v3303 = vld [vmem:[%s3292 + $0x50] sm:$0xff]
        %v3304 = vld [vmem:[%s3292 + $0x58] sm:$0xff]
        %v3305 = vld [vmem:[%s3292 + $0x60] sm:$0xff]
        %v3306 = vld [vmem:[%s3292 + $0x68] sm:$0xff]
        %v3307 = vld [vmem:[%s3292 + $0x70] sm:$0xff]
        %v3308 = vld [vmem:[%s3292 + $0x78] sm:$0xff]
        %3309 = vmatprep.subr.mxu0 0.0
        %3310 = vmatpush1.msra.mxu0 %v3293
        %3311 = vmatprep.subr.mxu0 0.0
        %3312 = vmatpush1.msra.mxu0 %v3294
        %3313 = vmatprep.subr.mxu0 0.0
        %3314 = vmatpush1.msra.mxu0 %v3295
        %3315 = vmatprep.subr.mxu0 0.0
        %3316 = vmatpush1.msra.mxu0 %v3296
        %3317 = vmatprep.subr.mxu0 0.0
        %3318 = vmatpush1.msra.mxu0 %v3297
        %3319 = vmatprep.subr.mxu0 0.0
        %3320 = vmatpush1.msra.mxu0 %v3298
        %3321 = vmatprep.subr.mxu0 0.0
        %3322 = vmatpush1.msra.mxu0 %v3299
        %3323 = vmatprep.subr.mxu0 0.0
        %3324 = vmatpush1.msra.mxu0 %v3300
        %3325 = vmatprep.subr.mxu0 0.0
        %3326 = vmatpush1.msra.mxu0 %v3301
        %3327 = vmatprep.subr.mxu0 0.0
        %3328 = vmatpush1.msra.mxu0 %v3302
        %3329 = vmatprep.subr.mxu0 0.0
        %3330 = vmatpush1.msra.mxu0 %v3303
        %3331 = vmatprep.subr.mxu0 0.0
        %3332 = vmatpush1.msra.mxu0 %v3304
        %3333 = vmatprep.subr.mxu0 0.0
        %3334 = vmatpush1.msra.mxu0 %v3305
        %3335 = vmatprep.subr.mxu0 0.0
        %3336 = vmatpush1.msra.mxu0 %v3306
        %3337 = vmatprep.subr.mxu0 0.0
        %3338 = vmatpush1.msra.mxu0 %v3307
        %3339 = vmatprep.subr.mxu0 0.0
        %3340 = vmatpush1.msra.mxu0 %v3308
        %3341 = vmatprep.subr.mxu0 0.0
        %3342 = vmatpush1.msra.mxu0 0.0
        %3343 = vmatprep.subr.mxu0 0.0
        %3344 = vmatpush1.msra.mxu0 0.0
        %3345 = vmatprep.subr.mxu0 0.0
        %3346 = vmatpush1.msra.mxu0 0.0
        %3347 = vmatprep.subr.mxu0 0.0
        %3348 = vmatpush1.msra.mxu0 0.0
        %3349 = vmatprep.subr.mxu0 0.0
        %3350 = vmatpush1.msra.mxu0 0.0
        %3351 = vmatprep.subr.mxu0 0.0
        %3352 = vmatpush1.msra.mxu0 0.0
        %3353 = vmatprep.subr.mxu0 0.0
        %3354 = vmatpush1.msra.mxu0 0.0
        %3355 = vmatprep.subr.mxu0 0.0
        %3356 = vmatpush1.msra.mxu0 0.0
        %3357 = vmatprep.subr.mxu0 0.0
        %3358 = vmatpush1.msra.mxu0 0.0
        %3359 = vmatprep.subr.mxu0 0.0
        %3360 = vmatpush1.msra.mxu0 0.0
        %3361 = vmatprep.subr.mxu0 0.0
        %3362 = vmatpush1.msra.mxu0 0.0
        %3363 = vmatprep.subr.mxu0 0.0
        %3364 = vmatpush1.msra.mxu0 0.0
        %3365 = vmatprep.subr.mxu0 0.0
        %3366 = vmatpush1.msra.mxu0 0.0
        %3367 = vmatprep.subr.mxu0 0.0
        %3368 = vmatpush1.msra.mxu0 0.0
        %3369 = vmatprep.subr.mxu0 0.0
        %3370 = vmatpush1.msra.mxu0 0.0
        %3371 = vmatprep.subr.mxu0 0.0
        %3372 = vmatpush1.msra.mxu0 0.0
        %3373 = vmatprep.mubr.f32.mxu0 0.0
        %3374 = vmatmul.mubr.f32.gmra.mrb[0].mxu0 %v341
        %v3375 = vpop.f32.mrb[0].mxu0
        %v3376 = vadd.f32 0.0, %v3375
        %v3377 = vpop.f32.mrb[0].mxu0
        %3378 = vmatprep.mubr.f32.mxu0 0.0
        %3379 = vmatmul.mubr.f32.gmra.mrb[0].mxu0 %v342
        %v3380 = vpop.f32.mrb[0].mxu0
        %v3381 = vadd.f32 0.0, %v3380
        %v3382 = vpop.f32.mrb[0].mxu0
        %3383 = vdwg.mxu0
        %v3384 = vadd.f32 %v3284, %v3376
        %v3385 = vadd.f32 %v3289, %v3381
        %s3386 = scalar_lea.vmem %s244, 2816 [#allocation7]
        %v3387 = vld [vmem:[%s3386] sm:$0xff]
        %v3388 = vld [vmem:[%s3386 + $0x8] sm:$0xff]
        %v3389 = vld [vmem:[%s3386 + $0x10] sm:$0xff]
        %v3390 = vld [vmem:[%s3386 + $0x18] sm:$0xff]
        %v3391 = vld [vmem:[%s3386 + $0x20] sm:$0xff]
        %v3392 = vld [vmem:[%s3386 + $0x28] sm:$0xff]
        %v3393 = vld [vmem:[%s3386 + $0x30] sm:$0xff]
        %v3394 = vld [vmem:[%s3386 + $0x38] sm:$0xff]
        %v3395 = vld [vmem:[%s3386 + $0x40] sm:$0xff]
        %v3396 = vld [vmem:[%s3386 + $0x48] sm:$0xff]
        %v3397 = vld [vmem:[%s3386 + $0x50] sm:$0xff]
        %v3398 = vld [vmem:[%s3386 + $0x58] sm:$0xff]
        %v3399 = vld [vmem:[%s3386 + $0x60] sm:$0xff]
        %v3400 = vld [vmem:[%s3386 + $0x68] sm:$0xff]
        %v3401 = vld [vmem:[%s3386 + $0x70] sm:$0xff]
        %v3402 = vld [vmem:[%s3386 + $0x78] sm:$0xff]
        %3403 = vmatprep.subr.mxu0 0.0
        %3404 = vmatpush1.msra.mxu0 %v3387
        %3405 = vmatprep.subr.mxu0 0.0
        %3406 = vmatpush1.msra.mxu0 %v3388
        %3407 = vmatprep.subr.mxu0 0.0
        %3408 = vmatpush1.msra.mxu0 %v3389
        %3409 = vmatprep.subr.mxu0 0.0
        %3410 = vmatpush1.msra.mxu0 %v3390
        %3411 = vmatprep.subr.mxu0 0.0
        %3412 = vmatpush1.msra.mxu0 %v3391
        %3413 = vmatprep.subr.mxu0 0.0
        %3414 = vmatpush1.msra.mxu0 %v3392
        %3415 = vmatprep.subr.mxu0 0.0
        %3416 = vmatpush1.msra.mxu0 %v3393
        %3417 = vmatprep.subr.mxu0 0.0
        %3418 = vmatpush1.msra.mxu0 %v3394
        %3419 = vmatprep.subr.mxu0 0.0
        %3420 = vmatpush1.msra.mxu0 %v3395
        %3421 = vmatprep.subr.mxu0 0.0
        %3422 = vmatpush1.msra.mxu0 %v3396
        %3423 = vmatprep.subr.mxu0 0.0
        %3424 = vmatpush1.msra.mxu0 %v3397
        %3425 = vmatprep.subr.mxu0 0.0
        %3426 = vmatpush1.msra.mxu0 %v3398
        %3427 = vmatprep.subr.mxu0 0.0
        %3428 = vmatpush1.msra.mxu0 %v3399
        %3429 = vmatprep.subr.mxu0 0.0
        %3430 = vmatpush1.msra.mxu0 %v3400
        %3431 = vmatprep.subr.mxu0 0.0
        %3432 = vmatpush1.msra.mxu0 %v3401
        %3433 = vmatprep.subr.mxu0 0.0
        %3434 = vmatpush1.msra.mxu0 %v3402
        %3435 = vmatprep.subr.mxu0 0.0
        %3436 = vmatpush1.msra.mxu0 0.0
        %3437 = vmatprep.subr.mxu0 0.0
        %3438 = vmatpush1.msra.mxu0 0.0
        %3439 = vmatprep.subr.mxu0 0.0
        %3440 = vmatpush1.msra.mxu0 0.0
        %3441 = vmatprep.subr.mxu0 0.0
        %3442 = vmatpush1.msra.mxu0 0.0
        %3443 = vmatprep.subr.mxu0 0.0
        %3444 = vmatpush1.msra.mxu0 0.0
        %3445 = vmatprep.subr.mxu0 0.0
        %3446 = vmatpush1.msra.mxu0 0.0
        %3447 = vmatprep.subr.mxu0 0.0
        %3448 = vmatpush1.msra.mxu0 0.0
        %3449 = vmatprep.subr.mxu0 0.0
        %3450 = vmatpush1.msra.mxu0 0.0
        %3451 = vmatprep.subr.mxu0 0.0
        %3452 = vmatpush1.msra.mxu0 0.0
        %3453 = vmatprep.subr.mxu0 0.0
        %3454 = vmatpush1.msra.mxu0 0.0
        %3455 = vmatprep.subr.mxu0 0.0
        %3456 = vmatpush1.msra.mxu0 0.0
        %3457 = vmatprep.subr.mxu0 0.0
        %3458 = vmatpush1.msra.mxu0 0.0
        %3459 = vmatprep.subr.mxu0 0.0
        %3460 = vmatpush1.msra.mxu0 0.0
        %3461 = vmatprep.subr.mxu0 0.0
        %3462 = vmatpush1.msra.mxu0 0.0
        %3463 = vmatprep.subr.mxu0 0.0
        %3464 = vmatpush1.msra.mxu0 0.0
        %3465 = vmatprep.subr.mxu0 0.0
        %3466 = vmatpush1.msra.mxu0 0.0
        %3467 = vmatprep.mubr.f32.mxu0 0.0
        %3468 = vmatmul.mubr.f32.gmra.mrb[0].mxu0 %v1896
        %v3469 = vpop.f32.mrb[0].mxu0
        %v3470 = vadd.f32 0.0, %v3469
        %v3471 = vpop.f32.mrb[0].mxu0
        %3472 = vmatprep.mubr.f32.mxu0 0.0
        %3473 = vmatmul.mubr.f32.gmra.mrb[0].mxu0 %v1899
        %v3474 = vpop.f32.mrb[0].mxu0
        %v3475 = vadd.f32 0.0, %v3474
        %v3476 = vpop.f32.mrb[0].mxu0
        %3477 = vdwg.mxu0
        %v3478 = vadd.f32 %v3384, %v3470
        %v3479 = vadd.f32 %v3385, %v3475
        %v3481 = vsel %vm3101, %v3103, 0.0
        %s3482 = scalar_lea.vmem %s244, 2944 [#allocation7]
        %v3483 = vld [vmem:[%s3482] sm:$0xff]
        %v3484 = vld [vmem:[%s3482 + $0x8] sm:$0xff]
        %v3485 = vld [vmem:[%s3482 + $0x10] sm:$0xff]
        %v3486 = vld [vmem:[%s3482 + $0x18] sm:$0xff]
        %v3487 = vld [vmem:[%s3482 + $0x20] sm:$0xff]
        %v3488 = vld [vmem:[%s3482 + $0x28] sm:$0xff]
        %v3489 = vld [vmem:[%s3482 + $0x30] sm:$0xff]
        %v3490 = vld [vmem:[%s3482 + $0x38] sm:$0xff]
        %v3491 = vld [vmem:[%s3482 + $0x40] sm:$0xff]
        %v3492 = vld [vmem:[%s3482 + $0x48] sm:$0xff]
        %v3493 = vld [vmem:[%s3482 + $0x50] sm:$0xff]
        %v3494 = vld [vmem:[%s3482 + $0x58] sm:$0xff]
        %v3495 = vld [vmem:[%s3482 + $0x60] sm:$0xff]
        %v3496 = vld [vmem:[%s3482 + $0x68] sm:$0xff]
        %v3497 = vld [vmem:[%s3482 + $0x70] sm:$0xff]
        %v3498 = vld [vmem:[%s3482 + $0x78] sm:$0xff]
        %3499 = vmatprep.subr.mxu0 0.0
        %3500 = vmatpush1.msra.mxu0 %v3483
        %3501 = vmatprep.subr.mxu0 0.0
        %3502 = vmatpush1.msra.mxu0 %v3484
        %3503 = vmatprep.subr.mxu0 0.0
        %3504 = vmatpush1.msra.mxu0 %v3485
        %3505 = vmatprep.subr.mxu0 0.0
        %3506 = vmatpush1.msra.mxu0 %v3486
        %3507 = vmatprep.subr.mxu0 0.0
        %3508 = vmatpush1.msra.mxu0 %v3487
        %3509 = vmatprep.subr.mxu0 0.0
        %3510 = vmatpush1.msra.mxu0 %v3488
        %3511 = vmatprep.subr.mxu0 0.0
        %3512 = vmatpush1.msra.mxu0 %v3489
        %3513 = vmatprep.subr.mxu0 0.0
        %3514 = vmatpush1.msra.mxu0 %v3490
        %3515 = vmatprep.subr.mxu0 0.0
        %3516 = vmatpush1.msra.mxu0 %v3491
        %3517 = vmatprep.subr.mxu0 0.0
        %3518 = vmatpush1.msra.mxu0 %v3492
        %3519 = vmatprep.subr.mxu0 0.0
        %3520 = vmatpush1.msra.mxu0 %v3493
        %3521 = vmatprep.subr.mxu0 0.0
        %3522 = vmatpush1.msra.mxu0 %v3494
        %3523 = vmatprep.subr.mxu0 0.0
        %3524 = vmatpush1.msra.mxu0 %v3495
        %3525 = vmatprep.subr.mxu0 0.0
        %3526 = vmatpush1.msra.mxu0 %v3496
        %3527 = vmatprep.subr.mxu0 0.0
        %3528 = vmatpush1.msra.mxu0 %v3497
        %3529 = vmatprep.subr.mxu0 0.0
        %3530 = vmatpush1.msra.mxu0 %v3498
        %3531 = vmatprep.subr.mxu0 0.0
        %3532 = vmatpush1.msra.mxu0 0.0
        %3533 = vmatprep.subr.mxu0 0.0
        %3534 = vmatpush1.msra.mxu0 0.0
        %3535 = vmatprep.subr.mxu0 0.0
        %3536 = vmatpush1.msra.mxu0 0.0
        %3537 = vmatprep.subr.mxu0 0.0
        %3538 = vmatpush1.msra.mxu0 0.0
        %3539 = vmatprep.subr.mxu0 0.0
        %3540 = vmatpush1.msra.mxu0 0.0
        %3541 = vmatprep.subr.mxu0 0.0
        %3542 = vmatpush1.msra.mxu0 0.0
        %3543 = vmatprep.subr.mxu0 0.0
        %3544 = vmatpush1.msra.mxu0 0.0
        %3545 = vmatprep.subr.mxu0 0.0
        %3546 = vmatpush1.msra.mxu0 0.0
        %3547 = vmatprep.subr.mxu0 0.0
        %3548 = vmatpush1.msra.mxu0 0.0
        %3549 = vmatprep.subr.mxu0 0.0
        %3550 = vmatpush1.msra.mxu0 0.0
        %3551 = vmatprep.subr.mxu0 0.0
        %3552 = vmatpush1.msra.mxu0 0.0
        %3553 = vmatprep.subr.mxu0 0.0
        %3554 = vmatpush1.msra.mxu0 0.0
        %3555 = vmatprep.subr.mxu0 0.0
        %3556 = vmatpush1.msra.mxu0 0.0
        %3557 = vmatprep.subr.mxu0 0.0
        %3558 = vmatpush1.msra.mxu0 0.0
        %3559 = vmatprep.subr.mxu0 0.0
        %3560 = vmatpush1.msra.mxu0 0.0
        %3561 = vmatprep.subr.mxu0 0.0
        %3562 = vmatpush1.msra.mxu0 0.0
        %3563 = vmatprep.mubr.f32.mxu0 0.0
        %3564 = vmatmul.mubr.f32.gmra.mrb[0].mxu0 %v3104
        %v3565 = vpop.f32.mrb[0].mxu0
        %v3566 = vadd.f32 0.0, %v3565
        %v3567 = vpop.f32.mrb[0].mxu0
        %3568 = vmatprep.mubr.f32.mxu0 0.0
        %3569 = vmatmul.mubr.f32.gmra.mrb[0].mxu0 %v3481
        %v3570 = vpop.f32.mrb[0].mxu0
        %v3571 = vadd.f32 0.0, %v3570
        %v3572 = vpop.f32.mrb[0].mxu0
        %3573 = vdwg.mxu0
        %v3574 = vadd.f32 %v3478, %v3566
        %v3575 = vadd.f32 %v3479, %v3571
        %v3576 = vld [vmem:[%s273 + $0x7] sm:$0x1]
        %v3577 = vadd.f32 %v3574, %v3575
        %v3578 = vrot.slane %v3577, 4
        %v3579 = vadd.f32 %v3577, %v3578
        %v3580 = vrot.slane %v3579, 2
        %v3581 = vadd.f32 %v3579, %v3580
        %v3582 = vrot.slane %v3581, 1
        %v3583 = vadd.f32 %v3581, %v3582
        %v3584 = vmul.f32 %v3574, %v3574
        %v3585 = vmul.f32 %v3575, %v3575
        %v3586 = vadd.f32 %v3584, %v3585
        %v3587 = vrot.slane %v3586, 4
        %v3588 = vadd.f32 %v3586, %v3587
        %v3589 = vrot.slane %v3588, 2
        %v3590 = vadd.f32 %v3588, %v3589
        %v3591 = vrot.slane %v3590, 1
        %v3592 = vadd.f32 %v3590, %v3591
        %v3593 = vsel %vm352, %v3583, %v3592
        %3594 = vmatprep.subr.mxu0 0.0
        %3595 = vmatpush1.msra.mxu0 %v478
        %3596 = vmatprep.subr.mxu0 0.0
        %3597 = vmatpush1.msra.mxu0 %v479
        %3598 = vmatprep.subr.mxu0 0.0
        %3599 = vmatpush1.msra.mxu0 %v480
        %3600 = vmatprep.subr.mxu0 0.0
        %3601 = vmatpush1.msra.mxu0 %v481
        %3602 = vmatprep.subr.mxu0 0.0
        %3603 = vmatpush1.msra.mxu0 %v482
        %3604 = vmatprep.subr.mxu0 0.0
        %3605 = vmatpush1.msra.mxu0 %v483
        %3606 = vmatprep.subr.mxu0 0.0
        %3607 = vmatpush1.msra.mxu0 %v484
        %3608 = vmatprep.subr.mxu0 0.0
        %3609 = vmatpush1.msra.mxu0 %v485
        %3610 = vmatprep.subr.mxu0 0.0
        %3611 = vmatpush1.msra.mxu0 %v486
        %3612 = vmatprep.subr.mxu0 0.0
        %3613 = vmatpush1.msra.mxu0 %v487
        %3614 = vmatprep.subr.mxu0 0.0
        %3615 = vmatpush1.msra.mxu0 %v488
        %3616 = vmatprep.subr.mxu0 0.0
        %3617 = vmatpush1.msra.mxu0 %v489
        %3618 = vmatprep.subr.mxu0 0.0
        %3619 = vmatpush1.msra.mxu0 %v490
        %3620 = vmatprep.subr.mxu0 0.0
        %3621 = vmatpush1.msra.mxu0 %v491
        %3622 = vmatprep.subr.mxu0 0.0
        %3623 = vmatpush1.msra.mxu0 %v492
        %3624 = vmatprep.subr.mxu0 0.0
        %3625 = vmatpush1.msra.mxu0 %v493
        %3626 = vmatprep.subr.mxu0 0.0
        %3627 = vmatpush1.msra.mxu0 0.0
        %3628 = vmatprep.subr.mxu0 0.0
        %3629 = vmatpush1.msra.mxu0 0.0
        %3630 = vmatprep.subr.mxu0 0.0
        %3631 = vmatpush1.msra.mxu0 0.0
        %3632 = vmatprep.subr.mxu0 0.0
        %3633 = vmatpush1.msra.mxu0 0.0
        %3634 = vmatprep.subr.mxu0 0.0
        %3635 = vmatpush1.msra.mxu0 0.0
        %3636 = vmatprep.subr.mxu0 0.0
        %3637 = vmatpush1.msra.mxu0 0.0
        %3638 = vmatprep.subr.mxu0 0.0
        %3639 = vmatpush1.msra.mxu0 0.0
        %3640 = vmatprep.subr.mxu0 0.0
        %3641 = vmatpush1.msra.mxu0 0.0
        %3642 = vmatprep.subr.mxu0 0.0
        %3643 = vmatpush1.msra.mxu0 0.0
        %3644 = vmatprep.subr.mxu0 0.0
        %3645 = vmatpush1.msra.mxu0 0.0
        %3646 = vmatprep.subr.mxu0 0.0
        %3647 = vmatpush1.msra.mxu0 0.0
        %3648 = vmatprep.subr.mxu0 0.0
        %3649 = vmatpush1.msra.mxu0 0.0
        %3650 = vmatprep.subr.mxu0 0.0
        %3651 = vmatpush1.msra.mxu0 0.0
        %3652 = vmatprep.subr.mxu0 0.0
        %3653 = vmatpush1.msra.mxu0 0.0
        %3654 = vmatprep.subr.mxu0 0.0
        %3655 = vmatpush1.msra.mxu0 0.0
        %3656 = vmatprep.subr.mxu0 0.0
        %3657 = vmatpush1.msra.mxu0 0.0
        %3658 = vmatprep.mubr.f32.mxu0 0.0
        %3659 = vmatmul.mubr.f32.gmra.mrb[0].mxu0 %v3593
        %v3660 = vpop.f32.mrb[0].mxu0
        %v3661 = vadd.f32 0.0, %v3660
        %v3662 = vpop.f32.mrb[0].mxu0
        %3663 = vdwg.mxu0
        %v3664 = vmul.f32 %v3661, %v3661
        %v3666 = vrot.slane %v3664, 7
        %v3668 = vsub.f32 %v3661, %v3666
        %v3669 = vmax.f32 %v3668, 0.0
        %v3670 = vlaneseq
        %v3671 = vshrl.u32 %v3670, 7
        %v3672 = vsub.s32 0, %v3671
        %v3673 = vrot.slane %v3661, %v3672
        %v3674 = vsub.f32 %v3574, %v3673
        %v3675 = vsub.f32 %v3575, %v3673
        %v3676 = vadd.f32 %v3669, 1e-05
        %v3677 = vrsqrt.pop %v3676
        %v3679 = vrot.slane %v3576, 7
        %v3681 = vmul.f32 %v3677, %v3679
        %v3682 = vlaneseq
        %v3683 = vshrl.u32 %v3682, 7
        %v3684 = vsub.s32 1, %v3683
        %v3685 = vrot.slane %v3681, %v3684
        %v3686 = vmul.f32 %v3674, %v3685
        %v3687 = vmul.f32 %v3675, %v3685
        %v3688 = vadd.f32 %v3099, %v3686
        %v3689 = vadd.f32 %v3100, %v3687
        // Predicated region
        $region57: #{cell_forward.3} parent=39 // pred_check
          _
        $region58: #{cell_forward.3} parent=39 // pred_check_branch
          %3691 = sbr.rel (%p296) target = $region60
        $region59: #{cell_forward.3} parent=39 // pred_region
          %v3692 = vld [vmem:[%s317] sm:$0xff]
          %v3693 = vld [vmem:[%s317 + $0x8] sm:$0xff]
          %v3694 = vadd.f32 %v3692, %v3688
          %v3695 = vadd.f32 %v3693, %v3689
          %3696 = vst [vmem:[%s317] sm:$0xff] %v3694
          %3697 = vst [vmem:[%s317 + $0x8] sm:$0xff] %v3695
        $region60: #{cell_forward.3} parent=39 // pred_fallthru
          _
        // Predicated region
        $region61: #{cell_forward.3} parent=39 // pred_check
          _
        $region62: #{cell_forward.3} parent=39 // pred_check_branch
          %3699 = sbr.rel (%p301) target = $region64
        $region63: #{cell_forward.3} parent=39 // pred_region
          %s3700 = scalar_lea.vmem [#allocation2], 48
          %v3701 = vld [vmem:[%s3700] sm:$0xff]
          %v3702 = vld [vmem:[%s3700 + $0x8] sm:$0xff]
          %v3703 = vadd.f32 %v3701, %v3688
          %v3704 = vadd.f32 %v3702, %v3689
          %3705 = vst [vmem:[%s3700] sm:$0xff] %v3703
          %3706 = vst [vmem:[%s3700 + $0x8] sm:$0xff] %v3704
        $region64: #{cell_forward.3} parent=39 // pred_fallthru
          _
        %p3707 = scmp.eq.s32.totalorder %s18, 4
        // Predicated region
        $region65: #{cell_forward.3} parent=39 // pred_check
          %p3708 = pneg %p3707
        $region66: #{cell_forward.3} parent=39 // pred_check_branch
          %3710 = sbr.rel (%p3708) target = $region68
        $region67: #{cell_forward.3} parent=39 // pred_region
          %v3711 = vld [vmem:[%s317] sm:$0xff]
          %v3712 = vld [vmem:[%s317 + $0x8] sm:$0xff]
          %3713 = vst [vmem:[%s5] sm:$0xff] %v3711
          %3714 = vst [vmem:[%s5 + $0x8] sm:$0xff] %v3712
          %s3715 = scalar_lea.vmem [#allocation2], 48
          %v3716 = vld [vmem:[%s3715] sm:$0xff]
          %v3717 = vld [vmem:[%s3715 + $0x8] sm:$0xff]
          %s3718 = scalar_lea.vmem %s5, 16
          %3719 = vst [vmem:[%s3718] sm:$0xff] %v3716
          %3720 = vst [vmem:[%s3718 + $0x8] sm:$0xff] %v3717
        $region68: #{cell_forward.3} parent=39 // pred_fallthru
          _
        // Predicated region
        $region69: #{cell_forward.3} parent=39 // pred_check
          %p3721 = pneg %p146
        $region70: #{cell_forward.3} parent=39 // pred_check_branch
          %3723 = sbr.rel (%p3721) target = $region72
        $region71: #{cell_forward.3} parent=39 // pred_region
          _
        $region72: #{cell_forward.3} parent=39 // pred_fallthru
          _
        // Predicated region
        $region73: #{cell_forward.3} parent=39 // pred_check
          %p3724 = pneg %p146
        $region74: #{cell_forward.3} parent=39 // pred_check_branch
          %3726 = sbr.rel (%p3724) target = $region76
        $region75: #{cell_forward.3} parent=39 // pred_region
          _
        $region76: #{cell_forward.3} parent=39 // pred_fallthru
          _
      $region40: #{cell_forward.3} parent=5 // pred_fallthru
        _
      %p3727 = scmp.le.s32.totalorder 2, %s13
      // Predicated region
      $region77: #{cell_forward.3} parent=5 // pred_check
        %p3728 = pneg %p3727
      $region78: #{cell_forward.3} parent=5 // pred_check_branch
        %3730 = sbr.rel (%p3728) target = $region80
      $region79: #{cell_forward.3} parent=5 // pred_region
        %s3731 = ssub.s32 %s13, 2
      $region80: #{cell_forward.3} parent=5 // pred_fallthru
        _
    $region6: #{cell_forward.3} parent=1 // loop_footer
      %s17 = sadd.s32 1, %s13
    $region7: #{cell_forward.3} parent=1 // loop_footer_branch
      %12 = sbr.rel target = $region3
    $region8: #{cell_forward.3} parent=1 // loop_exit
      _
    %3732 = vsyncpa [#allocation4], 1
    %s3733 = scalar_lea.sflag [#allocation4], 1
    %3734 = vsyncpa %s3733, 1
    %3735 = vsyncpa [#allocation6], 1

</llo_original>
